<compile_context>
chip_gen: v6e
topology: v6e:2x2x1
jax: 0.10.0
libtpu: 0.0.40
codegen_flags: <defaults>
</compile_context>

<pallas_src>
import jax
import jax.numpy as jnp
from jax.experimental import pallas as pl
from jax.experimental.pallas import tpu as pltpu


def gru_classifier_kernel(x_ref,
                          wih_r_ref, wih_z_ref, wih_n_ref,
                          whh_r_ref, whh_z_ref, whh_n_ref,
                          b_r_ref, b_z_ref, b_in_ref, b_hn_ref,
                          w1_ref, b1_ref, w2_ref, b2_ref,
                          out_ref):
    """Whole GRU recurrence + classifier head for one batch shard in one call."""
    T, B, E = x_ref.shape
    H = whh_r_ref.shape[0]

    # ---- Prologue: hoisted input-path matmuls (all timesteps, one per gate). ----
    # (T, B, E) -> (T*B, E): B is a multiple of the 8-sublane tile, so this is a
    # tile-aligned collapse of the leading dims (no boundary crossing).
    x2d = x_ref[...].reshape(T * B, E)
    # b_ih is folded in here; r/z also carry b_hh pre-added (wrapper-side fold).
    gi_r = jnp.dot(x2d, wih_r_ref[...], preferred_element_type=jnp.float32) + b_r_ref[...]
    gi_z = jnp.dot(x2d, wih_z_ref[...], preferred_element_type=jnp.float32) + b_z_ref[...]
    gi_n = jnp.dot(x2d, wih_n_ref[...], preferred_element_type=jnp.float32) + b_in_ref[...]

    whh_r = whh_r_ref[...]
    whh_z = whh_z_ref[...]
    whh_n = whh_n_ref[...]
    # Hoist the n-gate hidden-bias broadcast out of the loop (no per-iter rebroadcast).
    b_hn = jnp.broadcast_to(b_hn_ref[...], (B, H))

    # ---- GRU recurrence: fully-unrolled static time loop (T small & static). ----
    # Only h @ W_hh_gate sits on the serial dependency chain; gi_* slices below
    # are static (t*B aligned to the 8-sublane tile).
    h = jnp.zeros((B, H), jnp.float32)
    for t in range(T):
        lo, hi = t * B, (t + 1) * B
        gh_r = jnp.dot(h, whh_r, preferred_element_type=jnp.float32)
        gh_z = jnp.dot(h, whh_z, preferred_element_type=jnp.float32)
        gh_n = jnp.dot(h, whh_n, preferred_element_type=jnp.float32)
        r = jax.nn.sigmoid(gi_r[lo:hi] + gh_r)
        z = jax.nn.sigmoid(gi_z[lo:hi] + gh_z)
        n = jnp.tanh(gi_n[lo:hi] + r * (gh_n + b_hn))
        h = (1.0 - z) * n + z * h

    # ---- Classifier head on the last hidden state. ----
    # TODO(synk): F.dropout(0.5) (torch default training=True inside forward) is
    # skipped — identity here (matches eval/inference behavior).
    y = jnp.dot(h, w1_ref[...], preferred_element_type=jnp.float32) + b1_ref[...]
    y = jnp.maximum(y, 0.0)
    # fc2 is lane-padded to a 128-multiple -> unmasked full-lane store.
    out_ref[...] = jnp.dot(y, w2_ref[...], preferred_element_type=jnp.float32) + b2_ref[...]


def surname_rnn_embed_forward(x_tokens, params, *, batch_block=None):
    """x_tokens: (B, T) integer ids. Returns logits (B, num_classes)."""
    emb = params["embedding"]                      # (V, E)
    w_ih, w_hh = params["w_ih"], params["w_hh"]    # (E, 3H), (H, 3H), gate order r|z|n
    b_ih, b_hh = params["b_ih"], params["b_hh"]    # (1, 3H)
    w1, b1 = params["w1"], params["b1"]            # (H, H), (1, H)
    w2, b2 = params["w2"], params["b2"]            # (H, C), (1, C)

    B, T = x_tokens.shape
    E = emb.shape[1]
    H = w_hh.shape[0]
    C = w2.shape[1]

    # Glue (plain JAX): embedding gather + time-major layout so each timestep is a
    # lane/sublane-aligned (B, E) tile inside the kernel.
    x_embed = jnp.take(emb, x_tokens.astype(jnp.int32), axis=0)      # (B, T, E)
    x_tbe = jnp.transpose(x_embed, (1, 0, 2)).astype(jnp.float32)    # (T, B, E)

    # Per-gate weight split + bias folding (one-time, wrapper side).
    wih_r, wih_z, wih_n = w_ih[:, :H], w_ih[:, H:2 * H], w_ih[:, 2 * H:]
    whh_r, whh_z, whh_n = w_hh[:, :H], w_hh[:, H:2 * H], w_hh[:, 2 * H:]
    b_r = b_ih[:, :H] + b_hh[:, :H]                 # r gate: b_ih + b_hh folded
    b_z = b_ih[:, H:2 * H] + b_hh[:, H:2 * H]       # z gate: b_ih + b_hh folded
    b_in = b_ih[:, 2 * H:]                          # n gate input bias
    b_hn = b_hh[:, 2 * H:]                          # n gate hidden bias (kept separate)

    # Lane-dense output: pad fc2 to a 128-lane multiple; slice back after the call.
    c_pad = ((C + 127) // 128) * 128
    w2p = jnp.zeros((H, c_pad), jnp.float32).at[:, :C].set(w2)
    b2p = jnp.zeros((1, c_pad), jnp.float32).at[:, :C].set(b2)

    # Batch-parallel grid (useful once B is scaled up; trivially (1,) here).
    if batch_block is None:
        batch_block = B
    assert B % batch_block == 0 and batch_block % 8 == 0, "batch block must be 8-aligned"
    nb = B // batch_block

    full2d = lambda b: (0, 0)

    logits_pad = pl.pallas_call(
        gru_classifier_kernel,
        out_shape=jax.ShapeDtypeStruct((B, c_pad), jnp.float32),
        grid_spec=pltpu.PrefetchScalarGridSpec(
            num_scalar_prefetch=0,
            grid=(nb,),
            in_specs=[
                pl.BlockSpec((T, batch_block, E), lambda b: (0, b, 0)),  # embedded seq slab
                pl.BlockSpec((E, H), full2d),       # W_ih r
                pl.BlockSpec((E, H), full2d),       # W_ih z
                pl.BlockSpec((E, H), full2d),       # W_ih n
                pl.BlockSpec((H, H), full2d),       # W_hh r
                pl.BlockSpec((H, H), full2d),       # W_hh z
                pl.BlockSpec((H, H), full2d),       # W_hh n
                pl.BlockSpec((1, H), full2d),       # b_r  = b_ih_r + b_hh_r
                pl.BlockSpec((1, H), full2d),       # b_z  = b_ih_z + b_hh_z
                pl.BlockSpec((1, H), full2d),       # b_in = b_ih_n
                pl.BlockSpec((1, H), full2d),       # b_hn = b_hh_n
                pl.BlockSpec((H, H), full2d),       # fc1 W^T
                pl.BlockSpec((1, H), full2d),       # fc1 b
                pl.BlockSpec((H, c_pad), full2d),   # fc2 W^T (lane-padded)
                pl.BlockSpec((1, c_pad), full2d),   # fc2 b   (lane-padded)
            ],
            out_specs=pl.BlockSpec((batch_block, c_pad), lambda b: (b, 0)),
        ),
        compiler_params=pltpu.CompilerParams(
            dimension_semantics=("parallel",)),      # independent batch shards
    )(
        x_tbe,
        wih_r, wih_z, wih_n, whh_r, whh_z, whh_n,
        b_r, b_z, b_in, b_hn,
        w1, b1, w2p, b2p,
    )
    return logits_pad[:, :C]


def init_params(key, num_features, embedding_dim, rnn_hidden_size, num_classes):
    ks = jax.random.split(key, 9)
    s = 0.1
    return {
        "embedding": jax.random.normal(ks[0], (num_features, embedding_dim), jnp.float32) * s,
        # GRU weights stored transposed: (in, 3H) / (H, 3H), gate order r|z|n.
        "w_ih": jax.random.normal(ks[1], (embedding_dim, 3 * rnn_hidden_size), jnp.float32) * s,
        "w_hh": jax.random.normal(ks[2], (rnn_hidden_size, 3 * rnn_hidden_size), jnp.float32) * s,
        "b_ih": jax.random.normal(ks[3], (1, 3 * rnn_hidden_size), jnp.float32) * s,
        "b_hh": jax.random.normal(ks[4], (1, 3 * rnn_hidden_size), jnp.float32) * s,
        # Linear layers stored transposed: y = x @ W + b.
        "w1": jax.random.normal(ks[5], (rnn_hidden_size, rnn_hidden_size), jnp.float32) * s,
        "b1": jax.random.normal(ks[6], (1, rnn_hidden_size), jnp.float32) * s,
        "w2": jax.random.normal(ks[7], (rnn_hidden_size, num_classes), jnp.float32) * s,
        "b2": jax.random.normal(ks[8], (1, num_classes), jnp.float32) * s,
    }


if __name__ == "__main__":
    # Small shapes consistent with the module's forward: x_in (batch, seq) of token ids.
    batch, seq = 8, 8
    num_features = 32          # vocab size
    embedding_dim = 32
    rnn_hidden_size = 32
    num_classes = 4

    key = jax.random.PRNGKey(0)
    k_tok, k_par = jax.random.split(key)
    x_in = jax.random.randint(k_tok, (batch, seq), 0, num_features, dtype=jnp.int32)
    params = init_params(k_par, num_features, embedding_dim, rnn_hidden_size, num_classes)

    logits = surname_rnn_embed_forward(x_in, params)
    jax.block_until_ready(logits)
    assert logits.shape == (batch, num_classes)
    print("KERNEL_OK")
</pallas_src>

<mosaic_0001>
module attributes {stable_mosaic.version = 11 : i64} {
  func.func @gru_classifier_kernel(%arg0: i32, %arg1: memref<8x8x32xf32, #tpu.memory_space<vmem>>, %arg2: memref<32x32xf32, #tpu.memory_space<vmem>>, %arg3: memref<32x32xf32, #tpu.memory_space<vmem>>, %arg4: memref<32x32xf32, #tpu.memory_space<vmem>>, %arg5: memref<32x32xf32, #tpu.memory_space<vmem>>, %arg6: memref<32x32xf32, #tpu.memory_space<vmem>>, %arg7: memref<32x32xf32, #tpu.memory_space<vmem>>, %arg8: memref<1x32xf32, #tpu.memory_space<vmem>>, %arg9: memref<1x32xf32, #tpu.memory_space<vmem>>, %arg10: memref<1x32xf32, #tpu.memory_space<vmem>>, %arg11: memref<1x32xf32, #tpu.memory_space<vmem>>, %arg12: memref<32x32xf32, #tpu.memory_space<vmem>>, %arg13: memref<1x32xf32, #tpu.memory_space<vmem>>, %arg14: memref<32x128xf32, #tpu.memory_space<vmem>>, %arg15: memref<1x128xf32, #tpu.memory_space<vmem>>, %arg16: memref<8x128xf32, #tpu.memory_space<vmem>>) attributes {dimension_semantics = [#tpu.dimension_semantics<parallel>], iteration_bounds = array<i64: 1>, scalar_prefetch = 0 : i64, scratch_operands = 0 : i64, tpu.core_type = #tpu.core_type<tc>, window_params = [{transform_indices = @transform_0, window_bounds = array<i64: 8, 8, 32>}, {pipeline_mode = #tpu.pipeline_mode<synchronous>, transform_indices = @transform_1, window_bounds = array<i64: 32, 32>}, {pipeline_mode = #tpu.pipeline_mode<synchronous>, transform_indices = @transform_2, window_bounds = array<i64: 32, 32>}, {pipeline_mode = #tpu.pipeline_mode<synchronous>, transform_indices = @transform_3, window_bounds = array<i64: 32, 32>}, {pipeline_mode = #tpu.pipeline_mode<synchronous>, transform_indices = @transform_4, window_bounds = array<i64: 32, 32>}, {pipeline_mode = #tpu.pipeline_mode<synchronous>, transform_indices = @transform_5, window_bounds = array<i64: 32, 32>}, {pipeline_mode = #tpu.pipeline_mode<synchronous>, transform_indices = @transform_6, window_bounds = array<i64: 32, 32>}, {pipeline_mode = #tpu.pipeline_mode<synchronous>, transform_indices = @transform_7, window_bounds = array<i64: 1, 32>}, {pipeline_mode = #tpu.pipeline_mode<synchronous>, transform_indices = @transform_8, window_bounds = array<i64: 1, 32>}, {pipeline_mode = #tpu.pipeline_mode<synchronous>, transform_indices = @transform_9, window_bounds = array<i64: 1, 32>}, {pipeline_mode = #tpu.pipeline_mode<synchronous>, transform_indices = @transform_10, window_bounds = array<i64: 1, 32>}, {pipeline_mode = #tpu.pipeline_mode<synchronous>, transform_indices = @transform_11, window_bounds = array<i64: 32, 32>}, {pipeline_mode = #tpu.pipeline_mode<synchronous>, transform_indices = @transform_12, window_bounds = array<i64: 1, 32>}, {pipeline_mode = #tpu.pipeline_mode<synchronous>, transform_indices = @transform_13, window_bounds = array<i64: 32, 128>}, {pipeline_mode = #tpu.pipeline_mode<synchronous>, transform_indices = @transform_14, window_bounds = array<i64: 1, 128>}, {transform_indices = @transform_15, window_bounds = array<i64: 8, 128>}]} {
    %c0 = arith.constant 0 : index
    %c0_0 = arith.constant 0 : index
    %c0_1 = arith.constant 0 : index
    %0 = vector.load %arg1[%c0, %c0_0, %c0_1] : memref<8x8x32xf32, #tpu.memory_space<vmem>>, vector<8x8x32xf32>
    %1 = vector.shape_cast %0 : vector<8x8x32xf32> to vector<64x32xf32>
    %c0_2 = arith.constant 0 : index
    %c0_3 = arith.constant 0 : index
    %2 = vector.load %arg2[%c0_2, %c0_3] : memref<32x32xf32, #tpu.memory_space<vmem>>, vector<32x32xf32>
    %cst = arith.constant dense<0.000000e+00> : vector<64x32xf32>
    %3 = tpu.matmul %1, %2, %cst {dimension_numbers = #tpu.dot_dimension_numbers<[1], [0], [0], [1], [0, 0, 1, 1], [], []>} : vector<64x32xf32>, vector<32x32xf32>, vector<64x32xf32> -> vector<64x32xf32>
    %c0_4 = arith.constant 0 : index
    %c0_5 = arith.constant 0 : index
    %4 = vector.load %arg8[%c0_4, %c0_5] : memref<1x32xf32, #tpu.memory_space<vmem>>, vector<1x32xf32>
    %5 = vector.broadcast %4 : vector<1x32xf32> to vector<64x32xf32>
    %6 = arith.addf %3, %5 : vector<64x32xf32>
    %c0_6 = arith.constant 0 : index
    %c0_7 = arith.constant 0 : index
    %7 = vector.load %arg3[%c0_6, %c0_7] : memref<32x32xf32, #tpu.memory_space<vmem>>, vector<32x32xf32>
    %cst_8 = arith.constant dense<0.000000e+00> : vector<64x32xf32>
    %8 = tpu.matmul %1, %7, %cst_8 {dimension_numbers = #tpu.dot_dimension_numbers<[1], [0], [0], [1], [0, 0, 1, 1], [], []>} : vector<64x32xf32>, vector<32x32xf32>, vector<64x32xf32> -> vector<64x32xf32>
    %c0_9 = arith.constant 0 : index
    %c0_10 = arith.constant 0 : index
    %9 = vector.load %arg9[%c0_9, %c0_10] : memref<1x32xf32, #tpu.memory_space<vmem>>, vector<1x32xf32>
    %10 = vector.broadcast %9 : vector<1x32xf32> to vector<64x32xf32>
    %11 = arith.addf %8, %10 : vector<64x32xf32>
    %c0_11 = arith.constant 0 : index
    %c0_12 = arith.constant 0 : index
    %12 = vector.load %arg4[%c0_11, %c0_12] : memref<32x32xf32, #tpu.memory_space<vmem>>, vector<32x32xf32>
    %cst_13 = arith.constant dense<0.000000e+00> : vector<64x32xf32>
    %13 = tpu.matmul %1, %12, %cst_13 {dimension_numbers = #tpu.dot_dimension_numbers<[1], [0], [0], [1], [0, 0, 1, 1], [], []>} : vector<64x32xf32>, vector<32x32xf32>, vector<64x32xf32> -> vector<64x32xf32>
    %c0_14 = arith.constant 0 : index
    %c0_15 = arith.constant 0 : index
    %14 = vector.load %arg10[%c0_14, %c0_15] : memref<1x32xf32, #tpu.memory_space<vmem>>, vector<1x32xf32>
    %15 = vector.broadcast %14 : vector<1x32xf32> to vector<64x32xf32>
    %16 = arith.addf %13, %15 : vector<64x32xf32>
    %c0_16 = arith.constant 0 : index
    %c0_17 = arith.constant 0 : index
    %17 = vector.load %arg5[%c0_16, %c0_17] : memref<32x32xf32, #tpu.memory_space<vmem>>, vector<32x32xf32>
    %c0_18 = arith.constant 0 : index
    %c0_19 = arith.constant 0 : index
    %18 = vector.load %arg6[%c0_18, %c0_19] : memref<32x32xf32, #tpu.memory_space<vmem>>, vector<32x32xf32>
    %c0_20 = arith.constant 0 : index
    %c0_21 = arith.constant 0 : index
    %19 = vector.load %arg7[%c0_20, %c0_21] : memref<32x32xf32, #tpu.memory_space<vmem>>, vector<32x32xf32>
    %c0_22 = arith.constant 0 : index
    %c0_23 = arith.constant 0 : index
    %20 = vector.load %arg11[%c0_22, %c0_23] : memref<1x32xf32, #tpu.memory_space<vmem>>, vector<1x32xf32>
    %21 = vector.shape_cast %20 : vector<1x32xf32> to vector<1x32xf32>
    %22 = vector.broadcast %21 : vector<1x32xf32> to vector<8x32xf32>
    %cst_24 = arith.constant 0.000000e+00 : f32
    %23 = vector.broadcast %cst_24 : f32 to vector<8x32xf32>
    %cst_25 = arith.constant dense<0.000000e+00> : vector<8x32xf32>
    %24 = tpu.matmul %23, %17, %cst_25 {dimension_numbers = #tpu.dot_dimension_numbers<[1], [0], [0], [1], [0, 0, 1, 1], [], []>} : vector<8x32xf32>, vector<32x32xf32>, vector<8x32xf32> -> vector<8x32xf32>
    %cst_26 = arith.constant dense<0.000000e+00> : vector<8x32xf32>
    %25 = tpu.matmul %23, %18, %cst_26 {dimension_numbers = #tpu.dot_dimension_numbers<[1], [0], [0], [1], [0, 0, 1, 1], [], []>} : vector<8x32xf32>, vector<32x32xf32>, vector<8x32xf32> -> vector<8x32xf32>
    %cst_27 = arith.constant dense<0.000000e+00> : vector<8x32xf32>
    %26 = tpu.matmul %23, %19, %cst_27 {dimension_numbers = #tpu.dot_dimension_numbers<[1], [0], [0], [1], [0, 0, 1, 1], [], []>} : vector<8x32xf32>, vector<32x32xf32>, vector<8x32xf32> -> vector<8x32xf32>
    %27 = vector.extract_strided_slice %6 {offsets = [0, 0], sizes = [8, 32], strides = [1, 1]} : vector<64x32xf32> to vector<8x32xf32>
    %28 = arith.addf %27, %24 : vector<8x32xf32>
    %29 = arith.negf %28 : vector<8x32xf32>
    %30 = math.exp %29 : vector<8x32xf32>
    %cst_28 = arith.constant 1.000000e+00 : f32
    %31 = vector.broadcast %cst_28 : f32 to vector<8x32xf32>
    %32 = arith.addf %31, %30 : vector<8x32xf32>
    %33 = arith.divf %31, %32 : vector<8x32xf32>
    %34 = vector.extract_strided_slice %11 {offsets = [0, 0], sizes = [8, 32], strides = [1, 1]} : vector<64x32xf32> to vector<8x32xf32>
    %35 = arith.addf %34, %25 : vector<8x32xf32>
    %36 = arith.negf %35 : vector<8x32xf32>
    %37 = math.exp %36 : vector<8x32xf32>
    %cst_29 = arith.constant 1.000000e+00 : f32
    %38 = vector.broadcast %cst_29 : f32 to vector<8x32xf32>
    %39 = arith.addf %38, %37 : vector<8x32xf32>
    %40 = arith.divf %38, %39 : vector<8x32xf32>
    %41 = vector.extract_strided_slice %16 {offsets = [0, 0], sizes = [8, 32], strides = [1, 1]} : vector<64x32xf32> to vector<8x32xf32>
    %42 = arith.addf %26, %22 : vector<8x32xf32>
    %43 = arith.mulf %33, %42 : vector<8x32xf32>
    %44 = arith.addf %41, %43 : vector<8x32xf32>
    %45 = math.tanh %44 : vector<8x32xf32>
    %cst_30 = arith.constant 1.000000e+00 : f32
    %46 = vector.broadcast %cst_30 : f32 to vector<8x32xf32>
    %47 = arith.subf %46, %40 : vector<8x32xf32>
    %48 = arith.mulf %47, %45 : vector<8x32xf32>
    %49 = arith.mulf %40, %23 : vector<8x32xf32>
    %50 = arith.addf %48, %49 : vector<8x32xf32>
    %cst_31 = arith.constant dense<0.000000e+00> : vector<8x32xf32>
    %51 = tpu.matmul %50, %17, %cst_31 {dimension_numbers = #tpu.dot_dimension_numbers<[1], [0], [0], [1], [0, 0, 1, 1], [], []>} : vector<8x32xf32>, vector<32x32xf32>, vector<8x32xf32> -> vector<8x32xf32>
    %cst_32 = arith.constant dense<0.000000e+00> : vector<8x32xf32>
    %52 = tpu.matmul %50, %18, %cst_32 {dimension_numbers = #tpu.dot_dimension_numbers<[1], [0], [0], [1], [0, 0, 1, 1], [], []>} : vector<8x32xf32>, vector<32x32xf32>, vector<8x32xf32> -> vector<8x32xf32>
    %cst_33 = arith.constant dense<0.000000e+00> : vector<8x32xf32>
    %53 = tpu.matmul %50, %19, %cst_33 {dimension_numbers = #tpu.dot_dimension_numbers<[1], [0], [0], [1], [0, 0, 1, 1], [], []>} : vector<8x32xf32>, vector<32x32xf32>, vector<8x32xf32> -> vector<8x32xf32>
    %54 = vector.extract_strided_slice %6 {offsets = [8, 0], sizes = [8, 32], strides = [1, 1]} : vector<64x32xf32> to vector<8x32xf32>
    %55 = arith.addf %54, %51 : vector<8x32xf32>
    %56 = arith.negf %55 : vector<8x32xf32>
    %57 = math.exp %56 : vector<8x32xf32>
    %cst_34 = arith.constant 1.000000e+00 : f32
    %58 = vector.broadcast %cst_34 : f32 to vector<8x32xf32>
    %59 = arith.addf %58, %57 : vector<8x32xf32>
    %60 = arith.divf %58, %59 : vector<8x32xf32>
    %61 = vector.extract_strided_slice %11 {offsets = [8, 0], sizes = [8, 32], strides = [1, 1]} : vector<64x32xf32> to vector<8x32xf32>
    %62 = arith.addf %61, %52 : vector<8x32xf32>
    %63 = arith.negf %62 : vector<8x32xf32>
    %64 = math.exp %63 : vector<8x32xf32>
    %cst_35 = arith.constant 1.000000e+00 : f32
    %65 = vector.broadcast %cst_35 : f32 to vector<8x32xf32>
    %66 = arith.addf %65, %64 : vector<8x32xf32>
    %67 = arith.divf %65, %66 : vector<8x32xf32>
    %68 = vector.extract_strided_slice %16 {offsets = [8, 0], sizes = [8, 32], strides = [1, 1]} : vector<64x32xf32> to vector<8x32xf32>
    %69 = arith.addf %53, %22 : vector<8x32xf32>
    %70 = arith.mulf %60, %69 : vector<8x32xf32>
    %71 = arith.addf %68, %70 : vector<8x32xf32>
    %72 = math.tanh %71 : vector<8x32xf32>
    %cst_36 = arith.constant 1.000000e+00 : f32
    %73 = vector.broadcast %cst_36 : f32 to vector<8x32xf32>
    %74 = arith.subf %73, %67 : vector<8x32xf32>
    %75 = arith.mulf %74, %72 : vector<8x32xf32>
    %76 = arith.mulf %67, %50 : vector<8x32xf32>
    %77 = arith.addf %75, %76 : vector<8x32xf32>
    %cst_37 = arith.constant dense<0.000000e+00> : vector<8x32xf32>
    %78 = tpu.matmul %77, %17, %cst_37 {dimension_numbers = #tpu.dot_dimension_numbers<[1], [0], [0], [1], [0, 0, 1, 1], [], []>} : vector<8x32xf32>, vector<32x32xf32>, vector<8x32xf32> -> vector<8x32xf32>
    %cst_38 = arith.constant dense<0.000000e+00> : vector<8x32xf32>
    %79 = tpu.matmul %77, %18, %cst_38 {dimension_numbers = #tpu.dot_dimension_numbers<[1], [0], [0], [1], [0, 0, 1, 1], [], []>} : vector<8x32xf32>, vector<32x32xf32>, vector<8x32xf32> -> vector<8x32xf32>
    %cst_39 = arith.constant dense<0.000000e+00> : vector<8x32xf32>
    %80 = tpu.matmul %77, %19, %cst_39 {dimension_numbers = #tpu.dot_dimension_numbers<[1], [0], [0], [1], [0, 0, 1, 1], [], []>} : vector<8x32xf32>, vector<32x32xf32>, vector<8x32xf32> -> vector<8x32xf32>
    %81 = vector.extract_strided_slice %6 {offsets = [16, 0], sizes = [8, 32], strides = [1, 1]} : vector<64x32xf32> to vector<8x32xf32>
    %82 = arith.addf %81, %78 : vector<8x32xf32>
    %83 = arith.negf %82 : vector<8x32xf32>
    %84 = math.exp %83 : vector<8x32xf32>
    %cst_40 = arith.constant 1.000000e+00 : f32
    %85 = vector.broadcast %cst_40 : f32 to vector<8x32xf32>
    %86 = arith.addf %85, %84 : vector<8x32xf32>
    %87 = arith.divf %85, %86 : vector<8x32xf32>
    %88 = vector.extract_strided_slice %11 {offsets = [16, 0], sizes = [8, 32], strides = [1, 1]} : vector<64x32xf32> to vector<8x32xf32>
    %89 = arith.addf %88, %79 : vector<8x32xf32>
    %90 = arith.negf %89 : vector<8x32xf32>
    %91 = math.exp %90 : vector<8x32xf32>
    %cst_41 = arith.constant 1.000000e+00 : f32
    %92 = vector.broadcast %cst_41 : f32 to vector<8x32xf32>
    %93 = arith.addf %92, %91 : vector<8x32xf32>
    %94 = arith.divf %92, %93 : vector<8x32xf32>
    %95 = vector.extract_strided_slice %16 {offsets = [16, 0], sizes = [8, 32], strides = [1, 1]} : vector<64x32xf32> to vector<8x32xf32>
    %96 = arith.addf %80, %22 : vector<8x32xf32>
    %97 = arith.mulf %87, %96 : vector<8x32xf32>
    %98 = arith.addf %95, %97 : vector<8x32xf32>
    %99 = math.tanh %98 : vector<8x32xf32>
    %cst_42 = arith.constant 1.000000e+00 : f32
    %100 = vector.broadcast %cst_42 : f32 to vector<8x32xf32>
    %101 = arith.subf %100, %94 : vector<8x32xf32>
    %102 = arith.mulf %101, %99 : vector<8x32xf32>
    %103 = arith.mulf %94, %77 : vector<8x32xf32>
    %104 = arith.addf %102, %103 : vector<8x32xf32>
    %cst_43 = arith.constant dense<0.000000e+00> : vector<8x32xf32>
    %105 = tpu.matmul %104, %17, %cst_43 {dimension_numbers = #tpu.dot_dimension_numbers<[1], [0], [0], [1], [0, 0, 1, 1], [], []>} : vector<8x32xf32>, vector<32x32xf32>, vector<8x32xf32> -> vector<8x32xf32>
    %cst_44 = arith.constant dense<0.000000e+00> : vector<8x32xf32>
    %106 = tpu.matmul %104, %18, %cst_44 {dimension_numbers = #tpu.dot_dimension_numbers<[1], [0], [0], [1], [0, 0, 1, 1], [], []>} : vector<8x32xf32>, vector<32x32xf32>, vector<8x32xf32> -> vector<8x32xf32>
    %cst_45 = arith.constant dense<0.000000e+00> : vector<8x32xf32>
    %107 = tpu.matmul %104, %19, %cst_45 {dimension_numbers = #tpu.dot_dimension_numbers<[1], [0], [0], [1], [0, 0, 1, 1], [], []>} : vector<8x32xf32>, vector<32x32xf32>, vector<8x32xf32> -> vector<8x32xf32>
    %108 = vector.extract_strided_slice %6 {offsets = [24, 0], sizes = [8, 32], strides = [1, 1]} : vector<64x32xf32> to vector<8x32xf32>
    %109 = arith.addf %108, %105 : vector<8x32xf32>
    %110 = arith.negf %109 : vector<8x32xf32>
    %111 = math.exp %110 : vector<8x32xf32>
    %cst_46 = arith.constant 1.000000e+00 : f32
    %112 = vector.broadcast %cst_46 : f32 to vector<8x32xf32>
    %113 = arith.addf %112, %111 : vector<8x32xf32>
    %114 = arith.divf %112, %113 : vector<8x32xf32>
    %115 = vector.extract_strided_slice %11 {offsets = [24, 0], sizes = [8, 32], strides = [1, 1]} : vector<64x32xf32> to vector<8x32xf32>
    %116 = arith.addf %115, %106 : vector<8x32xf32>
    %117 = arith.negf %116 : vector<8x32xf32>
    %118 = math.exp %117 : vector<8x32xf32>
    %cst_47 = arith.constant 1.000000e+00 : f32
    %119 = vector.broadcast %cst_47 : f32 to vector<8x32xf32>
    %120 = arith.addf %119, %118 : vector<8x32xf32>
    %121 = arith.divf %119, %120 : vector<8x32xf32>
    %122 = vector.extract_strided_slice %16 {offsets = [24, 0], sizes = [8, 32], strides = [1, 1]} : vector<64x32xf32> to vector<8x32xf32>
    %123 = arith.addf %107, %22 : vector<8x32xf32>
    %124 = arith.mulf %114, %123 : vector<8x32xf32>
    %125 = arith.addf %122, %124 : vector<8x32xf32>
    %126 = math.tanh %125 : vector<8x32xf32>
    %cst_48 = arith.constant 1.000000e+00 : f32
    %127 = vector.broadcast %cst_48 : f32 to vector<8x32xf32>
    %128 = arith.subf %127, %121 : vector<8x32xf32>
    %129 = arith.mulf %128, %126 : vector<8x32xf32>
    %130 = arith.mulf %121, %104 : vector<8x32xf32>
    %131 = arith.addf %129, %130 : vector<8x32xf32>
    %cst_49 = arith.constant dense<0.000000e+00> : vector<8x32xf32>
    %132 = tpu.matmul %131, %17, %cst_49 {dimension_numbers = #tpu.dot_dimension_numbers<[1], [0], [0], [1], [0, 0, 1, 1], [], []>} : vector<8x32xf32>, vector<32x32xf32>, vector<8x32xf32> -> vector<8x32xf32>
    %cst_50 = arith.constant dense<0.000000e+00> : vector<8x32xf32>
    %133 = tpu.matmul %131, %18, %cst_50 {dimension_numbers = #tpu.dot_dimension_numbers<[1], [0], [0], [1], [0, 0, 1, 1], [], []>} : vector<8x32xf32>, vector<32x32xf32>, vector<8x32xf32> -> vector<8x32xf32>
    %cst_51 = arith.constant dense<0.000000e+00> : vector<8x32xf32>
    %134 = tpu.matmul %131, %19, %cst_51 {dimension_numbers = #tpu.dot_dimension_numbers<[1], [0], [0], [1], [0, 0, 1, 1], [], []>} : vector<8x32xf32>, vector<32x32xf32>, vector<8x32xf32> -> vector<8x32xf32>
    %135 = vector.extract_strided_slice %6 {offsets = [32, 0], sizes = [8, 32], strides = [1, 1]} : vector<64x32xf32> to vector<8x32xf32>
    %136 = arith.addf %135, %132 : vector<8x32xf32>
    %137 = arith.negf %136 : vector<8x32xf32>
    %138 = math.exp %137 : vector<8x32xf32>
    %cst_52 = arith.constant 1.000000e+00 : f32
    %139 = vector.broadcast %cst_52 : f32 to vector<8x32xf32>
    %140 = arith.addf %139, %138 : vector<8x32xf32>
    %141 = arith.divf %139, %140 : vector<8x32xf32>
    %142 = vector.extract_strided_slice %11 {offsets = [32, 0], sizes = [8, 32], strides = [1, 1]} : vector<64x32xf32> to vector<8x32xf32>
    %143 = arith.addf %142, %133 : vector<8x32xf32>
    %144 = arith.negf %143 : vector<8x32xf32>
    %145 = math.exp %144 : vector<8x32xf32>
    %cst_53 = arith.constant 1.000000e+00 : f32
    %146 = vector.broadcast %cst_53 : f32 to vector<8x32xf32>
    %147 = arith.addf %146, %145 : vector<8x32xf32>
    %148 = arith.divf %146, %147 : vector<8x32xf32>
    %149 = vector.extract_strided_slice %16 {offsets = [32, 0], sizes = [8, 32], strides = [1, 1]} : vector<64x32xf32> to vector<8x32xf32>
    %150 = arith.addf %134, %22 : vector<8x32xf32>
    %151 = arith.mulf %141, %150 : vector<8x32xf32>
    %152 = arith.addf %149, %151 : vector<8x32xf32>
    %153 = math.tanh %152 : vector<8x32xf32>
    %cst_54 = arith.constant 1.000000e+00 : f32
    %154 = vector.broadcast %cst_54 : f32 to vector<8x32xf32>
    %155 = arith.subf %154, %148 : vector<8x32xf32>
    %156 = arith.mulf %155, %153 : vector<8x32xf32>
    %157 = arith.mulf %148, %131 : vector<8x32xf32>
    %158 = arith.addf %156, %157 : vector<8x32xf32>
    %cst_55 = arith.constant dense<0.000000e+00> : vector<8x32xf32>
    %159 = tpu.matmul %158, %17, %cst_55 {dimension_numbers = #tpu.dot_dimension_numbers<[1], [0], [0], [1], [0, 0, 1, 1], [], []>} : vector<8x32xf32>, vector<32x32xf32>, vector<8x32xf32> -> vector<8x32xf32>
    %cst_56 = arith.constant dense<0.000000e+00> : vector<8x32xf32>
    %160 = tpu.matmul %158, %18, %cst_56 {dimension_numbers = #tpu.dot_dimension_numbers<[1], [0], [0], [1], [0, 0, 1, 1], [], []>} : vector<8x32xf32>, vector<32x32xf32>, vector<8x32xf32> -> vector<8x32xf32>
    %cst_57 = arith.constant dense<0.000000e+00> : vector<8x32xf32>
    %161 = tpu.matmul %158, %19, %cst_57 {dimension_numbers = #tpu.dot_dimension_numbers<[1], [0], [0], [1], [0, 0, 1, 1], [], []>} : vector<8x32xf32>, vector<32x32xf32>, vector<8x32xf32> -> vector<8x32xf32>
    %162 = vector.extract_strided_slice %6 {offsets = [40, 0], sizes = [8, 32], strides = [1, 1]} : vector<64x32xf32> to vector<8x32xf32>
    %163 = arith.addf %162, %159 : vector<8x32xf32>
    %164 = arith.negf %163 : vector<8x32xf32>
    %165 = math.exp %164 : vector<8x32xf32>
    %cst_58 = arith.constant 1.000000e+00 : f32
    %166 = vector.broadcast %cst_58 : f32 to vector<8x32xf32>
    %167 = arith.addf %166, %165 : vector<8x32xf32>
    %168 = arith.divf %166, %167 : vector<8x32xf32>
    %169 = vector.extract_strided_slice %11 {offsets = [40, 0], sizes = [8, 32], strides = [1, 1]} : vector<64x32xf32> to vector<8x32xf32>
    %170 = arith.addf %169, %160 : vector<8x32xf32>
    %171 = arith.negf %170 : vector<8x32xf32>
    %172 = math.exp %171 : vector<8x32xf32>
    %cst_59 = arith.constant 1.000000e+00 : f32
    %173 = vector.broadcast %cst_59 : f32 to vector<8x32xf32>
    %174 = arith.addf %173, %172 : vector<8x32xf32>
    %175 = arith.divf %173, %174 : vector<8x32xf32>
    %176 = vector.extract_strided_slice %16 {offsets = [40, 0], sizes = [8, 32], strides = [1, 1]} : vector<64x32xf32> to vector<8x32xf32>
    %177 = arith.addf %161, %22 : vector<8x32xf32>
    %178 = arith.mulf %168, %177 : vector<8x32xf32>
    %179 = arith.addf %176, %178 : vector<8x32xf32>
    %180 = math.tanh %179 : vector<8x32xf32>
    %cst_60 = arith.constant 1.000000e+00 : f32
    %181 = vector.broadcast %cst_60 : f32 to vector<8x32xf32>
    %182 = arith.subf %181, %175 : vector<8x32xf32>
    %183 = arith.mulf %182, %180 : vector<8x32xf32>
    %184 = arith.mulf %175, %158 : vector<8x32xf32>
    %185 = arith.addf %183, %184 : vector<8x32xf32>
    %cst_61 = arith.constant dense<0.000000e+00> : vector<8x32xf32>
    %186 = tpu.matmul %185, %17, %cst_61 {dimension_numbers = #tpu.dot_dimension_numbers<[1], [0], [0], [1], [0, 0, 1, 1], [], []>} : vector<8x32xf32>, vector<32x32xf32>, vector<8x32xf32> -> vector<8x32xf32>
    %cst_62 = arith.constant dense<0.000000e+00> : vector<8x32xf32>
    %187 = tpu.matmul %185, %18, %cst_62 {dimension_numbers = #tpu.dot_dimension_numbers<[1], [0], [0], [1], [0, 0, 1, 1], [], []>} : vector<8x32xf32>, vector<32x32xf32>, vector<8x32xf32> -> vector<8x32xf32>
    %cst_63 = arith.constant dense<0.000000e+00> : vector<8x32xf32>
    %188 = tpu.matmul %185, %19, %cst_63 {dimension_numbers = #tpu.dot_dimension_numbers<[1], [0], [0], [1], [0, 0, 1, 1], [], []>} : vector<8x32xf32>, vector<32x32xf32>, vector<8x32xf32> -> vector<8x32xf32>
    %189 = vector.extract_strided_slice %6 {offsets = [48, 0], sizes = [8, 32], strides = [1, 1]} : vector<64x32xf32> to vector<8x32xf32>
    %190 = arith.addf %189, %186 : vector<8x32xf32>
    %191 = arith.negf %190 : vector<8x32xf32>
    %192 = math.exp %191 : vector<8x32xf32>
    %cst_64 = arith.constant 1.000000e+00 : f32
    %193 = vector.broadcast %cst_64 : f32 to vector<8x32xf32>
    %194 = arith.addf %193, %192 : vector<8x32xf32>
    %195 = arith.divf %193, %194 : vector<8x32xf32>
    %196 = vector.extract_strided_slice %11 {offsets = [48, 0], sizes = [8, 32], strides = [1, 1]} : vector<64x32xf32> to vector<8x32xf32>
    %197 = arith.addf %196, %187 : vector<8x32xf32>
    %198 = arith.negf %197 : vector<8x32xf32>
    %199 = math.exp %198 : vector<8x32xf32>
    %cst_65 = arith.constant 1.000000e+00 : f32
    %200 = vector.broadcast %cst_65 : f32 to vector<8x32xf32>
    %201 = arith.addf %200, %199 : vector<8x32xf32>
    %202 = arith.divf %200, %201 : vector<8x32xf32>
    %203 = vector.extract_strided_slice %16 {offsets = [48, 0], sizes = [8, 32], strides = [1, 1]} : vector<64x32xf32> to vector<8x32xf32>
    %204 = arith.addf %188, %22 : vector<8x32xf32>
    %205 = arith.mulf %195, %204 : vector<8x32xf32>
    %206 = arith.addf %203, %205 : vector<8x32xf32>
    %207 = math.tanh %206 : vector<8x32xf32>
    %cst_66 = arith.constant 1.000000e+00 : f32
    %208 = vector.broadcast %cst_66 : f32 to vector<8x32xf32>
    %209 = arith.subf %208, %202 : vector<8x32xf32>
    %210 = arith.mulf %209, %207 : vector<8x32xf32>
    %211 = arith.mulf %202, %185 : vector<8x32xf32>
    %212 = arith.addf %210, %211 : vector<8x32xf32>
    %cst_67 = arith.constant dense<0.000000e+00> : vector<8x32xf32>
    %213 = tpu.matmul %212, %17, %cst_67 {dimension_numbers = #tpu.dot_dimension_numbers<[1], [0], [0], [1], [0, 0, 1, 1], [], []>} : vector<8x32xf32>, vector<32x32xf32>, vector<8x32xf32> -> vector<8x32xf32>
    %cst_68 = arith.constant dense<0.000000e+00> : vector<8x32xf32>
    %214 = tpu.matmul %212, %18, %cst_68 {dimension_numbers = #tpu.dot_dimension_numbers<[1], [0], [0], [1], [0, 0, 1, 1], [], []>} : vector<8x32xf32>, vector<32x32xf32>, vector<8x32xf32> -> vector<8x32xf32>
    %cst_69 = arith.constant dense<0.000000e+00> : vector<8x32xf32>
    %215 = tpu.matmul %212, %19, %cst_69 {dimension_numbers = #tpu.dot_dimension_numbers<[1], [0], [0], [1], [0, 0, 1, 1], [], []>} : vector<8x32xf32>, vector<32x32xf32>, vector<8x32xf32> -> vector<8x32xf32>
    %216 = vector.extract_strided_slice %6 {offsets = [56, 0], sizes = [8, 32], strides = [1, 1]} : vector<64x32xf32> to vector<8x32xf32>
    %217 = arith.addf %216, %213 : vector<8x32xf32>
    %218 = arith.negf %217 : vector<8x32xf32>
    %219 = math.exp %218 : vector<8x32xf32>
    %cst_70 = arith.constant 1.000000e+00 : f32
    %220 = vector.broadcast %cst_70 : f32 to vector<8x32xf32>
    %221 = arith.addf %220, %219 : vector<8x32xf32>
    %222 = arith.divf %220, %221 : vector<8x32xf32>
    %223 = vector.extract_strided_slice %11 {offsets = [56, 0], sizes = [8, 32], strides = [1, 1]} : vector<64x32xf32> to vector<8x32xf32>
    %224 = arith.addf %223, %214 : vector<8x32xf32>
    %225 = arith.negf %224 : vector<8x32xf32>
    %226 = math.exp %225 : vector<8x32xf32>
    %cst_71 = arith.constant 1.000000e+00 : f32
    %227 = vector.broadcast %cst_71 : f32 to vector<8x32xf32>
    %228 = arith.addf %227, %226 : vector<8x32xf32>
    %229 = arith.divf %227, %228 : vector<8x32xf32>
    %230 = vector.extract_strided_slice %16 {offsets = [56, 0], sizes = [8, 32], strides = [1, 1]} : vector<64x32xf32> to vector<8x32xf32>
    %231 = arith.addf %215, %22 : vector<8x32xf32>
    %232 = arith.mulf %222, %231 : vector<8x32xf32>
    %233 = arith.addf %230, %232 : vector<8x32xf32>
    %234 = math.tanh %233 : vector<8x32xf32>
    %cst_72 = arith.constant 1.000000e+00 : f32
    %235 = vector.broadcast %cst_72 : f32 to vector<8x32xf32>
    %236 = arith.subf %235, %229 : vector<8x32xf32>
    %237 = arith.mulf %236, %234 : vector<8x32xf32>
    %238 = arith.mulf %229, %212 : vector<8x32xf32>
    %239 = arith.addf %237, %238 : vector<8x32xf32>
    %c0_73 = arith.constant 0 : index
    %c0_74 = arith.constant 0 : index
    %240 = vector.load %arg12[%c0_73, %c0_74] : memref<32x32xf32, #tpu.memory_space<vmem>>, vector<32x32xf32>
    %cst_75 = arith.constant dense<0.000000e+00> : vector<8x32xf32>
    %241 = tpu.matmul %239, %240, %cst_75 {dimension_numbers = #tpu.dot_dimension_numbers<[1], [0], [0], [1], [0, 0, 1, 1], [], []>} : vector<8x32xf32>, vector<32x32xf32>, vector<8x32xf32> -> vector<8x32xf32>
    %c0_76 = arith.constant 0 : index
    %c0_77 = arith.constant 0 : index
    %242 = vector.load %arg13[%c0_76, %c0_77] : memref<1x32xf32, #tpu.memory_space<vmem>>, vector<1x32xf32>
    %243 = vector.broadcast %242 : vector<1x32xf32> to vector<8x32xf32>
    %244 = arith.addf %241, %243 : vector<8x32xf32>
    %cst_78 = arith.constant 0.000000e+00 : f32
    %245 = vector.broadcast %cst_78 : f32 to vector<8x32xf32>
    %246 = arith.maximumf %244, %245 : vector<8x32xf32>
    %c0_79 = arith.constant 0 : index
    %c0_80 = arith.constant 0 : index
    %247 = vector.load %arg14[%c0_79, %c0_80] : memref<32x128xf32, #tpu.memory_space<vmem>>, vector<32x128xf32>
    %cst_81 = arith.constant dense<0.000000e+00> : vector<8x128xf32>
    %248 = tpu.matmul %246, %247, %cst_81 {dimension_numbers = #tpu.dot_dimension_numbers<[1], [0], [0], [1], [0, 0, 1, 1], [], []>} : vector<8x32xf32>, vector<32x128xf32>, vector<8x128xf32> -> vector<8x128xf32>
    %c0_82 = arith.constant 0 : index
    %c0_83 = arith.constant 0 : index
    %249 = vector.load %arg15[%c0_82, %c0_83] : memref<1x128xf32, #tpu.memory_space<vmem>>, vector<1x128xf32>
    %250 = vector.broadcast %249 : vector<1x128xf32> to vector<8x128xf32>
    %251 = arith.addf %248, %250 : vector<8x128xf32>
    %c0_84 = arith.constant 0 : index
    %c0_85 = arith.constant 0 : index
    %252 = vector.load %arg16[%c0_84, %c0_85] : memref<8x128xf32, #tpu.memory_space<vmem>>, vector<8x128xf32>
    tpu.vector_store %arg16[%c0_84, %c0_85], %251 {strides = array<i32>} : memref<8x128xf32, #tpu.memory_space<vmem>>, vector<8x128xf32>,
    return
  }
  func.func @transform_0(%arg0: i32) -> (i32, i32, i32) {
    %c0_i32 = arith.constant 0 : i32
    %c0_i32_0 = arith.constant 0 : i32
    %c0_i32_1 = arith.constant 0 : i32
    return %c0_i32, %arg0, %c0_i32_0 : i32, i32, i32
  }
  func.func @transform_1(%arg0: i32) -> (i32, i32) {
    %c0_i32 = arith.constant 0 : i32
    %c0_i32_0 = arith.constant 0 : i32
    %c0_i32_1 = arith.constant 0 : i32
    return %c0_i32, %c0_i32_0 : i32, i32
  }
  func.func @transform_2(%arg0: i32) -> (i32, i32) {
    %c0_i32 = arith.constant 0 : i32
    %c0_i32_0 = arith.constant 0 : i32
    %c0_i32_1 = arith.constant 0 : i32
    return %c0_i32, %c0_i32_0 : i32, i32
  }
  func.func @transform_3(%arg0: i32) -> (i32, i32) {
    %c0_i32 = arith.constant 0 : i32
    %c0_i32_0 = arith.constant 0 : i32
    %c0_i32_1 = arith.constant 0 : i32
    return %c0_i32, %c0_i32_0 : i32, i32
  }
  func.func @transform_4(%arg0: i32) -> (i32, i32) {
    %c0_i32 = arith.constant 0 : i32
    %c0_i32_0 = arith.constant 0 : i32
    %c0_i32_1 = arith.constant 0 : i32
    return %c0_i32, %c0_i32_0 : i32, i32
  }
  func.func @transform_5(%arg0: i32) -> (i32, i32) {
    %c0_i32 = arith.constant 0 : i32
    %c0_i32_0 = arith.constant 0 : i32
    %c0_i32_1 = arith.constant 0 : i32
    return %c0_i32, %c0_i32_0 : i32, i32
  }
  func.func @transform_6(%arg0: i32) -> (i32, i32) {
    %c0_i32 = arith.constant 0 : i32
    %c0_i32_0 = arith.constant 0 : i32
    %c0_i32_1 = arith.constant 0 : i32
    return %c0_i32, %c0_i32_0 : i32, i32
  }
  func.func @transform_7(%arg0: i32) -> (i32, i32) {
    %c0_i32 = arith.constant 0 : i32
    %c0_i32_0 = arith.constant 0 : i32
    %c0_i32_1 = arith.constant 0 : i32
    return %c0_i32, %c0_i32_0 : i32, i32
  }
  func.func @transform_8(%arg0: i32) -> (i32, i32) {
    %c0_i32 = arith.constant 0 : i32
    %c0_i32_0 = arith.constant 0 : i32
    %c0_i32_1 = arith.constant 0 : i32
    return %c0_i32, %c0_i32_0 : i32, i32
  }
  func.func @transform_9(%arg0: i32) -> (i32, i32) {
    %c0_i32 = arith.constant 0 : i32
    %c0_i32_0 = arith.constant 0 : i32
    %c0_i32_1 = arith.constant 0 : i32
    return %c0_i32, %c0_i32_0 : i32, i32
  }
  func.func @transform_10(%arg0: i32) -> (i32, i32) {
    %c0_i32 = arith.constant 0 : i32
    %c0_i32_0 = arith.constant 0 : i32
    %c0_i32_1 = arith.constant 0 : i32
    return %c0_i32, %c0_i32_0 : i32, i32
  }
  func.func @transform_11(%arg0: i32) -> (i32, i32) {
    %c0_i32 = arith.constant 0 : i32
    %c0_i32_0 = arith.constant 0 : i32
    %c0_i32_1 = arith.constant 0 : i32
    return %c0_i32, %c0_i32_0 : i32, i32
  }
  func.func @transform_12(%arg0: i32) -> (i32, i32) {
    %c0_i32 = arith.constant 0 : i32
    %c0_i32_0 = arith.constant 0 : i32
    %c0_i32_1 = arith.constant 0 : i32
    return %c0_i32, %c0_i32_0 : i32, i32
  }
  func.func @transform_13(%arg0: i32) -> (i32, i32) {
    %c0_i32 = arith.constant 0 : i32
    %c0_i32_0 = arith.constant 0 : i32
    %c0_i32_1 = arith.constant 0 : i32
    return %c0_i32, %c0_i32_0 : i32, i32
  }
  func.func @transform_14(%arg0: i32) -> (i32, i32) {
    %c0_i32 = arith.constant 0 : i32
    %c0_i32_0 = arith.constant 0 : i32
    %c0_i32_1 = arith.constant 0 : i32
    return %c0_i32, %c0_i32_0 : i32, i32
  }
  func.func @transform_15(%arg0: i32) -> (i32, i32) {
    %c0_i32 = arith.constant 0 : i32
    %c0_i32_0 = arith.constant 0 : i32
    return %arg0, %c0_i32 : i32, i32
  }
}

</mosaic_0001>

<llo_original>
// kernel: tpu_custom_call.1
$region0: #{tpu_custom_call.1}
  #allocation0 [shape = 'u32[]', space=smem, size = 0x4, offset = 0x4, fixed_abs, tag = 'smem constant byte address 0x4 - core index']
  #allocation1 [shape = 'u32[144,128]{1,0:T(1,128)}', space=vmem, size = 0x12000, scoped, tag = 'internal scratch']
  %s0 = inlined_call_operand.hbm [shape: f32[8,8,32], index: 0, kind: input, shape index: {}]
  %s1 = inlined_call_operand.hbm [shape: f32[32,32], index: 1, kind: input, shape index: {}]
  %s2 = inlined_call_operand.hbm [shape: f32[32,32], index: 2, kind: input, shape index: {}]
  %s3 = inlined_call_operand.hbm [shape: f32[32,32], index: 3, kind: input, shape index: {}]
  %s4 = inlined_call_operand.hbm [shape: f32[32,32], index: 4, kind: input, shape index: {}]
  %s5 = inlined_call_operand.hbm [shape: f32[32,32], index: 5, kind: input, shape index: {}]
  %s6 = inlined_call_operand.hbm [shape: f32[32,32], index: 6, kind: input, shape index: {}]
  %s7 = inlined_call_operand.vmem [shape: f32[1,32], index: 7, kind: input, shape index: {}]
  %s8 = inlined_call_operand.vmem [shape: f32[1,32], index: 8, kind: input, shape index: {}]
  %s9 = inlined_call_operand.vmem [shape: f32[1,32], index: 9, kind: input, shape index: {}]
  %s10 = inlined_call_operand.vmem [shape: f32[1,32], index: 10, kind: input, shape index: {}]
  %s11 = inlined_call_operand.hbm [shape: f32[32,32], index: 11, kind: input, shape index: {}]
  %s12 = inlined_call_operand.vmem [shape: f32[1,32], index: 12, kind: input, shape index: {}]
  %s13 = inlined_call_operand.hbm [shape: f32[32,128], index: 13, kind: input, shape index: {}]
  %s14 = inlined_call_operand.vmem [shape: f32[1,128], index: 14, kind: input, shape index: {}]
  %s15 = inlined_call_operand.hbm [shape: f32[8,128], index: 15, kind: output, shape index: {}]
  %s16 = sld [smem:[#allocation0]]
  $region106: #{tpu_custom_call.1} parent=0
    _
  %s18 = ssub.s32 1, %s16
  %s19 = scalar_select 0, %s18, %s16
  $region1: #{tpu_custom_call.1} parent=0
    #allocation2 [shape = 'u8[32768]{0}', space=vmem, size = 0x8000, scoped, tag = 'input window, operand 0, single buffered']
    #allocation3 [shape = 's32[1]{0}', space=sflag, size = 0x4, scoped, tag = 'scoped memory for tpu_custom_call.1']
    #allocation4 [shape = 's32[1]{0}', space=sflag, size = 0x4, scoped, tag = 'scoped memory for tpu_custom_call.1']
    #allocation5 [shape = 'u8[16384]{0}', space=vmem, size = 0x4000, scoped, tag = 'input window, operand 1, single buffered']
    #allocation6 [shape = 's32[1]{0}', space=sflag, size = 0x4, scoped, tag = 'scoped memory for tpu_custom_call.1']
    #allocation7 [shape = 'u8[16384]{0}', space=vmem, size = 0x4000, scoped, tag = 'input window, operand 2, single buffered']
    #allocation8 [shape = 'u8[16384]{0}', space=vmem, size = 0x4000, scoped, tag = 'input window, operand 3, single buffered']
    #allocation9 [shape = 's32[1]{0}', space=sflag, size = 0x4, scoped, tag = 'scoped memory for tpu_custom_call.1']
    #allocation10 [shape = 'u8[16384]{0}', space=vmem, size = 0x4000, scoped, tag = 'input window, operand 4, single buffered']
    #allocation11 [shape = 'u8[16384]{0}', space=vmem, size = 0x4000, scoped, tag = 'input window, operand 5, single buffered']
    #allocation12 [shape = 's32[1]{0}', space=sflag, size = 0x4, scoped, tag = 'scoped memory for tpu_custom_call.1']
    #allocation13 [shape = 'u8[16384]{0}', space=vmem, size = 0x4000, scoped, tag = 'input window, operand 6, single buffered']
    #allocation14 [shape = 'u8[16384]{0}', space=vmem, size = 0x4000, scoped, tag = 'input window, operand 11, single buffered']
    #allocation15 [shape = 's32[1]{0}', space=sflag, size = 0x4, scoped, tag = 'scoped memory for tpu_custom_call.1']
    #allocation16 [shape = 'u8[16384]{0}', space=vmem, size = 0x4000, scoped, tag = 'input window, operand 13, single buffered']
    #allocation17 [shape = 'u8[4096]{0}', space=vmem, size = 0x1000, scoped, tag = 'output window, operand 0, single buffered']
    %20 = vsyncpa [#allocation3], 0
    %21 = vsyncpa [#allocation6], 0
    %22 = vsyncpa [#allocation9], 0
    %23 = vsyncpa [#allocation12], 0
    %24 = vsyncpa [#allocation15], 0
    %25 = vsyncpa [#allocation4], 0
    // Predicated region
    $region2: #{tpu_custom_call.1} parent=1 // pred_check
      _
    $region3: #{tpu_custom_call.1} parent=1 // pred_check_branch
      %27 = sbr.rel (0) target = $region5
    $region4: #{tpu_custom_call.1} parent=1 // pred_region
      %s29 = ssub.s32 1024, 1024
      %30 = vsyncadd [#allocation3], %s29
      %s31 = sshll.u32 [#allocation2], 4
      %s32 = int_to_ptr.vmem [resolvable:$true] %s31
      %37 = dma.hbm_to_vmem [thread:$0]  %s0, 1024, %s32, [#allocation3], 128, 128, 8
    $region5: #{tpu_custom_call.1} parent=1 // pred_fallthru
      _
    // Predicated region
    $region6: #{tpu_custom_call.1} parent=1 // pred_check
      _
    $region7: #{tpu_custom_call.1} parent=1 // pred_check_branch
      %39 = sbr.rel (0) target = $region9
    $region8: #{tpu_custom_call.1} parent=1 // pred_region
      %s41 = ssub.s32 512, 512
      %42 = vsyncadd [#allocation6], %s41
      %s43 = sshll.u32 [#allocation5], 4
      %s44 = int_to_ptr.vmem [resolvable:$true] %s43
      %49 = dma.hbm_to_vmem [thread:$0]  %s1, 512, %s44, [#allocation6], 128, 128, 8
    $region9: #{tpu_custom_call.1} parent=1 // pred_fallthru
      _
    // Predicated region
    $region10: #{tpu_custom_call.1} parent=1 // pred_check
      _
    $region11: #{tpu_custom_call.1} parent=1 // pred_check_branch
      %51 = sbr.rel (0) target = $region13
    $region12: #{tpu_custom_call.1} parent=1 // pred_region
      %s53 = ssub.s32 512, 512
      %54 = vsyncadd [#allocation6], %s53
      %s55 = sshll.u32 [#allocation7], 4
      %s56 = int_to_ptr.vmem [resolvable:$true] %s55
      %61 = dma.hbm_to_vmem [thread:$0]  %s2, 512, %s56, [#allocation6], 128, 128, 8
    $region13: #{tpu_custom_call.1} parent=1 // pred_fallthru
      _
    // Predicated region
    $region14: #{tpu_custom_call.1} parent=1 // pred_check
      _
    $region15: #{tpu_custom_call.1} parent=1 // pred_check_branch
      %63 = sbr.rel (0) target = $region17
    $region16: #{tpu_custom_call.1} parent=1 // pred_region
      %s65 = ssub.s32 512, 512
      %66 = vsyncadd [#allocation9], %s65
      %s67 = sshll.u32 [#allocation8], 4
      %s68 = int_to_ptr.vmem [resolvable:$true] %s67
      %73 = dma.hbm_to_vmem [thread:$0]  %s3, 512, %s68, [#allocation9], 128, 128, 8
    $region17: #{tpu_custom_call.1} parent=1 // pred_fallthru
      _
    // Predicated region
    $region18: #{tpu_custom_call.1} parent=1 // pred_check
      _
    $region19: #{tpu_custom_call.1} parent=1 // pred_check_branch
      %75 = sbr.rel (0) target = $region21
    $region20: #{tpu_custom_call.1} parent=1 // pred_region
      %s77 = ssub.s32 512, 512
      %78 = vsyncadd [#allocation9], %s77
      %s79 = sshll.u32 [#allocation10], 4
      %s80 = int_to_ptr.vmem [resolvable:$true] %s79
      %85 = dma.hbm_to_vmem [thread:$0]  %s4, 512, %s80, [#allocation9], 128, 128, 8
    $region21: #{tpu_custom_call.1} parent=1 // pred_fallthru
      _
    // Predicated region
    $region22: #{tpu_custom_call.1} parent=1 // pred_check
      _
    $region23: #{tpu_custom_call.1} parent=1 // pred_check_branch
      %87 = sbr.rel (0) target = $region25
    $region24: #{tpu_custom_call.1} parent=1 // pred_region
      %s89 = ssub.s32 512, 512
      %90 = vsyncadd [#allocation12], %s89
      %s91 = sshll.u32 [#allocation11], 4
      %s92 = int_to_ptr.vmem [resolvable:$true] %s91
      %97 = dma.hbm_to_vmem [thread:$0]  %s5, 512, %s92, [#allocation12], 128, 128, 8
    $region25: #{tpu_custom_call.1} parent=1 // pred_fallthru
      _
    // Predicated region
    $region26: #{tpu_custom_call.1} parent=1 // pred_check
      _
    $region27: #{tpu_custom_call.1} parent=1 // pred_check_branch
      %99 = sbr.rel (0) target = $region29
    $region28: #{tpu_custom_call.1} parent=1 // pred_region
      %s101 = ssub.s32 512, 512
      %102 = vsyncadd [#allocation12], %s101
      %s103 = sshll.u32 [#allocation13], 4
      %s104 = int_to_ptr.vmem [resolvable:$true] %s103
      %109 = dma.hbm_to_vmem [thread:$0]  %s6, 512, %s104, [#allocation12], 128, 128, 8
    $region29: #{tpu_custom_call.1} parent=1 // pred_fallthru
      _
    // Predicated region
    $region30: #{tpu_custom_call.1} parent=1 // pred_check
      _
    $region31: #{tpu_custom_call.1} parent=1 // pred_check_branch
      %111 = sbr.rel (0) target = $region33
    $region32: #{tpu_custom_call.1} parent=1 // pred_region
      _
    $region33: #{tpu_custom_call.1} parent=1 // pred_fallthru
      _
    // Predicated region
    $region34: #{tpu_custom_call.1} parent=1 // pred_check
      _
    $region35: #{tpu_custom_call.1} parent=1 // pred_check_branch
      %113 = sbr.rel (0) target = $region37
    $region36: #{tpu_custom_call.1} parent=1 // pred_region
      _
    $region37: #{tpu_custom_call.1} parent=1 // pred_fallthru
      _
    // Predicated region
    $region38: #{tpu_custom_call.1} parent=1 // pred_check
      _
    $region39: #{tpu_custom_call.1} parent=1 // pred_check_branch
      %115 = sbr.rel (0) target = $region41
    $region40: #{tpu_custom_call.1} parent=1 // pred_region
      _
    $region41: #{tpu_custom_call.1} parent=1 // pred_fallthru
      _
    // Predicated region
    $region42: #{tpu_custom_call.1} parent=1 // pred_check
      _
    $region43: #{tpu_custom_call.1} parent=1 // pred_check_branch
      %117 = sbr.rel (0) target = $region45
    $region44: #{tpu_custom_call.1} parent=1 // pred_region
      _
    $region45: #{tpu_custom_call.1} parent=1 // pred_fallthru
      _
    // Predicated region
    $region46: #{tpu_custom_call.1} parent=1 // pred_check
      _
    $region47: #{tpu_custom_call.1} parent=1 // pred_check_branch
      %119 = sbr.rel (0) target = $region49
    $region48: #{tpu_custom_call.1} parent=1 // pred_region
      %s121 = ssub.s32 512, 512
      %122 = vsyncadd [#allocation15], %s121
      %s123 = sshll.u32 [#allocation14], 4
      %s124 = int_to_ptr.vmem [resolvable:$true] %s123
      %129 = dma.hbm_to_vmem [thread:$0]  %s11, 512, %s124, [#allocation15], 128, 128, 8
    $region49: #{tpu_custom_call.1} parent=1 // pred_fallthru
      _
    // Predicated region
    $region50: #{tpu_custom_call.1} parent=1 // pred_check
      _
    $region51: #{tpu_custom_call.1} parent=1 // pred_check_branch
      %131 = sbr.rel (0) target = $region53
    $region52: #{tpu_custom_call.1} parent=1 // pred_region
      _
    $region53: #{tpu_custom_call.1} parent=1 // pred_fallthru
      _
    // Predicated region
    $region54: #{tpu_custom_call.1} parent=1 // pred_check
      _
    $region55: #{tpu_custom_call.1} parent=1 // pred_check_branch
      %133 = sbr.rel (0) target = $region57
    $region56: #{tpu_custom_call.1} parent=1 // pred_region
      %s135 = ssub.s32 512, 512
      %136 = vsyncadd [#allocation15], %s135
      %s137 = sshll.u32 [#allocation16], 4
      %s138 = int_to_ptr.vmem [resolvable:$true] %s137
      %143 = dma.hbm_to_vmem [thread:$0]  %s13, 512, %s138, [#allocation15], 128, 128, 8
    $region57: #{tpu_custom_call.1} parent=1 // pred_fallthru
      _
    // Predicated region
    $region58: #{tpu_custom_call.1} parent=1 // pred_check
      _
    $region59: #{tpu_custom_call.1} parent=1 // pred_check_branch
      %145 = sbr.rel (0) target = $region61
    $region60: #{tpu_custom_call.1} parent=1 // pred_region
      _
    $region61: #{tpu_custom_call.1} parent=1 // pred_fallthru
      _
    // Predicated region
    $region62: #{tpu_custom_call.1} parent=1 // pred_check
      _
    $region63: #{tpu_custom_call.1} parent=1 // pred_check_branch
      %147 = sbr.rel (0) target = $region65
    $region64: #{tpu_custom_call.1} parent=1 // pred_region
      %148 = dma.done [#allocation3], 1024
    $region65: #{tpu_custom_call.1} parent=1 // pred_fallthru
      _
    // Predicated region
    $region66: #{tpu_custom_call.1} parent=1 // pred_check
      _
    $region67: #{tpu_custom_call.1} parent=1 // pred_check_branch
      %150 = sbr.rel (0) target = $region69
    $region68: #{tpu_custom_call.1} parent=1 // pred_region
      %151 = dma.done [#allocation6], 512
    $region69: #{tpu_custom_call.1} parent=1 // pred_fallthru
      _
    // Predicated region
    $region70: #{tpu_custom_call.1} parent=1 // pred_check
      _
    $region71: #{tpu_custom_call.1} parent=1 // pred_check_branch
      %153 = sbr.rel (0) target = $region73
    $region72: #{tpu_custom_call.1} parent=1 // pred_region
      %154 = dma.done [#allocation6], 512
    $region73: #{tpu_custom_call.1} parent=1 // pred_fallthru
      _
    // Predicated region
    $region74: #{tpu_custom_call.1} parent=1 // pred_check
      _
    $region75: #{tpu_custom_call.1} parent=1 // pred_check_branch
      %156 = sbr.rel (0) target = $region77
    $region76: #{tpu_custom_call.1} parent=1 // pred_region
      %157 = dma.done [#allocation9], 512
    $region77: #{tpu_custom_call.1} parent=1 // pred_fallthru
      _
    // Predicated region
    $region78: #{tpu_custom_call.1} parent=1 // pred_check
      _
    $region79: #{tpu_custom_call.1} parent=1 // pred_check_branch
      %159 = sbr.rel (0) target = $region81
    $region80: #{tpu_custom_call.1} parent=1 // pred_region
      %160 = dma.done [#allocation9], 512
    $region81: #{tpu_custom_call.1} parent=1 // pred_fallthru
      _
    // Predicated region
    $region82: #{tpu_custom_call.1} parent=1 // pred_check
      _
    $region83: #{tpu_custom_call.1} parent=1 // pred_check_branch
      %162 = sbr.rel (0) target = $region85
    $region84: #{tpu_custom_call.1} parent=1 // pred_region
      %163 = dma.done [#allocation12], 512
    $region85: #{tpu_custom_call.1} parent=1 // pred_fallthru
      _
    // Predicated region
    $region86: #{tpu_custom_call.1} parent=1 // pred_check
      _
    $region87: #{tpu_custom_call.1} parent=1 // pred_check_branch
      %165 = sbr.rel (0) target = $region89
    $region88: #{tpu_custom_call.1} parent=1 // pred_region
      %166 = dma.done [#allocation12], 512
    $region89: #{tpu_custom_call.1} parent=1 // pred_fallthru
      _
    // Predicated region
    $region90: #{tpu_custom_call.1} parent=1 // pred_check
      _
    $region91: #{tpu_custom_call.1} parent=1 // pred_check_branch
      %168 = sbr.rel (0) target = $region93
    $region92: #{tpu_custom_call.1} parent=1 // pred_region
      %169 = dma.done [#allocation15], 512
    $region93: #{tpu_custom_call.1} parent=1 // pred_fallthru
      _
    // Predicated region
    $region94: #{tpu_custom_call.1} parent=1 // pred_check
      _
    $region95: #{tpu_custom_call.1} parent=1 // pred_check_branch
      %171 = sbr.rel (0) target = $region97
    $region96: #{tpu_custom_call.1} parent=1 // pred_region
      %172 = dma.done [#allocation15], 512
    $region97: #{tpu_custom_call.1} parent=1 // pred_fallthru
      _
    %v173 = vld [vmem:[#allocation2] sm:$0xff]
    %v174 = vld [vmem:[#allocation2 + $0x8] sm:$0xff]
    %v175 = vld [vmem:[#allocation2 + $0x10] sm:$0xff]
    %v176 = vld [vmem:[#allocation2 + $0x18] sm:$0xff]
    %v177 = vld [vmem:[#allocation2 + $0x20] sm:$0xff]
    %v178 = vld [vmem:[#allocation2 + $0x28] sm:$0xff]
    %v179 = vld [vmem:[#allocation2 + $0x30] sm:$0xff]
    %v180 = vld [vmem:[#allocation2 + $0x38] sm:$0xff]
    %v181 = vld [vmem:[#allocation5] sm:$0xff]
    %v182 = vld [vmem:[#allocation5 + $0x8] sm:$0xff]
    %v183 = vld [vmem:[#allocation5 + $0x10] sm:$0xff]
    %v184 = vld [vmem:[#allocation5 + $0x18] sm:$0xff]
    %v185 = vld [vmem:[%s7] sm:$0x1]
    %v187 = vlaneseq
    %v188 = vshrl.u32 %v187, 7
    %v189 = vsub.s32 0, %v188
    %v190 = vrot.slane %v185, %v189
    %vm192 = vcmask 261120
    %v194 = vsel %vm192, %v173, 0
    %v197 = vsel %vm192, %v174, 0
    %v200 = vsel %vm192, %v175, 0
    %v203 = vsel %vm192, %v176, 0
    %v206 = vsel %vm192, %v177, 0
    %v209 = vsel %vm192, %v178, 0
    %v212 = vsel %vm192, %v179, 0
    %v215 = vsel %vm192, %v180, 0
    %217 = vmatprep.subr.mxu0 0.0
    %218 = vmatpush1.msra.mxu0 0.0
    %219 = vmatprep.subr.mxu0 0.0
    %220 = vmatpush1.msra.mxu0 0.0
    %221 = vmatprep.subr.mxu0 0.0
    %222 = vmatpush1.msra.mxu0 0.0
    %223 = vmatprep.subr.mxu0 0.0
    %224 = vmatpush1.msra.mxu0 0.0
    %225 = vmatprep.subr.mxu0 0.0
    %226 = vmatpush1.msra.mxu0 0.0
    %227 = vmatprep.subr.mxu0 0.0
    %228 = vmatpush1.msra.mxu0 0.0
    %229 = vmatprep.subr.mxu0 0.0
    %230 = vmatpush1.msra.mxu0 0.0
    %231 = vmatprep.subr.mxu0 0.0
    %232 = vmatpush1.msra.mxu0 0.0
    %233 = vmatprep.subr.mxu0 0.0
    %234 = vmatpush1.msra.mxu0 0.0
    %235 = vmatprep.subr.mxu0 0.0
    %236 = vmatpush1.msra.mxu0 0.0
    %237 = vmatprep.subr.mxu0 0.0
    %238 = vmatpush1.msra.mxu0 0.0
    %239 = vmatprep.subr.mxu0 0.0
    %240 = vmatpush1.msra.mxu0 0.0
    %241 = vmatprep.subr.mxu0 0.0
    %242 = vmatpush1.msra.mxu0 %v184
    %243 = vmatprep.subr.mxu0 0.0
    %244 = vmatpush1.msra.mxu0 %v183
    %245 = vmatprep.subr.mxu0 0.0
    %246 = vmatpush1.msra.mxu0 %v182
    %247 = vmatprep.subr.mxu0 0.0
    %248 = vmatpush1.msra.mxu0 %v181
    %249 = vmatprep.subr.mxu0 0.0
    %250 = vmatpush2.msra.mxu0 0.0
    %251 = vmatprep.subr.mxu0 0.0
    %252 = vmatpush2.msra.mxu0 0.0
    %253 = vmatprep.subr.mxu0 0.0
    %254 = vmatpush2.msra.mxu0 0.0
    %255 = vmatprep.subr.mxu0 0.0
    %256 = vmatpush2.msra.mxu0 0.0
    %257 = vmatprep.subr.mxu0 0.0
    %258 = vmatpush2.msra.mxu0 0.0
    %259 = vmatprep.subr.mxu0 0.0
    %260 = vmatpush2.msra.mxu0 0.0
    %261 = vmatprep.subr.mxu0 0.0
    %262 = vmatpush2.msra.mxu0 0.0
    %263 = vmatprep.subr.mxu0 0.0
    %264 = vmatpush2.msra.mxu0 0.0
    %265 = vmatprep.subr.mxu0 0.0
    %266 = vmatpush2.msra.mxu0 0.0
    %267 = vmatprep.subr.mxu0 0.0
    %268 = vmatpush2.msra.mxu0 0.0
    %269 = vmatprep.subr.mxu0 0.0
    %270 = vmatpush2.msra.mxu0 0.0
    %271 = vmatprep.subr.mxu0 0.0
    %272 = vmatpush2.msra.mxu0 0.0
    %273 = vmatprep.subr.mxu0 0.0
    %274 = vmatpush2.msra.mxu0 0.0
    %275 = vmatprep.subr.mxu0 0.0
    %276 = vmatpush2.msra.mxu0 0.0
    %277 = vmatprep.subr.mxu0 0.0
    %278 = vmatpush2.msra.mxu0 0.0
    %279 = vmatprep.subr.mxu0 0.0
    %280 = vmatpush2.msra.mxu0 0.0
    %281 = vmatprep.mubr.f32.mxu0 0.0
    %282 = vmatmul.mubr.f32.gmra.mxu0 %v194
    %v283 = vpop.f32.mrf.mxu0
    %v284 = vadd.f32 %v190, %v283
    %v285 = vpop.f32.mrf.mxu0
    %286 = vmatprep.mubr.f32.mxu0 0.0
    %287 = vmatmul.mubr.f32.gmra.mxu0 %v197
    %v288 = vpop.f32.mrf.mxu0
    %v289 = vadd.f32 %v190, %v288
    %v290 = vpop.f32.mrf.mxu0
    %291 = vmatprep.mubr.f32.mxu0 0.0
    %292 = vmatmul.mubr.f32.gmra.mxu0 %v200
    %v293 = vpop.f32.mrf.mxu0
    %v294 = vadd.f32 %v190, %v293
    %v295 = vpop.f32.mrf.mxu0
    %296 = vmatprep.mubr.f32.mxu0 0.0
    %297 = vmatmul.mubr.f32.gmra.mxu0 %v203
    %v298 = vpop.f32.mrf.mxu0
    %v299 = vadd.f32 %v190, %v298
    %v300 = vpop.f32.mrf.mxu0
    %301 = vmatprep.mubr.f32.mxu0 0.0
    %302 = vmatmul.mubr.f32.gmra.mxu0 %v206
    %v303 = vpop.f32.mrf.mxu0
    %v304 = vadd.f32 %v190, %v303
    %v305 = vpop.f32.mrf.mxu0
    %306 = vmatprep.mubr.f32.mxu0 0.0
    %307 = vmatmul.mubr.f32.gmra.mxu0 %v209
    %v308 = vpop.f32.mrf.mxu0
    %v309 = vadd.f32 %v190, %v308
    %v310 = vpop.f32.mrf.mxu0
    %311 = vmatprep.mubr.f32.mxu0 0.0
    %312 = vmatmul.mubr.f32.gmra.mxu0 %v212
    %v313 = vpop.f32.mrf.mxu0
    %v314 = vadd.f32 %v190, %v313
    %v315 = vpop.f32.mrf.mxu0
    %316 = vmatprep.mubr.f32.mxu0 0.0
    %317 = vmatmul.mubr.f32.gmra.mxu0 %v215
    %v318 = vpop.f32.mrf.mxu0
    %v319 = vadd.f32 %v190, %v318
    %v320 = vpop.f32.mrf.mxu0
    %321 = vdwg.mxu0
    %v322 = vld [vmem:[#allocation7] sm:$0xff]
    %v323 = vld [vmem:[#allocation7 + $0x8] sm:$0xff]
    %v324 = vld [vmem:[#allocation7 + $0x10] sm:$0xff]
    %v325 = vld [vmem:[#allocation7 + $0x18] sm:$0xff]
    %v326 = vld [vmem:[%s8] sm:$0x1]
    %v328 = vlaneseq
    %v329 = vshrl.u32 %v328, 7
    %v330 = vsub.s32 0, %v329
    %v331 = vrot.slane %v326, %v330
    %333 = vmatprep.subr.mxu0 0.0
    %334 = vmatpush1.msra.mxu0 0.0
    %335 = vmatprep.subr.mxu0 0.0
    %336 = vmatpush1.msra.mxu0 0.0
    %337 = vmatprep.subr.mxu0 0.0
    %338 = vmatpush1.msra.mxu0 0.0
    %339 = vmatprep.subr.mxu0 0.0
    %340 = vmatpush1.msra.mxu0 0.0
    %341 = vmatprep.subr.mxu0 0.0
    %342 = vmatpush1.msra.mxu0 0.0
    %343 = vmatprep.subr.mxu0 0.0
    %344 = vmatpush1.msra.mxu0 0.0
    %345 = vmatprep.subr.mxu0 0.0
    %346 = vmatpush1.msra.mxu0 0.0
    %347 = vmatprep.subr.mxu0 0.0
    %348 = vmatpush1.msra.mxu0 0.0
    %349 = vmatprep.subr.mxu0 0.0
    %350 = vmatpush1.msra.mxu0 0.0
    %351 = vmatprep.subr.mxu0 0.0
    %352 = vmatpush1.msra.mxu0 0.0
    %353 = vmatprep.subr.mxu0 0.0
    %354 = vmatpush1.msra.mxu0 0.0
    %355 = vmatprep.subr.mxu0 0.0
    %356 = vmatpush1.msra.mxu0 0.0
    %357 = vmatprep.subr.mxu0 0.0
    %358 = vmatpush1.msra.mxu0 %v325
    %359 = vmatprep.subr.mxu0 0.0
    %360 = vmatpush1.msra.mxu0 %v324
    %361 = vmatprep.subr.mxu0 0.0
    %362 = vmatpush1.msra.mxu0 %v323
    %363 = vmatprep.subr.mxu0 0.0
    %364 = vmatpush1.msra.mxu0 %v322
    %365 = vmatprep.subr.mxu0 0.0
    %366 = vmatpush2.msra.mxu0 0.0
    %367 = vmatprep.subr.mxu0 0.0
    %368 = vmatpush2.msra.mxu0 0.0
    %369 = vmatprep.subr.mxu0 0.0
    %370 = vmatpush2.msra.mxu0 0.0
    %371 = vmatprep.subr.mxu0 0.0
    %372 = vmatpush2.msra.mxu0 0.0
    %373 = vmatprep.subr.mxu0 0.0
    %374 = vmatpush2.msra.mxu0 0.0
    %375 = vmatprep.subr.mxu0 0.0
    %376 = vmatpush2.msra.mxu0 0.0
    %377 = vmatprep.subr.mxu0 0.0
    %378 = vmatpush2.msra.mxu0 0.0
    %379 = vmatprep.subr.mxu0 0.0
    %380 = vmatpush2.msra.mxu0 0.0
    %381 = vmatprep.subr.mxu0 0.0
    %382 = vmatpush2.msra.mxu0 0.0
    %383 = vmatprep.subr.mxu0 0.0
    %384 = vmatpush2.msra.mxu0 0.0
    %385 = vmatprep.subr.mxu0 0.0
    %386 = vmatpush2.msra.mxu0 0.0
    %387 = vmatprep.subr.mxu0 0.0
    %388 = vmatpush2.msra.mxu0 0.0
    %389 = vmatprep.subr.mxu0 0.0
    %390 = vmatpush2.msra.mxu0 0.0
    %391 = vmatprep.subr.mxu0 0.0
    %392 = vmatpush2.msra.mxu0 0.0
    %393 = vmatprep.subr.mxu0 0.0
    %394 = vmatpush2.msra.mxu0 0.0
    %395 = vmatprep.subr.mxu0 0.0
    %396 = vmatpush2.msra.mxu0 0.0
    %397 = vmatprep.mubr.f32.mxu0 0.0
    %398 = vmatmul.mubr.f32.gmra.mxu0 %v194
    %v399 = vpop.f32.mrf.mxu0
    %v400 = vadd.f32 %v331, %v399
    %v401 = vpop.f32.mrf.mxu0
    %402 = vmatprep.mubr.f32.mxu0 0.0
    %403 = vmatmul.mubr.f32.gmra.mxu0 %v197
    %v404 = vpop.f32.mrf.mxu0
    %v405 = vadd.f32 %v331, %v404
    %v406 = vpop.f32.mrf.mxu0
    %407 = vmatprep.mubr.f32.mxu0 0.0
    %408 = vmatmul.mubr.f32.gmra.mxu0 %v200
    %v409 = vpop.f32.mrf.mxu0
    %v410 = vadd.f32 %v331, %v409
    %v411 = vpop.f32.mrf.mxu0
    %412 = vmatprep.mubr.f32.mxu0 0.0
    %413 = vmatmul.mubr.f32.gmra.mxu0 %v203
    %v414 = vpop.f32.mrf.mxu0
    %v415 = vadd.f32 %v331, %v414
    %v416 = vpop.f32.mrf.mxu0
    %417 = vmatprep.mubr.f32.mxu0 0.0
    %418 = vmatmul.mubr.f32.gmra.mxu0 %v206
    %v419 = vpop.f32.mrf.mxu0
    %v420 = vadd.f32 %v331, %v419
    %v421 = vpop.f32.mrf.mxu0
    %422 = vmatprep.mubr.f32.mxu0 0.0
    %423 = vmatmul.mubr.f32.gmra.mxu0 %v209
    %v424 = vpop.f32.mrf.mxu0
    %v425 = vadd.f32 %v331, %v424
    %v426 = vpop.f32.mrf.mxu0
    %427 = vmatprep.mubr.f32.mxu0 0.0
    %428 = vmatmul.mubr.f32.gmra.mxu0 %v212
    %v429 = vpop.f32.mrf.mxu0
    %v430 = vadd.f32 %v331, %v429
    %v431 = vpop.f32.mrf.mxu0
    %432 = vmatprep.mubr.f32.mxu0 0.0
    %433 = vmatmul.mubr.f32.gmra.mxu0 %v215
    %v434 = vpop.f32.mrf.mxu0
    %v435 = vadd.f32 %v331, %v434
    %v436 = vpop.f32.mrf.mxu0
    %437 = vdwg.mxu0
    %v438 = vld [vmem:[#allocation8] sm:$0xff]
    %v439 = vld [vmem:[#allocation8 + $0x8] sm:$0xff]
    %v440 = vld [vmem:[#allocation8 + $0x10] sm:$0xff]
    %v441 = vld [vmem:[#allocation8 + $0x18] sm:$0xff]
    %v442 = vld [vmem:[%s9] sm:$0x1]
    %v444 = vlaneseq
    %v445 = vshrl.u32 %v444, 7
    %v446 = vsub.s32 0, %v445
    %v447 = vrot.slane %v442, %v446
    %449 = vmatprep.subr.mxu0 0.0
    %450 = vmatpush1.msra.mxu0 0.0
    %451 = vmatprep.subr.mxu0 0.0
    %452 = vmatpush1.msra.mxu0 0.0
    %453 = vmatprep.subr.mxu0 0.0
    %454 = vmatpush1.msra.mxu0 0.0
    %455 = vmatprep.subr.mxu0 0.0
    %456 = vmatpush1.msra.mxu0 0.0
    %457 = vmatprep.subr.mxu0 0.0
    %458 = vmatpush1.msra.mxu0 0.0
    %459 = vmatprep.subr.mxu0 0.0
    %460 = vmatpush1.msra.mxu0 0.0
    %461 = vmatprep.subr.mxu0 0.0
    %462 = vmatpush1.msra.mxu0 0.0
    %463 = vmatprep.subr.mxu0 0.0
    %464 = vmatpush1.msra.mxu0 0.0
    %465 = vmatprep.subr.mxu0 0.0
    %466 = vmatpush1.msra.mxu0 0.0
    %467 = vmatprep.subr.mxu0 0.0
    %468 = vmatpush1.msra.mxu0 0.0
    %469 = vmatprep.subr.mxu0 0.0
    %470 = vmatpush1.msra.mxu0 0.0
    %471 = vmatprep.subr.mxu0 0.0
    %472 = vmatpush1.msra.mxu0 0.0
    %473 = vmatprep.subr.mxu0 0.0
    %474 = vmatpush1.msra.mxu0 %v441
    %475 = vmatprep.subr.mxu0 0.0
    %476 = vmatpush1.msra.mxu0 %v440
    %477 = vmatprep.subr.mxu0 0.0
    %478 = vmatpush1.msra.mxu0 %v439
    %479 = vmatprep.subr.mxu0 0.0
    %480 = vmatpush1.msra.mxu0 %v438
    %481 = vmatprep.subr.mxu0 0.0
    %482 = vmatpush2.msra.mxu0 0.0
    %483 = vmatprep.subr.mxu0 0.0
    %484 = vmatpush2.msra.mxu0 0.0
    %485 = vmatprep.subr.mxu0 0.0
    %486 = vmatpush2.msra.mxu0 0.0
    %487 = vmatprep.subr.mxu0 0.0
    %488 = vmatpush2.msra.mxu0 0.0
    %489 = vmatprep.subr.mxu0 0.0
    %490 = vmatpush2.msra.mxu0 0.0
    %491 = vmatprep.subr.mxu0 0.0
    %492 = vmatpush2.msra.mxu0 0.0
    %493 = vmatprep.subr.mxu0 0.0
    %494 = vmatpush2.msra.mxu0 0.0
    %495 = vmatprep.subr.mxu0 0.0
    %496 = vmatpush2.msra.mxu0 0.0
    %497 = vmatprep.subr.mxu0 0.0
    %498 = vmatpush2.msra.mxu0 0.0
    %499 = vmatprep.subr.mxu0 0.0
    %500 = vmatpush2.msra.mxu0 0.0
    %501 = vmatprep.subr.mxu0 0.0
    %502 = vmatpush2.msra.mxu0 0.0
    %503 = vmatprep.subr.mxu0 0.0
    %504 = vmatpush2.msra.mxu0 0.0
    %505 = vmatprep.subr.mxu0 0.0
    %506 = vmatpush2.msra.mxu0 0.0
    %507 = vmatprep.subr.mxu0 0.0
    %508 = vmatpush2.msra.mxu0 0.0
    %509 = vmatprep.subr.mxu0 0.0
    %510 = vmatpush2.msra.mxu0 0.0
    %511 = vmatprep.subr.mxu0 0.0
    %512 = vmatpush2.msra.mxu0 0.0
    %513 = vmatprep.mubr.f32.mxu0 0.0
    %514 = vmatmul.mubr.f32.gmra.mxu0 %v194
    %v515 = vpop.f32.mrf.mxu0
    %v516 = vadd.f32 %v447, %v515
    %v517 = vpop.f32.mrf.mxu0
    %518 = vmatprep.mubr.f32.mxu0 0.0
    %519 = vmatmul.mubr.f32.gmra.mxu0 %v197
    %v520 = vpop.f32.mrf.mxu0
    %v521 = vadd.f32 %v447, %v520
    %v522 = vpop.f32.mrf.mxu0
    %523 = vmatprep.mubr.f32.mxu0 0.0
    %524 = vmatmul.mubr.f32.gmra.mxu0 %v200
    %v525 = vpop.f32.mrf.mxu0
    %v526 = vadd.f32 %v447, %v525
    %v527 = vpop.f32.mrf.mxu0
    %528 = vmatprep.mubr.f32.mxu0 0.0
    %529 = vmatmul.mubr.f32.gmra.mxu0 %v203
    %v530 = vpop.f32.mrf.mxu0
    %v531 = vadd.f32 %v447, %v530
    %v532 = vpop.f32.mrf.mxu0
    %533 = vmatprep.mubr.f32.mxu0 0.0
    %534 = vmatmul.mubr.f32.gmra.mxu0 %v206
    %v535 = vpop.f32.mrf.mxu0
    %v536 = vadd.f32 %v447, %v535
    %v537 = vpop.f32.mrf.mxu0
    %538 = vmatprep.mubr.f32.mxu0 0.0
    %539 = vmatmul.mubr.f32.gmra.mxu0 %v209
    %v540 = vpop.f32.mrf.mxu0
    %v541 = vadd.f32 %v447, %v540
    %v542 = vpop.f32.mrf.mxu0
    %543 = vmatprep.mubr.f32.mxu0 0.0
    %544 = vmatmul.mubr.f32.gmra.mxu0 %v212
    %v545 = vpop.f32.mrf.mxu0
    %v546 = vadd.f32 %v447, %v545
    %v547 = vpop.f32.mrf.mxu0
    %548 = vmatprep.mubr.f32.mxu0 0.0
    %549 = vmatmul.mubr.f32.gmra.mxu0 %v215
    %v550 = vpop.f32.mrf.mxu0
    %v551 = vadd.f32 %v447, %v550
    %v552 = vpop.f32.mrf.mxu0
    %553 = vdwg.mxu0
    %v554 = vld [vmem:[#allocation10] sm:$0xff]
    %v555 = vld [vmem:[#allocation10 + $0x8] sm:$0xff]
    %v556 = vld [vmem:[#allocation10 + $0x10] sm:$0xff]
    %v557 = vld [vmem:[#allocation10 + $0x18] sm:$0xff]
    %v558 = vld [vmem:[#allocation11] sm:$0xff]
    %v559 = vld [vmem:[#allocation11 + $0x8] sm:$0xff]
    %v560 = vld [vmem:[#allocation11 + $0x10] sm:$0xff]
    %v561 = vld [vmem:[#allocation11 + $0x18] sm:$0xff]
    %v562 = vld [vmem:[#allocation13] sm:$0xff]
    %v563 = vld [vmem:[#allocation13 + $0x8] sm:$0xff]
    %v564 = vld [vmem:[#allocation13 + $0x10] sm:$0xff]
    %v565 = vld [vmem:[#allocation13 + $0x18] sm:$0xff]
    %v566 = vld [vmem:[%s10] sm:$0x1]
    %v568 = vlaneseq
    %v569 = vshrl.u32 %v568, 7
    %v570 = vsub.s32 0, %v569
    %v571 = vrot.slane %v566, %v570
    %v574 = vsel %vm192, 0.0, 0
    %576 = vmatprep.subr.mxu0 0.0
    %577 = vmatpush1.msra.mxu0 0.0
    %578 = vmatprep.subr.mxu0 0.0
    %579 = vmatpush1.msra.mxu0 0.0
    %580 = vmatprep.subr.mxu0 0.0
    %581 = vmatpush1.msra.mxu0 0.0
    %582 = vmatprep.subr.mxu0 0.0
    %583 = vmatpush1.msra.mxu0 0.0
    %584 = vmatprep.subr.mxu0 0.0
    %585 = vmatpush1.msra.mxu0 0.0
    %586 = vmatprep.subr.mxu0 0.0
    %587 = vmatpush1.msra.mxu0 0.0
    %588 = vmatprep.subr.mxu0 0.0
    %589 = vmatpush1.msra.mxu0 0.0
    %590 = vmatprep.subr.mxu0 0.0
    %591 = vmatpush1.msra.mxu0 0.0
    %592 = vmatprep.subr.mxu0 0.0
    %593 = vmatpush1.msra.mxu0 0.0
    %594 = vmatprep.subr.mxu0 0.0
    %595 = vmatpush1.msra.mxu0 0.0
    %596 = vmatprep.subr.mxu0 0.0
    %597 = vmatpush1.msra.mxu0 0.0
    %598 = vmatprep.subr.mxu0 0.0
    %599 = vmatpush1.msra.mxu0 0.0
    %600 = vmatprep.subr.mxu0 0.0
    %601 = vmatpush1.msra.mxu0 %v557
    %602 = vmatprep.subr.mxu0 0.0
    %603 = vmatpush1.msra.mxu0 %v556
    %604 = vmatprep.subr.mxu0 0.0
    %605 = vmatpush1.msra.mxu0 %v555
    %606 = vmatprep.subr.mxu0 0.0
    %607 = vmatpush1.msra.mxu0 %v554
    %608 = vmatprep.subr.mxu0 0.0
    %609 = vmatpush2.msra.mxu0 0.0
    %610 = vmatprep.subr.mxu0 0.0
    %611 = vmatpush2.msra.mxu0 0.0
    %612 = vmatprep.subr.mxu0 0.0
    %613 = vmatpush2.msra.mxu0 0.0
    %614 = vmatprep.subr.mxu0 0.0
    %615 = vmatpush2.msra.mxu0 0.0
    %616 = vmatprep.subr.mxu0 0.0
    %617 = vmatpush2.msra.mxu0 0.0
    %618 = vmatprep.subr.mxu0 0.0
    %619 = vmatpush2.msra.mxu0 0.0
    %620 = vmatprep.subr.mxu0 0.0
    %621 = vmatpush2.msra.mxu0 0.0
    %622 = vmatprep.subr.mxu0 0.0
    %623 = vmatpush2.msra.mxu0 0.0
    %624 = vmatprep.subr.mxu0 0.0
    %625 = vmatpush2.msra.mxu0 0.0
    %626 = vmatprep.subr.mxu0 0.0
    %627 = vmatpush2.msra.mxu0 0.0
    %628 = vmatprep.subr.mxu0 0.0
    %629 = vmatpush2.msra.mxu0 0.0
    %630 = vmatprep.subr.mxu0 0.0
    %631 = vmatpush2.msra.mxu0 0.0
    %632 = vmatprep.subr.mxu0 0.0
    %633 = vmatpush2.msra.mxu0 0.0
    %634 = vmatprep.subr.mxu0 0.0
    %635 = vmatpush2.msra.mxu0 0.0
    %636 = vmatprep.subr.mxu0 0.0
    %637 = vmatpush2.msra.mxu0 0.0
    %638 = vmatprep.subr.mxu0 0.0
    %639 = vmatpush2.msra.mxu0 0.0
    %640 = vmatprep.mubr.f32.mxu0 0.0
    %641 = vmatmul.mubr.f32.gmra.mxu0 %v574
    %v642 = vpop.f32.mrf.mxu0
    %v643 = vadd.f32 0.0, %v642
    %v644 = vpop.f32.mrf.mxu0
    %645 = vdwg.mxu0
    %646 = vmatprep.subr.mxu0 0.0
    %647 = vmatpush1.msra.mxu0 0.0
    %648 = vmatprep.subr.mxu0 0.0
    %649 = vmatpush1.msra.mxu0 0.0
    %650 = vmatprep.subr.mxu0 0.0
    %651 = vmatpush1.msra.mxu0 0.0
    %652 = vmatprep.subr.mxu0 0.0
    %653 = vmatpush1.msra.mxu0 0.0
    %654 = vmatprep.subr.mxu0 0.0
    %655 = vmatpush1.msra.mxu0 0.0
    %656 = vmatprep.subr.mxu0 0.0
    %657 = vmatpush1.msra.mxu0 0.0
    %658 = vmatprep.subr.mxu0 0.0
    %659 = vmatpush1.msra.mxu0 0.0
    %660 = vmatprep.subr.mxu0 0.0
    %661 = vmatpush1.msra.mxu0 0.0
    %662 = vmatprep.subr.mxu0 0.0
    %663 = vmatpush1.msra.mxu0 0.0
    %664 = vmatprep.subr.mxu0 0.0
    %665 = vmatpush1.msra.mxu0 0.0
    %666 = vmatprep.subr.mxu0 0.0
    %667 = vmatpush1.msra.mxu0 0.0
    %668 = vmatprep.subr.mxu0 0.0
    %669 = vmatpush1.msra.mxu0 0.0
    %670 = vmatprep.subr.mxu0 0.0
    %671 = vmatpush1.msra.mxu0 %v561
    %672 = vmatprep.subr.mxu0 0.0
    %673 = vmatpush1.msra.mxu0 %v560
    %674 = vmatprep.subr.mxu0 0.0
    %675 = vmatpush1.msra.mxu0 %v559
    %676 = vmatprep.subr.mxu0 0.0
    %677 = vmatpush1.msra.mxu0 %v558
    %678 = vmatprep.subr.mxu0 0.0
    %679 = vmatpush2.msra.mxu0 0.0
    %680 = vmatprep.subr.mxu0 0.0
    %681 = vmatpush2.msra.mxu0 0.0
    %682 = vmatprep.subr.mxu0 0.0
    %683 = vmatpush2.msra.mxu0 0.0
    %684 = vmatprep.subr.mxu0 0.0
    %685 = vmatpush2.msra.mxu0 0.0
    %686 = vmatprep.subr.mxu0 0.0
    %687 = vmatpush2.msra.mxu0 0.0
    %688 = vmatprep.subr.mxu0 0.0
    %689 = vmatpush2.msra.mxu0 0.0
    %690 = vmatprep.subr.mxu0 0.0
    %691 = vmatpush2.msra.mxu0 0.0
    %692 = vmatprep.subr.mxu0 0.0
    %693 = vmatpush2.msra.mxu0 0.0
    %694 = vmatprep.subr.mxu0 0.0
    %695 = vmatpush2.msra.mxu0 0.0
    %696 = vmatprep.subr.mxu0 0.0
    %697 = vmatpush2.msra.mxu0 0.0
    %698 = vmatprep.subr.mxu0 0.0
    %699 = vmatpush2.msra.mxu0 0.0
    %700 = vmatprep.subr.mxu0 0.0
    %701 = vmatpush2.msra.mxu0 0.0
    %702 = vmatprep.subr.mxu0 0.0
    %703 = vmatpush2.msra.mxu0 0.0
    %704 = vmatprep.subr.mxu0 0.0
    %705 = vmatpush2.msra.mxu0 0.0
    %706 = vmatprep.subr.mxu0 0.0
    %707 = vmatpush2.msra.mxu0 0.0
    %708 = vmatprep.subr.mxu0 0.0
    %709 = vmatpush2.msra.mxu0 0.0
    %710 = vmatprep.mubr.f32.mxu0 0.0
    %711 = vmatmul.mubr.f32.gmra.mxu0 %v574
    %v712 = vpop.f32.mrf.mxu0
    %v713 = vadd.f32 0.0, %v712
    %v714 = vpop.f32.mrf.mxu0
    %715 = vdwg.mxu0
    %v716 = vadd.f32 %v284, %v643
    %v717 = vxor.u32 %v716, 2147483648
    %v718 = vmul.f32 %v717, 1.442695
    %v719 = vpow.pop %v718
    %v720 = vadd.f32 %v719, 1.0
    %v721 = vrcp.pop %v720
    %v722 = vmul.f32 1.0, %v721
    %v723 = vadd.f32 %v400, %v713
    %v724 = vxor.u32 %v723, 2147483648
    %v725 = vmul.f32 %v724, 1.442695
    %v726 = vpow.pop %v725
    %v727 = vadd.f32 %v726, 1.0
    %v728 = vrcp.pop %v727
    %v729 = vmul.f32 1.0, %v728
    %730 = vmatprep.subr.mxu0 0.0
    %731 = vmatpush1.msra.mxu0 0.0
    %732 = vmatprep.subr.mxu0 0.0
    %733 = vmatpush1.msra.mxu0 0.0
    %734 = vmatprep.subr.mxu0 0.0
    %735 = vmatpush1.msra.mxu0 0.0
    %736 = vmatprep.subr.mxu0 0.0
    %737 = vmatpush1.msra.mxu0 0.0
    %738 = vmatprep.subr.mxu0 0.0
    %739 = vmatpush1.msra.mxu0 0.0
    %740 = vmatprep.subr.mxu0 0.0
    %741 = vmatpush1.msra.mxu0 0.0
    %742 = vmatprep.subr.mxu0 0.0
    %743 = vmatpush1.msra.mxu0 0.0
    %744 = vmatprep.subr.mxu0 0.0
    %745 = vmatpush1.msra.mxu0 0.0
    %746 = vmatprep.subr.mxu0 0.0
    %747 = vmatpush1.msra.mxu0 0.0
    %748 = vmatprep.subr.mxu0 0.0
    %749 = vmatpush1.msra.mxu0 0.0
    %750 = vmatprep.subr.mxu0 0.0
    %751 = vmatpush1.msra.mxu0 0.0
    %752 = vmatprep.subr.mxu0 0.0
    %753 = vmatpush1.msra.mxu0 0.0
    %754 = vmatprep.subr.mxu0 0.0
    %755 = vmatpush1.msra.mxu0 %v565
    %756 = vmatprep.subr.mxu0 0.0
    %757 = vmatpush1.msra.mxu0 %v564
    %758 = vmatprep.subr.mxu0 0.0
    %759 = vmatpush1.msra.mxu0 %v563
    %760 = vmatprep.subr.mxu0 0.0
    %761 = vmatpush1.msra.mxu0 %v562
    %762 = vmatprep.subr.mxu0 0.0
    %763 = vmatpush2.msra.mxu0 0.0
    %764 = vmatprep.subr.mxu0 0.0
    %765 = vmatpush2.msra.mxu0 0.0
    %766 = vmatprep.subr.mxu0 0.0
    %767 = vmatpush2.msra.mxu0 0.0
    %768 = vmatprep.subr.mxu0 0.0
    %769 = vmatpush2.msra.mxu0 0.0
    %770 = vmatprep.subr.mxu0 0.0
    %771 = vmatpush2.msra.mxu0 0.0
    %772 = vmatprep.subr.mxu0 0.0
    %773 = vmatpush2.msra.mxu0 0.0
    %774 = vmatprep.subr.mxu0 0.0
    %775 = vmatpush2.msra.mxu0 0.0
    %776 = vmatprep.subr.mxu0 0.0
    %777 = vmatpush2.msra.mxu0 0.0
    %778 = vmatprep.subr.mxu0 0.0
    %779 = vmatpush2.msra.mxu0 0.0
    %780 = vmatprep.subr.mxu0 0.0
    %781 = vmatpush2.msra.mxu0 0.0
    %782 = vmatprep.subr.mxu0 0.0
    %783 = vmatpush2.msra.mxu0 0.0
    %784 = vmatprep.subr.mxu0 0.0
    %785 = vmatpush2.msra.mxu0 0.0
    %786 = vmatprep.subr.mxu0 0.0
    %787 = vmatpush2.msra.mxu0 0.0
    %788 = vmatprep.subr.mxu0 0.0
    %789 = vmatpush2.msra.mxu0 0.0
    %790 = vmatprep.subr.mxu0 0.0
    %791 = vmatpush2.msra.mxu0 0.0
    %792 = vmatprep.subr.mxu0 0.0
    %793 = vmatpush2.msra.mxu0 0.0
    %794 = vmatprep.mubr.f32.mxu0 0.0
    %795 = vmatmul.mubr.f32.gmra.mxu0 %v574
    %v796 = vpop.f32.mrf.mxu0
    %v797 = vadd.f32 %v571, %v796
    %v798 = vpop.f32.mrf.mxu0
    %799 = vdwg.mxu0
    %v800 = vmul.f32 %v722, %v797
    %v801 = vadd.f32 %v516, %v800
    %v802 = vtanh.pop %v801
    %v803 = vsub.f32 1.0, %v729
    %v804 = vmul.f32 %v803, %v802
    %v805 = vmul.f32 %v729, 0.0
    %v806 = vadd.f32 %v804, %v805
    %v808 = vsel %vm192, %v806, 0
    %810 = vmatprep.subr.mxu0 0.0
    %811 = vmatpush1.msra.mxu0 0.0
    %812 = vmatprep.subr.mxu0 0.0
    %813 = vmatpush1.msra.mxu0 0.0
    %814 = vmatprep.subr.mxu0 0.0
    %815 = vmatpush1.msra.mxu0 0.0
    %816 = vmatprep.subr.mxu0 0.0
    %817 = vmatpush1.msra.mxu0 0.0
    %818 = vmatprep.subr.mxu0 0.0
    %819 = vmatpush1.msra.mxu0 0.0
    %820 = vmatprep.subr.mxu0 0.0
    %821 = vmatpush1.msra.mxu0 0.0
    %822 = vmatprep.subr.mxu0 0.0
    %823 = vmatpush1.msra.mxu0 0.0
    %824 = vmatprep.subr.mxu0 0.0
    %825 = vmatpush1.msra.mxu0 0.0
    %826 = vmatprep.subr.mxu0 0.0
    %827 = vmatpush1.msra.mxu0 0.0
    %828 = vmatprep.subr.mxu0 0.0
    %829 = vmatpush1.msra.mxu0 0.0
    %830 = vmatprep.subr.mxu0 0.0
    %831 = vmatpush1.msra.mxu0 0.0
    %832 = vmatprep.subr.mxu0 0.0
    %833 = vmatpush1.msra.mxu0 0.0
    %834 = vmatprep.subr.mxu0 0.0
    %835 = vmatpush1.msra.mxu0 %v557
    %836 = vmatprep.subr.mxu0 0.0
    %837 = vmatpush1.msra.mxu0 %v556
    %838 = vmatprep.subr.mxu0 0.0
    %839 = vmatpush1.msra.mxu0 %v555
    %840 = vmatprep.subr.mxu0 0.0
    %841 = vmatpush1.msra.mxu0 %v554
    %842 = vmatprep.subr.mxu0 0.0
    %843 = vmatpush2.msra.mxu0 0.0
    %844 = vmatprep.subr.mxu0 0.0
    %845 = vmatpush2.msra.mxu0 0.0
    %846 = vmatprep.subr.mxu0 0.0
    %847 = vmatpush2.msra.mxu0 0.0
    %848 = vmatprep.subr.mxu0 0.0
    %849 = vmatpush2.msra.mxu0 0.0
    %850 = vmatprep.subr.mxu0 0.0
    %851 = vmatpush2.msra.mxu0 0.0
    %852 = vmatprep.subr.mxu0 0.0
    %853 = vmatpush2.msra.mxu0 0.0
    %854 = vmatprep.subr.mxu0 0.0
    %855 = vmatpush2.msra.mxu0 0.0
    %856 = vmatprep.subr.mxu0 0.0
    %857 = vmatpush2.msra.mxu0 0.0
    %858 = vmatprep.subr.mxu0 0.0
    %859 = vmatpush2.msra.mxu0 0.0
    %860 = vmatprep.subr.mxu0 0.0
    %861 = vmatpush2.msra.mxu0 0.0
    %862 = vmatprep.subr.mxu0 0.0
    %863 = vmatpush2.msra.mxu0 0.0
    %864 = vmatprep.subr.mxu0 0.0
    %865 = vmatpush2.msra.mxu0 0.0
    %866 = vmatprep.subr.mxu0 0.0
    %867 = vmatpush2.msra.mxu0 0.0
    %868 = vmatprep.subr.mxu0 0.0
    %869 = vmatpush2.msra.mxu0 0.0
    %870 = vmatprep.subr.mxu0 0.0
    %871 = vmatpush2.msra.mxu0 0.0
    %872 = vmatprep.subr.mxu0 0.0
    %873 = vmatpush2.msra.mxu0 0.0
    %874 = vmatprep.mubr.f32.mxu0 0.0
    %875 = vmatmul.mubr.f32.gmra.mxu0 %v808
    %v876 = vpop.f32.mrf.mxu0
    %v877 = vadd.f32 0.0, %v876
    %v878 = vpop.f32.mrf.mxu0
    %879 = vdwg.mxu0
    %880 = vmatprep.subr.mxu0 0.0
    %881 = vmatpush1.msra.mxu0 0.0
    %882 = vmatprep.subr.mxu0 0.0
    %883 = vmatpush1.msra.mxu0 0.0
    %884 = vmatprep.subr.mxu0 0.0
    %885 = vmatpush1.msra.mxu0 0.0
    %886 = vmatprep.subr.mxu0 0.0
    %887 = vmatpush1.msra.mxu0 0.0
    %888 = vmatprep.subr.mxu0 0.0
    %889 = vmatpush1.msra.mxu0 0.0
    %890 = vmatprep.subr.mxu0 0.0
    %891 = vmatpush1.msra.mxu0 0.0
    %892 = vmatprep.subr.mxu0 0.0
    %893 = vmatpush1.msra.mxu0 0.0
    %894 = vmatprep.subr.mxu0 0.0
    %895 = vmatpush1.msra.mxu0 0.0
    %896 = vmatprep.subr.mxu0 0.0
    %897 = vmatpush1.msra.mxu0 0.0
    %898 = vmatprep.subr.mxu0 0.0
    %899 = vmatpush1.msra.mxu0 0.0
    %900 = vmatprep.subr.mxu0 0.0
    %901 = vmatpush1.msra.mxu0 0.0
    %902 = vmatprep.subr.mxu0 0.0
    %903 = vmatpush1.msra.mxu0 0.0
    %904 = vmatprep.subr.mxu0 0.0
    %905 = vmatpush1.msra.mxu0 %v561
    %906 = vmatprep.subr.mxu0 0.0
    %907 = vmatpush1.msra.mxu0 %v560
    %908 = vmatprep.subr.mxu0 0.0
    %909 = vmatpush1.msra.mxu0 %v559
    %910 = vmatprep.subr.mxu0 0.0
    %911 = vmatpush1.msra.mxu0 %v558
    %912 = vmatprep.subr.mxu0 0.0
    %913 = vmatpush2.msra.mxu0 0.0
    %914 = vmatprep.subr.mxu0 0.0
    %915 = vmatpush2.msra.mxu0 0.0
    %916 = vmatprep.subr.mxu0 0.0
    %917 = vmatpush2.msra.mxu0 0.0
    %918 = vmatprep.subr.mxu0 0.0
    %919 = vmatpush2.msra.mxu0 0.0
    %920 = vmatprep.subr.mxu0 0.0
    %921 = vmatpush2.msra.mxu0 0.0
    %922 = vmatprep.subr.mxu0 0.0
    %923 = vmatpush2.msra.mxu0 0.0
    %924 = vmatprep.subr.mxu0 0.0
    %925 = vmatpush2.msra.mxu0 0.0
    %926 = vmatprep.subr.mxu0 0.0
    %927 = vmatpush2.msra.mxu0 0.0
    %928 = vmatprep.subr.mxu0 0.0
    %929 = vmatpush2.msra.mxu0 0.0
    %930 = vmatprep.subr.mxu0 0.0
    %931 = vmatpush2.msra.mxu0 0.0
    %932 = vmatprep.subr.mxu0 0.0
    %933 = vmatpush2.msra.mxu0 0.0
    %934 = vmatprep.subr.mxu0 0.0
    %935 = vmatpush2.msra.mxu0 0.0
    %936 = vmatprep.subr.mxu0 0.0
    %937 = vmatpush2.msra.mxu0 0.0
    %938 = vmatprep.subr.mxu0 0.0
    %939 = vmatpush2.msra.mxu0 0.0
    %940 = vmatprep.subr.mxu0 0.0
    %941 = vmatpush2.msra.mxu0 0.0
    %942 = vmatprep.subr.mxu0 0.0
    %943 = vmatpush2.msra.mxu0 0.0
    %944 = vmatprep.mubr.f32.mxu0 0.0
    %945 = vmatmul.mubr.f32.gmra.mxu0 %v808
    %v946 = vpop.f32.mrf.mxu0
    %v947 = vadd.f32 0.0, %v946
    %v948 = vpop.f32.mrf.mxu0
    %949 = vdwg.mxu0
    %v950 = vadd.f32 %v289, %v877
    %v951 = vxor.u32 %v950, 2147483648
    %v952 = vmul.f32 %v951, 1.442695
    %v953 = vpow.pop %v952
    %v954 = vadd.f32 %v953, 1.0
    %v955 = vrcp.pop %v954
    %v956 = vmul.f32 1.0, %v955
    %v957 = vadd.f32 %v405, %v947
    %v958 = vxor.u32 %v957, 2147483648
    %v959 = vmul.f32 %v958, 1.442695
    %v960 = vpow.pop %v959
    %v961 = vadd.f32 %v960, 1.0
    %v962 = vrcp.pop %v961
    %v963 = vmul.f32 1.0, %v962
    %964 = vmatprep.subr.mxu0 0.0
    %965 = vmatpush1.msra.mxu0 0.0
    %966 = vmatprep.subr.mxu0 0.0
    %967 = vmatpush1.msra.mxu0 0.0
    %968 = vmatprep.subr.mxu0 0.0
    %969 = vmatpush1.msra.mxu0 0.0
    %970 = vmatprep.subr.mxu0 0.0
    %971 = vmatpush1.msra.mxu0 0.0
    %972 = vmatprep.subr.mxu0 0.0
    %973 = vmatpush1.msra.mxu0 0.0
    %974 = vmatprep.subr.mxu0 0.0
    %975 = vmatpush1.msra.mxu0 0.0
    %976 = vmatprep.subr.mxu0 0.0
    %977 = vmatpush1.msra.mxu0 0.0
    %978 = vmatprep.subr.mxu0 0.0
    %979 = vmatpush1.msra.mxu0 0.0
    %980 = vmatprep.subr.mxu0 0.0
    %981 = vmatpush1.msra.mxu0 0.0
    %982 = vmatprep.subr.mxu0 0.0
    %983 = vmatpush1.msra.mxu0 0.0
    %984 = vmatprep.subr.mxu0 0.0
    %985 = vmatpush1.msra.mxu0 0.0
    %986 = vmatprep.subr.mxu0 0.0
    %987 = vmatpush1.msra.mxu0 0.0
    %988 = vmatprep.subr.mxu0 0.0
    %989 = vmatpush1.msra.mxu0 %v565
    %990 = vmatprep.subr.mxu0 0.0
    %991 = vmatpush1.msra.mxu0 %v564
    %992 = vmatprep.subr.mxu0 0.0
    %993 = vmatpush1.msra.mxu0 %v563
    %994 = vmatprep.subr.mxu0 0.0
    %995 = vmatpush1.msra.mxu0 %v562
    %996 = vmatprep.subr.mxu0 0.0
    %997 = vmatpush2.msra.mxu0 0.0
    %998 = vmatprep.subr.mxu0 0.0
    %999 = vmatpush2.msra.mxu0 0.0
    %1000 = vmatprep.subr.mxu0 0.0
    %1001 = vmatpush2.msra.mxu0 0.0
    %1002 = vmatprep.subr.mxu0 0.0
    %1003 = vmatpush2.msra.mxu0 0.0
    %1004 = vmatprep.subr.mxu0 0.0
    %1005 = vmatpush2.msra.mxu0 0.0
    %1006 = vmatprep.subr.mxu0 0.0
    %1007 = vmatpush2.msra.mxu0 0.0
    %1008 = vmatprep.subr.mxu0 0.0
    %1009 = vmatpush2.msra.mxu0 0.0
    %1010 = vmatprep.subr.mxu0 0.0
    %1011 = vmatpush2.msra.mxu0 0.0
    %1012 = vmatprep.subr.mxu0 0.0
    %1013 = vmatpush2.msra.mxu0 0.0
    %1014 = vmatprep.subr.mxu0 0.0
    %1015 = vmatpush2.msra.mxu0 0.0
    %1016 = vmatprep.subr.mxu0 0.0
    %1017 = vmatpush2.msra.mxu0 0.0
    %1018 = vmatprep.subr.mxu0 0.0
    %1019 = vmatpush2.msra.mxu0 0.0
    %1020 = vmatprep.subr.mxu0 0.0
    %1021 = vmatpush2.msra.mxu0 0.0
    %1022 = vmatprep.subr.mxu0 0.0
    %1023 = vmatpush2.msra.mxu0 0.0
    %1024 = vmatprep.subr.mxu0 0.0
    %1025 = vmatpush2.msra.mxu0 0.0
    %1026 = vmatprep.subr.mxu0 0.0
    %1027 = vmatpush2.msra.mxu0 0.0
    %1028 = vmatprep.mubr.f32.mxu0 0.0
    %1029 = vmatmul.mubr.f32.gmra.mxu0 %v808
    %v1030 = vpop.f32.mrf.mxu0
    %v1031 = vadd.f32 %v571, %v1030
    %v1032 = vpop.f32.mrf.mxu0
    %1033 = vdwg.mxu0
    %v1034 = vmul.f32 %v956, %v1031
    %v1035 = vadd.f32 %v521, %v1034
    %v1036 = vtanh.pop %v1035
    %v1037 = vsub.f32 1.0, %v963
    %v1038 = vmul.f32 %v1037, %v1036
    %v1039 = vmul.f32 %v963, %v806
    %v1040 = vadd.f32 %v1038, %v1039
    %v1042 = vsel %vm192, %v1040, 0
    %1044 = vmatprep.subr.mxu0 0.0
    %1045 = vmatpush1.msra.mxu0 0.0
    %1046 = vmatprep.subr.mxu0 0.0
    %1047 = vmatpush1.msra.mxu0 0.0
    %1048 = vmatprep.subr.mxu0 0.0
    %1049 = vmatpush1.msra.mxu0 0.0
    %1050 = vmatprep.subr.mxu0 0.0
    %1051 = vmatpush1.msra.mxu0 0.0
    %1052 = vmatprep.subr.mxu0 0.0
    %1053 = vmatpush1.msra.mxu0 0.0
    %1054 = vmatprep.subr.mxu0 0.0
    %1055 = vmatpush1.msra.mxu0 0.0
    %1056 = vmatprep.subr.mxu0 0.0
    %1057 = vmatpush1.msra.mxu0 0.0
    %1058 = vmatprep.subr.mxu0 0.0
    %1059 = vmatpush1.msra.mxu0 0.0
    %1060 = vmatprep.subr.mxu0 0.0
    %1061 = vmatpush1.msra.mxu0 0.0
    %1062 = vmatprep.subr.mxu0 0.0
    %1063 = vmatpush1.msra.mxu0 0.0
    %1064 = vmatprep.subr.mxu0 0.0
    %1065 = vmatpush1.msra.mxu0 0.0
    %1066 = vmatprep.subr.mxu0 0.0
    %1067 = vmatpush1.msra.mxu0 0.0
    %1068 = vmatprep.subr.mxu0 0.0
    %1069 = vmatpush1.msra.mxu0 %v557
    %1070 = vmatprep.subr.mxu0 0.0
    %1071 = vmatpush1.msra.mxu0 %v556
    %1072 = vmatprep.subr.mxu0 0.0
    %1073 = vmatpush1.msra.mxu0 %v555
    %1074 = vmatprep.subr.mxu0 0.0
    %1075 = vmatpush1.msra.mxu0 %v554
    %1076 = vmatprep.subr.mxu0 0.0
    %1077 = vmatpush2.msra.mxu0 0.0
    %1078 = vmatprep.subr.mxu0 0.0
    %1079 = vmatpush2.msra.mxu0 0.0
    %1080 = vmatprep.subr.mxu0 0.0
    %1081 = vmatpush2.msra.mxu0 0.0
    %1082 = vmatprep.subr.mxu0 0.0
    %1083 = vmatpush2.msra.mxu0 0.0
    %1084 = vmatprep.subr.mxu0 0.0
    %1085 = vmatpush2.msra.mxu0 0.0
    %1086 = vmatprep.subr.mxu0 0.0
    %1087 = vmatpush2.msra.mxu0 0.0
    %1088 = vmatprep.subr.mxu0 0.0
    %1089 = vmatpush2.msra.mxu0 0.0
    %1090 = vmatprep.subr.mxu0 0.0
    %1091 = vmatpush2.msra.mxu0 0.0
    %1092 = vmatprep.subr.mxu0 0.0
    %1093 = vmatpush2.msra.mxu0 0.0
    %1094 = vmatprep.subr.mxu0 0.0
    %1095 = vmatpush2.msra.mxu0 0.0
    %1096 = vmatprep.subr.mxu0 0.0
    %1097 = vmatpush2.msra.mxu0 0.0
    %1098 = vmatprep.subr.mxu0 0.0
    %1099 = vmatpush2.msra.mxu0 0.0
    %1100 = vmatprep.subr.mxu0 0.0
    %1101 = vmatpush2.msra.mxu0 0.0
    %1102 = vmatprep.subr.mxu0 0.0
    %1103 = vmatpush2.msra.mxu0 0.0
    %1104 = vmatprep.subr.mxu0 0.0
    %1105 = vmatpush2.msra.mxu0 0.0
    %1106 = vmatprep.subr.mxu0 0.0
    %1107 = vmatpush2.msra.mxu0 0.0
    %1108 = vmatprep.mubr.f32.mxu0 0.0
    %1109 = vmatmul.mubr.f32.gmra.mxu0 %v1042
    %v1110 = vpop.f32.mrf.mxu0
    %v1111 = vadd.f32 0.0, %v1110
    %v1112 = vpop.f32.mrf.mxu0
    %1113 = vdwg.mxu0
    %1114 = vmatprep.subr.mxu0 0.0
    %1115 = vmatpush1.msra.mxu0 0.0
    %1116 = vmatprep.subr.mxu0 0.0
    %1117 = vmatpush1.msra.mxu0 0.0
    %1118 = vmatprep.subr.mxu0 0.0
    %1119 = vmatpush1.msra.mxu0 0.0
    %1120 = vmatprep.subr.mxu0 0.0
    %1121 = vmatpush1.msra.mxu0 0.0
    %1122 = vmatprep.subr.mxu0 0.0
    %1123 = vmatpush1.msra.mxu0 0.0
    %1124 = vmatprep.subr.mxu0 0.0
    %1125 = vmatpush1.msra.mxu0 0.0
    %1126 = vmatprep.subr.mxu0 0.0
    %1127 = vmatpush1.msra.mxu0 0.0
    %1128 = vmatprep.subr.mxu0 0.0
    %1129 = vmatpush1.msra.mxu0 0.0
    %1130 = vmatprep.subr.mxu0 0.0
    %1131 = vmatpush1.msra.mxu0 0.0
    %1132 = vmatprep.subr.mxu0 0.0
    %1133 = vmatpush1.msra.mxu0 0.0
    %1134 = vmatprep.subr.mxu0 0.0
    %1135 = vmatpush1.msra.mxu0 0.0
    %1136 = vmatprep.subr.mxu0 0.0
    %1137 = vmatpush1.msra.mxu0 0.0
    %1138 = vmatprep.subr.mxu0 0.0
    %1139 = vmatpush1.msra.mxu0 %v561
    %1140 = vmatprep.subr.mxu0 0.0
    %1141 = vmatpush1.msra.mxu0 %v560
    %1142 = vmatprep.subr.mxu0 0.0
    %1143 = vmatpush1.msra.mxu0 %v559
    %1144 = vmatprep.subr.mxu0 0.0
    %1145 = vmatpush1.msra.mxu0 %v558
    %1146 = vmatprep.subr.mxu0 0.0
    %1147 = vmatpush2.msra.mxu0 0.0
    %1148 = vmatprep.subr.mxu0 0.0
    %1149 = vmatpush2.msra.mxu0 0.0
    %1150 = vmatprep.subr.mxu0 0.0
    %1151 = vmatpush2.msra.mxu0 0.0
    %1152 = vmatprep.subr.mxu0 0.0
    %1153 = vmatpush2.msra.mxu0 0.0
    %1154 = vmatprep.subr.mxu0 0.0
    %1155 = vmatpush2.msra.mxu0 0.0
    %1156 = vmatprep.subr.mxu0 0.0
    %1157 = vmatpush2.msra.mxu0 0.0
    %1158 = vmatprep.subr.mxu0 0.0
    %1159 = vmatpush2.msra.mxu0 0.0
    %1160 = vmatprep.subr.mxu0 0.0
    %1161 = vmatpush2.msra.mxu0 0.0
    %1162 = vmatprep.subr.mxu0 0.0
    %1163 = vmatpush2.msra.mxu0 0.0
    %1164 = vmatprep.subr.mxu0 0.0
    %1165 = vmatpush2.msra.mxu0 0.0
    %1166 = vmatprep.subr.mxu0 0.0
    %1167 = vmatpush2.msra.mxu0 0.0
    %1168 = vmatprep.subr.mxu0 0.0
    %1169 = vmatpush2.msra.mxu0 0.0
    %1170 = vmatprep.subr.mxu0 0.0
    %1171 = vmatpush2.msra.mxu0 0.0
    %1172 = vmatprep.subr.mxu0 0.0
    %1173 = vmatpush2.msra.mxu0 0.0
    %1174 = vmatprep.subr.mxu0 0.0
    %1175 = vmatpush2.msra.mxu0 0.0
    %1176 = vmatprep.subr.mxu0 0.0
    %1177 = vmatpush2.msra.mxu0 0.0
    %1178 = vmatprep.mubr.f32.mxu0 0.0
    %1179 = vmatmul.mubr.f32.gmra.mxu0 %v1042
    %v1180 = vpop.f32.mrf.mxu0
    %v1181 = vadd.f32 0.0, %v1180
    %v1182 = vpop.f32.mrf.mxu0
    %1183 = vdwg.mxu0
    %v1184 = vadd.f32 %v294, %v1111
    %v1185 = vxor.u32 %v1184, 2147483648
    %v1186 = vmul.f32 %v1185, 1.442695
    %v1187 = vpow.pop %v1186
    %v1188 = vadd.f32 %v1187, 1.0
    %v1189 = vrcp.pop %v1188
    %v1190 = vmul.f32 1.0, %v1189
    %v1191 = vadd.f32 %v410, %v1181
    %v1192 = vxor.u32 %v1191, 2147483648
    %v1193 = vmul.f32 %v1192, 1.442695
    %v1194 = vpow.pop %v1193
    %v1195 = vadd.f32 %v1194, 1.0
    %v1196 = vrcp.pop %v1195
    %v1197 = vmul.f32 1.0, %v1196
    %1198 = vmatprep.subr.mxu0 0.0
    %1199 = vmatpush1.msra.mxu0 0.0
    %1200 = vmatprep.subr.mxu0 0.0
    %1201 = vmatpush1.msra.mxu0 0.0
    %1202 = vmatprep.subr.mxu0 0.0
    %1203 = vmatpush1.msra.mxu0 0.0
    %1204 = vmatprep.subr.mxu0 0.0
    %1205 = vmatpush1.msra.mxu0 0.0
    %1206 = vmatprep.subr.mxu0 0.0
    %1207 = vmatpush1.msra.mxu0 0.0
    %1208 = vmatprep.subr.mxu0 0.0
    %1209 = vmatpush1.msra.mxu0 0.0
    %1210 = vmatprep.subr.mxu0 0.0
    %1211 = vmatpush1.msra.mxu0 0.0
    %1212 = vmatprep.subr.mxu0 0.0
    %1213 = vmatpush1.msra.mxu0 0.0
    %1214 = vmatprep.subr.mxu0 0.0
    %1215 = vmatpush1.msra.mxu0 0.0
    %1216 = vmatprep.subr.mxu0 0.0
    %1217 = vmatpush1.msra.mxu0 0.0
    %1218 = vmatprep.subr.mxu0 0.0
    %1219 = vmatpush1.msra.mxu0 0.0
    %1220 = vmatprep.subr.mxu0 0.0
    %1221 = vmatpush1.msra.mxu0 0.0
    %1222 = vmatprep.subr.mxu0 0.0
    %1223 = vmatpush1.msra.mxu0 %v565
    %1224 = vmatprep.subr.mxu0 0.0
    %1225 = vmatpush1.msra.mxu0 %v564
    %1226 = vmatprep.subr.mxu0 0.0
    %1227 = vmatpush1.msra.mxu0 %v563
    %1228 = vmatprep.subr.mxu0 0.0
    %1229 = vmatpush1.msra.mxu0 %v562
    %1230 = vmatprep.subr.mxu0 0.0
    %1231 = vmatpush2.msra.mxu0 0.0
    %1232 = vmatprep.subr.mxu0 0.0
    %1233 = vmatpush2.msra.mxu0 0.0
    %1234 = vmatprep.subr.mxu0 0.0
    %1235 = vmatpush2.msra.mxu0 0.0
    %1236 = vmatprep.subr.mxu0 0.0
    %1237 = vmatpush2.msra.mxu0 0.0
    %1238 = vmatprep.subr.mxu0 0.0
    %1239 = vmatpush2.msra.mxu0 0.0
    %1240 = vmatprep.subr.mxu0 0.0
    %1241 = vmatpush2.msra.mxu0 0.0
    %1242 = vmatprep.subr.mxu0 0.0
    %1243 = vmatpush2.msra.mxu0 0.0
    %1244 = vmatprep.subr.mxu0 0.0
    %1245 = vmatpush2.msra.mxu0 0.0
    %1246 = vmatprep.subr.mxu0 0.0
    %1247 = vmatpush2.msra.mxu0 0.0
    %1248 = vmatprep.subr.mxu0 0.0
    %1249 = vmatpush2.msra.mxu0 0.0
    %1250 = vmatprep.subr.mxu0 0.0
    %1251 = vmatpush2.msra.mxu0 0.0
    %1252 = vmatprep.subr.mxu0 0.0
    %1253 = vmatpush2.msra.mxu0 0.0
    %1254 = vmatprep.subr.mxu0 0.0
    %1255 = vmatpush2.msra.mxu0 0.0
    %1256 = vmatprep.subr.mxu0 0.0
    %1257 = vmatpush2.msra.mxu0 0.0
    %1258 = vmatprep.subr.mxu0 0.0
    %1259 = vmatpush2.msra.mxu0 0.0
    %1260 = vmatprep.subr.mxu0 0.0
    %1261 = vmatpush2.msra.mxu0 0.0
    %1262 = vmatprep.mubr.f32.mxu0 0.0
    %1263 = vmatmul.mubr.f32.gmra.mxu0 %v1042
    %v1264 = vpop.f32.mrf.mxu0
    %v1265 = vadd.f32 %v571, %v1264
    %v1266 = vpop.f32.mrf.mxu0
    %1267 = vdwg.mxu0
    %v1268 = vmul.f32 %v1190, %v1265
    %v1269 = vadd.f32 %v526, %v1268
    %v1270 = vtanh.pop %v1269
    %v1271 = vsub.f32 1.0, %v1197
    %v1272 = vmul.f32 %v1271, %v1270
    %v1273 = vmul.f32 %v1197, %v1040
    %v1274 = vadd.f32 %v1272, %v1273
    %v1276 = vsel %vm192, %v1274, 0
    %1278 = vmatprep.subr.mxu0 0.0
    %1279 = vmatpush1.msra.mxu0 0.0
    %1280 = vmatprep.subr.mxu0 0.0
    %1281 = vmatpush1.msra.mxu0 0.0
    %1282 = vmatprep.subr.mxu0 0.0
    %1283 = vmatpush1.msra.mxu0 0.0
    %1284 = vmatprep.subr.mxu0 0.0
    %1285 = vmatpush1.msra.mxu0 0.0
    %1286 = vmatprep.subr.mxu0 0.0
    %1287 = vmatpush1.msra.mxu0 0.0
    %1288 = vmatprep.subr.mxu0 0.0
    %1289 = vmatpush1.msra.mxu0 0.0
    %1290 = vmatprep.subr.mxu0 0.0
    %1291 = vmatpush1.msra.mxu0 0.0
    %1292 = vmatprep.subr.mxu0 0.0
    %1293 = vmatpush1.msra.mxu0 0.0
    %1294 = vmatprep.subr.mxu0 0.0
    %1295 = vmatpush1.msra.mxu0 0.0
    %1296 = vmatprep.subr.mxu0 0.0
    %1297 = vmatpush1.msra.mxu0 0.0
    %1298 = vmatprep.subr.mxu0 0.0
    %1299 = vmatpush1.msra.mxu0 0.0
    %1300 = vmatprep.subr.mxu0 0.0
    %1301 = vmatpush1.msra.mxu0 0.0
    %1302 = vmatprep.subr.mxu0 0.0
    %1303 = vmatpush1.msra.mxu0 %v557
    %1304 = vmatprep.subr.mxu0 0.0
    %1305 = vmatpush1.msra.mxu0 %v556
    %1306 = vmatprep.subr.mxu0 0.0
    %1307 = vmatpush1.msra.mxu0 %v555
    %1308 = vmatprep.subr.mxu0 0.0
    %1309 = vmatpush1.msra.mxu0 %v554
    %1310 = vmatprep.subr.mxu0 0.0
    %1311 = vmatpush2.msra.mxu0 0.0
    %1312 = vmatprep.subr.mxu0 0.0
    %1313 = vmatpush2.msra.mxu0 0.0
    %1314 = vmatprep.subr.mxu0 0.0
    %1315 = vmatpush2.msra.mxu0 0.0
    %1316 = vmatprep.subr.mxu0 0.0
    %1317 = vmatpush2.msra.mxu0 0.0
    %1318 = vmatprep.subr.mxu0 0.0
    %1319 = vmatpush2.msra.mxu0 0.0
    %1320 = vmatprep.subr.mxu0 0.0
    %1321 = vmatpush2.msra.mxu0 0.0
    %1322 = vmatprep.subr.mxu0 0.0
    %1323 = vmatpush2.msra.mxu0 0.0
    %1324 = vmatprep.subr.mxu0 0.0
    %1325 = vmatpush2.msra.mxu0 0.0
    %1326 = vmatprep.subr.mxu0 0.0
    %1327 = vmatpush2.msra.mxu0 0.0
    %1328 = vmatprep.subr.mxu0 0.0
    %1329 = vmatpush2.msra.mxu0 0.0
    %1330 = vmatprep.subr.mxu0 0.0
    %1331 = vmatpush2.msra.mxu0 0.0
    %1332 = vmatprep.subr.mxu0 0.0
    %1333 = vmatpush2.msra.mxu0 0.0
    %1334 = vmatprep.subr.mxu0 0.0
    %1335 = vmatpush2.msra.mxu0 0.0
    %1336 = vmatprep.subr.mxu0 0.0
    %1337 = vmatpush2.msra.mxu0 0.0
    %1338 = vmatprep.subr.mxu0 0.0
    %1339 = vmatpush2.msra.mxu0 0.0
    %1340 = vmatprep.subr.mxu0 0.0
    %1341 = vmatpush2.msra.mxu0 0.0
    %1342 = vmatprep.mubr.f32.mxu0 0.0
    %1343 = vmatmul.mubr.f32.gmra.mxu0 %v1276
    %v1344 = vpop.f32.mrf.mxu0
    %v1345 = vadd.f32 0.0, %v1344
    %v1346 = vpop.f32.mrf.mxu0
    %1347 = vdwg.mxu0
    %1348 = vmatprep.subr.mxu0 0.0
    %1349 = vmatpush1.msra.mxu0 0.0
    %1350 = vmatprep.subr.mxu0 0.0
    %1351 = vmatpush1.msra.mxu0 0.0
    %1352 = vmatprep.subr.mxu0 0.0
    %1353 = vmatpush1.msra.mxu0 0.0
    %1354 = vmatprep.subr.mxu0 0.0
    %1355 = vmatpush1.msra.mxu0 0.0
    %1356 = vmatprep.subr.mxu0 0.0
    %1357 = vmatpush1.msra.mxu0 0.0
    %1358 = vmatprep.subr.mxu0 0.0
    %1359 = vmatpush1.msra.mxu0 0.0
    %1360 = vmatprep.subr.mxu0 0.0
    %1361 = vmatpush1.msra.mxu0 0.0
    %1362 = vmatprep.subr.mxu0 0.0
    %1363 = vmatpush1.msra.mxu0 0.0
    %1364 = vmatprep.subr.mxu0 0.0
    %1365 = vmatpush1.msra.mxu0 0.0
    %1366 = vmatprep.subr.mxu0 0.0
    %1367 = vmatpush1.msra.mxu0 0.0
    %1368 = vmatprep.subr.mxu0 0.0
    %1369 = vmatpush1.msra.mxu0 0.0
    %1370 = vmatprep.subr.mxu0 0.0
    %1371 = vmatpush1.msra.mxu0 0.0
    %1372 = vmatprep.subr.mxu0 0.0
    %1373 = vmatpush1.msra.mxu0 %v561
    %1374 = vmatprep.subr.mxu0 0.0
    %1375 = vmatpush1.msra.mxu0 %v560
    %1376 = vmatprep.subr.mxu0 0.0
    %1377 = vmatpush1.msra.mxu0 %v559
    %1378 = vmatprep.subr.mxu0 0.0
    %1379 = vmatpush1.msra.mxu0 %v558
    %1380 = vmatprep.subr.mxu0 0.0
    %1381 = vmatpush2.msra.mxu0 0.0
    %1382 = vmatprep.subr.mxu0 0.0
    %1383 = vmatpush2.msra.mxu0 0.0
    %1384 = vmatprep.subr.mxu0 0.0
    %1385 = vmatpush2.msra.mxu0 0.0
    %1386 = vmatprep.subr.mxu0 0.0
    %1387 = vmatpush2.msra.mxu0 0.0
    %1388 = vmatprep.subr.mxu0 0.0
    %1389 = vmatpush2.msra.mxu0 0.0
    %1390 = vmatprep.subr.mxu0 0.0
    %1391 = vmatpush2.msra.mxu0 0.0
    %1392 = vmatprep.subr.mxu0 0.0
    %1393 = vmatpush2.msra.mxu0 0.0
    %1394 = vmatprep.subr.mxu0 0.0
    %1395 = vmatpush2.msra.mxu0 0.0
    %1396 = vmatprep.subr.mxu0 0.0
    %1397 = vmatpush2.msra.mxu0 0.0
    %1398 = vmatprep.subr.mxu0 0.0
    %1399 = vmatpush2.msra.mxu0 0.0
    %1400 = vmatprep.subr.mxu0 0.0
    %1401 = vmatpush2.msra.mxu0 0.0
    %1402 = vmatprep.subr.mxu0 0.0
    %1403 = vmatpush2.msra.mxu0 0.0
    %1404 = vmatprep.subr.mxu0 0.0
    %1405 = vmatpush2.msra.mxu0 0.0
    %1406 = vmatprep.subr.mxu0 0.0
    %1407 = vmatpush2.msra.mxu0 0.0
    %1408 = vmatprep.subr.mxu0 0.0
    %1409 = vmatpush2.msra.mxu0 0.0
    %1410 = vmatprep.subr.mxu0 0.0
    %1411 = vmatpush2.msra.mxu0 0.0
    %1412 = vmatprep.mubr.f32.mxu0 0.0
    %1413 = vmatmul.mubr.f32.gmra.mxu0 %v1276
    %v1414 = vpop.f32.mrf.mxu0
    %v1415 = vadd.f32 0.0, %v1414
    %v1416 = vpop.f32.mrf.mxu0
    %1417 = vdwg.mxu0
    %v1418 = vadd.f32 %v299, %v1345
    %v1419 = vxor.u32 %v1418, 2147483648
    %v1420 = vmul.f32 %v1419, 1.442695
    %v1421 = vpow.pop %v1420
    %v1422 = vadd.f32 %v1421, 1.0
    %v1423 = vrcp.pop %v1422
    %v1424 = vmul.f32 1.0, %v1423
    %v1425 = vadd.f32 %v415, %v1415
    %v1426 = vxor.u32 %v1425, 2147483648
    %v1427 = vmul.f32 %v1426, 1.442695
    %v1428 = vpow.pop %v1427
    %v1429 = vadd.f32 %v1428, 1.0
    %v1430 = vrcp.pop %v1429
    %v1431 = vmul.f32 1.0, %v1430
    %1432 = vmatprep.subr.mxu0 0.0
    %1433 = vmatpush1.msra.mxu0 0.0
    %1434 = vmatprep.subr.mxu0 0.0
    %1435 = vmatpush1.msra.mxu0 0.0
    %1436 = vmatprep.subr.mxu0 0.0
    %1437 = vmatpush1.msra.mxu0 0.0
    %1438 = vmatprep.subr.mxu0 0.0
    %1439 = vmatpush1.msra.mxu0 0.0
    %1440 = vmatprep.subr.mxu0 0.0
    %1441 = vmatpush1.msra.mxu0 0.0
    %1442 = vmatprep.subr.mxu0 0.0
    %1443 = vmatpush1.msra.mxu0 0.0
    %1444 = vmatprep.subr.mxu0 0.0
    %1445 = vmatpush1.msra.mxu0 0.0
    %1446 = vmatprep.subr.mxu0 0.0
    %1447 = vmatpush1.msra.mxu0 0.0
    %1448 = vmatprep.subr.mxu0 0.0
    %1449 = vmatpush1.msra.mxu0 0.0
    %1450 = vmatprep.subr.mxu0 0.0
    %1451 = vmatpush1.msra.mxu0 0.0
    %1452 = vmatprep.subr.mxu0 0.0
    %1453 = vmatpush1.msra.mxu0 0.0
    %1454 = vmatprep.subr.mxu0 0.0
    %1455 = vmatpush1.msra.mxu0 0.0
    %1456 = vmatprep.subr.mxu0 0.0
    %1457 = vmatpush1.msra.mxu0 %v565
    %1458 = vmatprep.subr.mxu0 0.0
    %1459 = vmatpush1.msra.mxu0 %v564
    %1460 = vmatprep.subr.mxu0 0.0
    %1461 = vmatpush1.msra.mxu0 %v563
    %1462 = vmatprep.subr.mxu0 0.0
    %1463 = vmatpush1.msra.mxu0 %v562
    %1464 = vmatprep.subr.mxu0 0.0
    %1465 = vmatpush2.msra.mxu0 0.0
    %1466 = vmatprep.subr.mxu0 0.0
    %1467 = vmatpush2.msra.mxu0 0.0
    %1468 = vmatprep.subr.mxu0 0.0
    %1469 = vmatpush2.msra.mxu0 0.0
    %1470 = vmatprep.subr.mxu0 0.0
    %1471 = vmatpush2.msra.mxu0 0.0
    %1472 = vmatprep.subr.mxu0 0.0
    %1473 = vmatpush2.msra.mxu0 0.0
    %1474 = vmatprep.subr.mxu0 0.0
    %1475 = vmatpush2.msra.mxu0 0.0
    %1476 = vmatprep.subr.mxu0 0.0
    %1477 = vmatpush2.msra.mxu0 0.0
    %1478 = vmatprep.subr.mxu0 0.0
    %1479 = vmatpush2.msra.mxu0 0.0
    %1480 = vmatprep.subr.mxu0 0.0
    %1481 = vmatpush2.msra.mxu0 0.0
    %1482 = vmatprep.subr.mxu0 0.0
    %1483 = vmatpush2.msra.mxu0 0.0
    %1484 = vmatprep.subr.mxu0 0.0
    %1485 = vmatpush2.msra.mxu0 0.0
    %1486 = vmatprep.subr.mxu0 0.0
    %1487 = vmatpush2.msra.mxu0 0.0
    %1488 = vmatprep.subr.mxu0 0.0
    %1489 = vmatpush2.msra.mxu0 0.0
    %1490 = vmatprep.subr.mxu0 0.0
    %1491 = vmatpush2.msra.mxu0 0.0
    %1492 = vmatprep.subr.mxu0 0.0
    %1493 = vmatpush2.msra.mxu0 0.0
    %1494 = vmatprep.subr.mxu0 0.0
    %1495 = vmatpush2.msra.mxu0 0.0
    %1496 = vmatprep.mubr.f32.mxu0 0.0
    %1497 = vmatmul.mubr.f32.gmra.mxu0 %v1276
    %v1498 = vpop.f32.mrf.mxu0
    %v1499 = vadd.f32 %v571, %v1498
    %v1500 = vpop.f32.mrf.mxu0
    %1501 = vdwg.mxu0
    %v1502 = vmul.f32 %v1424, %v1499
    %v1503 = vadd.f32 %v531, %v1502
    %v1504 = vtanh.pop %v1503
    %v1505 = vsub.f32 1.0, %v1431
    %v1506 = vmul.f32 %v1505, %v1504
    %v1507 = vmul.f32 %v1431, %v1274
    %v1508 = vadd.f32 %v1506, %v1507
    %v1510 = vsel %vm192, %v1508, 0
    %1512 = vmatprep.subr.mxu0 0.0
    %1513 = vmatpush1.msra.mxu0 0.0
    %1514 = vmatprep.subr.mxu0 0.0
    %1515 = vmatpush1.msra.mxu0 0.0
    %1516 = vmatprep.subr.mxu0 0.0
    %1517 = vmatpush1.msra.mxu0 0.0
    %1518 = vmatprep.subr.mxu0 0.0
    %1519 = vmatpush1.msra.mxu0 0.0
    %1520 = vmatprep.subr.mxu0 0.0
    %1521 = vmatpush1.msra.mxu0 0.0
    %1522 = vmatprep.subr.mxu0 0.0
    %1523 = vmatpush1.msra.mxu0 0.0
    %1524 = vmatprep.subr.mxu0 0.0
    %1525 = vmatpush1.msra.mxu0 0.0
    %1526 = vmatprep.subr.mxu0 0.0
    %1527 = vmatpush1.msra.mxu0 0.0
    %1528 = vmatprep.subr.mxu0 0.0
    %1529 = vmatpush1.msra.mxu0 0.0
    %1530 = vmatprep.subr.mxu0 0.0
    %1531 = vmatpush1.msra.mxu0 0.0
    %1532 = vmatprep.subr.mxu0 0.0
    %1533 = vmatpush1.msra.mxu0 0.0
    %1534 = vmatprep.subr.mxu0 0.0
    %1535 = vmatpush1.msra.mxu0 0.0
    %1536 = vmatprep.subr.mxu0 0.0
    %1537 = vmatpush1.msra.mxu0 %v557
    %1538 = vmatprep.subr.mxu0 0.0
    %1539 = vmatpush1.msra.mxu0 %v556
    %1540 = vmatprep.subr.mxu0 0.0
    %1541 = vmatpush1.msra.mxu0 %v555
    %1542 = vmatprep.subr.mxu0 0.0
    %1543 = vmatpush1.msra.mxu0 %v554
    %1544 = vmatprep.subr.mxu0 0.0
    %1545 = vmatpush2.msra.mxu0 0.0
    %1546 = vmatprep.subr.mxu0 0.0
    %1547 = vmatpush2.msra.mxu0 0.0
    %1548 = vmatprep.subr.mxu0 0.0
    %1549 = vmatpush2.msra.mxu0 0.0
    %1550 = vmatprep.subr.mxu0 0.0
    %1551 = vmatpush2.msra.mxu0 0.0
    %1552 = vmatprep.subr.mxu0 0.0
    %1553 = vmatpush2.msra.mxu0 0.0
    %1554 = vmatprep.subr.mxu0 0.0
    %1555 = vmatpush2.msra.mxu0 0.0
    %1556 = vmatprep.subr.mxu0 0.0
    %1557 = vmatpush2.msra.mxu0 0.0
    %1558 = vmatprep.subr.mxu0 0.0
    %1559 = vmatpush2.msra.mxu0 0.0
    %1560 = vmatprep.subr.mxu0 0.0
    %1561 = vmatpush2.msra.mxu0 0.0
    %1562 = vmatprep.subr.mxu0 0.0
    %1563 = vmatpush2.msra.mxu0 0.0
    %1564 = vmatprep.subr.mxu0 0.0
    %1565 = vmatpush2.msra.mxu0 0.0
    %1566 = vmatprep.subr.mxu0 0.0
    %1567 = vmatpush2.msra.mxu0 0.0
    %1568 = vmatprep.subr.mxu0 0.0
    %1569 = vmatpush2.msra.mxu0 0.0
    %1570 = vmatprep.subr.mxu0 0.0
    %1571 = vmatpush2.msra.mxu0 0.0
    %1572 = vmatprep.subr.mxu0 0.0
    %1573 = vmatpush2.msra.mxu0 0.0
    %1574 = vmatprep.subr.mxu0 0.0
    %1575 = vmatpush2.msra.mxu0 0.0
    %1576 = vmatprep.mubr.f32.mxu0 0.0
    %1577 = vmatmul.mubr.f32.gmra.mxu0 %v1510
    %v1578 = vpop.f32.mrf.mxu0
    %v1579 = vadd.f32 0.0, %v1578
    %v1580 = vpop.f32.mrf.mxu0
    %1581 = vdwg.mxu0
    %1582 = vmatprep.subr.mxu0 0.0
    %1583 = vmatpush1.msra.mxu0 0.0
    %1584 = vmatprep.subr.mxu0 0.0
    %1585 = vmatpush1.msra.mxu0 0.0
    %1586 = vmatprep.subr.mxu0 0.0
    %1587 = vmatpush1.msra.mxu0 0.0
    %1588 = vmatprep.subr.mxu0 0.0
    %1589 = vmatpush1.msra.mxu0 0.0
    %1590 = vmatprep.subr.mxu0 0.0
    %1591 = vmatpush1.msra.mxu0 0.0
    %1592 = vmatprep.subr.mxu0 0.0
    %1593 = vmatpush1.msra.mxu0 0.0
    %1594 = vmatprep.subr.mxu0 0.0
    %1595 = vmatpush1.msra.mxu0 0.0
    %1596 = vmatprep.subr.mxu0 0.0
    %1597 = vmatpush1.msra.mxu0 0.0
    %1598 = vmatprep.subr.mxu0 0.0
    %1599 = vmatpush1.msra.mxu0 0.0
    %1600 = vmatprep.subr.mxu0 0.0
    %1601 = vmatpush1.msra.mxu0 0.0
    %1602 = vmatprep.subr.mxu0 0.0
    %1603 = vmatpush1.msra.mxu0 0.0
    %1604 = vmatprep.subr.mxu0 0.0
    %1605 = vmatpush1.msra.mxu0 0.0
    %1606 = vmatprep.subr.mxu0 0.0
    %1607 = vmatpush1.msra.mxu0 %v561
    %1608 = vmatprep.subr.mxu0 0.0
    %1609 = vmatpush1.msra.mxu0 %v560
    %1610 = vmatprep.subr.mxu0 0.0
    %1611 = vmatpush1.msra.mxu0 %v559
    %1612 = vmatprep.subr.mxu0 0.0
    %1613 = vmatpush1.msra.mxu0 %v558
    %1614 = vmatprep.subr.mxu0 0.0
    %1615 = vmatpush2.msra.mxu0 0.0
    %1616 = vmatprep.subr.mxu0 0.0
    %1617 = vmatpush2.msra.mxu0 0.0
    %1618 = vmatprep.subr.mxu0 0.0
    %1619 = vmatpush2.msra.mxu0 0.0
    %1620 = vmatprep.subr.mxu0 0.0
    %1621 = vmatpush2.msra.mxu0 0.0
    %1622 = vmatprep.subr.mxu0 0.0
    %1623 = vmatpush2.msra.mxu0 0.0
    %1624 = vmatprep.subr.mxu0 0.0
    %1625 = vmatpush2.msra.mxu0 0.0
    %1626 = vmatprep.subr.mxu0 0.0
    %1627 = vmatpush2.msra.mxu0 0.0
    %1628 = vmatprep.subr.mxu0 0.0
    %1629 = vmatpush2.msra.mxu0 0.0
    %1630 = vmatprep.subr.mxu0 0.0
    %1631 = vmatpush2.msra.mxu0 0.0
    %1632 = vmatprep.subr.mxu0 0.0
    %1633 = vmatpush2.msra.mxu0 0.0
    %1634 = vmatprep.subr.mxu0 0.0
    %1635 = vmatpush2.msra.mxu0 0.0
    %1636 = vmatprep.subr.mxu0 0.0
    %1637 = vmatpush2.msra.mxu0 0.0
    %1638 = vmatprep.subr.mxu0 0.0
    %1639 = vmatpush2.msra.mxu0 0.0
    %1640 = vmatprep.subr.mxu0 0.0
    %1641 = vmatpush2.msra.mxu0 0.0
    %1642 = vmatprep.subr.mxu0 0.0
    %1643 = vmatpush2.msra.mxu0 0.0
    %1644 = vmatprep.subr.mxu0 0.0
    %1645 = vmatpush2.msra.mxu0 0.0
    %1646 = vmatprep.mubr.f32.mxu0 0.0
    %1647 = vmatmul.mubr.f32.gmra.mxu0 %v1510
    %v1648 = vpop.f32.mrf.mxu0
    %v1649 = vadd.f32 0.0, %v1648
    %v1650 = vpop.f32.mrf.mxu0
    %1651 = vdwg.mxu0
    %v1652 = vadd.f32 %v304, %v1579
    %v1653 = vxor.u32 %v1652, 2147483648
    %v1654 = vmul.f32 %v1653, 1.442695
    %v1655 = vpow.pop %v1654
    %v1656 = vadd.f32 %v1655, 1.0
    %v1657 = vrcp.pop %v1656
    %v1658 = vmul.f32 1.0, %v1657
    %v1659 = vadd.f32 %v420, %v1649
    %v1660 = vxor.u32 %v1659, 2147483648
    %v1661 = vmul.f32 %v1660, 1.442695
    %v1662 = vpow.pop %v1661
    %v1663 = vadd.f32 %v1662, 1.0
    %v1664 = vrcp.pop %v1663
    %v1665 = vmul.f32 1.0, %v1664
    %1666 = vmatprep.subr.mxu0 0.0
    %1667 = vmatpush1.msra.mxu0 0.0
    %1668 = vmatprep.subr.mxu0 0.0
    %1669 = vmatpush1.msra.mxu0 0.0
    %1670 = vmatprep.subr.mxu0 0.0
    %1671 = vmatpush1.msra.mxu0 0.0
    %1672 = vmatprep.subr.mxu0 0.0
    %1673 = vmatpush1.msra.mxu0 0.0
    %1674 = vmatprep.subr.mxu0 0.0
    %1675 = vmatpush1.msra.mxu0 0.0
    %1676 = vmatprep.subr.mxu0 0.0
    %1677 = vmatpush1.msra.mxu0 0.0
    %1678 = vmatprep.subr.mxu0 0.0
    %1679 = vmatpush1.msra.mxu0 0.0
    %1680 = vmatprep.subr.mxu0 0.0
    %1681 = vmatpush1.msra.mxu0 0.0
    %1682 = vmatprep.subr.mxu0 0.0
    %1683 = vmatpush1.msra.mxu0 0.0
    %1684 = vmatprep.subr.mxu0 0.0
    %1685 = vmatpush1.msra.mxu0 0.0
    %1686 = vmatprep.subr.mxu0 0.0
    %1687 = vmatpush1.msra.mxu0 0.0
    %1688 = vmatprep.subr.mxu0 0.0
    %1689 = vmatpush1.msra.mxu0 0.0
    %1690 = vmatprep.subr.mxu0 0.0
    %1691 = vmatpush1.msra.mxu0 %v565
    %1692 = vmatprep.subr.mxu0 0.0
    %1693 = vmatpush1.msra.mxu0 %v564
    %1694 = vmatprep.subr.mxu0 0.0
    %1695 = vmatpush1.msra.mxu0 %v563
    %1696 = vmatprep.subr.mxu0 0.0
    %1697 = vmatpush1.msra.mxu0 %v562
    %1698 = vmatprep.subr.mxu0 0.0
    %1699 = vmatpush2.msra.mxu0 0.0
    %1700 = vmatprep.subr.mxu0 0.0
    %1701 = vmatpush2.msra.mxu0 0.0
    %1702 = vmatprep.subr.mxu0 0.0
    %1703 = vmatpush2.msra.mxu0 0.0
    %1704 = vmatprep.subr.mxu0 0.0
    %1705 = vmatpush2.msra.mxu0 0.0
    %1706 = vmatprep.subr.mxu0 0.0
    %1707 = vmatpush2.msra.mxu0 0.0
    %1708 = vmatprep.subr.mxu0 0.0
    %1709 = vmatpush2.msra.mxu0 0.0
    %1710 = vmatprep.subr.mxu0 0.0
    %1711 = vmatpush2.msra.mxu0 0.0
    %1712 = vmatprep.subr.mxu0 0.0
    %1713 = vmatpush2.msra.mxu0 0.0
    %1714 = vmatprep.subr.mxu0 0.0
    %1715 = vmatpush2.msra.mxu0 0.0
    %1716 = vmatprep.subr.mxu0 0.0
    %1717 = vmatpush2.msra.mxu0 0.0
    %1718 = vmatprep.subr.mxu0 0.0
    %1719 = vmatpush2.msra.mxu0 0.0
    %1720 = vmatprep.subr.mxu0 0.0
    %1721 = vmatpush2.msra.mxu0 0.0
    %1722 = vmatprep.subr.mxu0 0.0
    %1723 = vmatpush2.msra.mxu0 0.0
    %1724 = vmatprep.subr.mxu0 0.0
    %1725 = vmatpush2.msra.mxu0 0.0
    %1726 = vmatprep.subr.mxu0 0.0
    %1727 = vmatpush2.msra.mxu0 0.0
    %1728 = vmatprep.subr.mxu0 0.0
    %1729 = vmatpush2.msra.mxu0 0.0
    %1730 = vmatprep.mubr.f32.mxu0 0.0
    %1731 = vmatmul.mubr.f32.gmra.mxu0 %v1510
    %v1732 = vpop.f32.mrf.mxu0
    %v1733 = vadd.f32 %v571, %v1732
    %v1734 = vpop.f32.mrf.mxu0
    %1735 = vdwg.mxu0
    %v1736 = vmul.f32 %v1658, %v1733
    %v1737 = vadd.f32 %v536, %v1736
    %v1738 = vtanh.pop %v1737
    %v1739 = vsub.f32 1.0, %v1665
    %v1740 = vmul.f32 %v1739, %v1738
    %v1741 = vmul.f32 %v1665, %v1508
    %v1742 = vadd.f32 %v1740, %v1741
    %v1744 = vsel %vm192, %v1742, 0
    %1746 = vmatprep.subr.mxu0 0.0
    %1747 = vmatpush1.msra.mxu0 0.0
    %1748 = vmatprep.subr.mxu0 0.0
    %1749 = vmatpush1.msra.mxu0 0.0
    %1750 = vmatprep.subr.mxu0 0.0
    %1751 = vmatpush1.msra.mxu0 0.0
    %1752 = vmatprep.subr.mxu0 0.0
    %1753 = vmatpush1.msra.mxu0 0.0
    %1754 = vmatprep.subr.mxu0 0.0
    %1755 = vmatpush1.msra.mxu0 0.0
    %1756 = vmatprep.subr.mxu0 0.0
    %1757 = vmatpush1.msra.mxu0 0.0
    %1758 = vmatprep.subr.mxu0 0.0
    %1759 = vmatpush1.msra.mxu0 0.0
    %1760 = vmatprep.subr.mxu0 0.0
    %1761 = vmatpush1.msra.mxu0 0.0
    %1762 = vmatprep.subr.mxu0 0.0
    %1763 = vmatpush1.msra.mxu0 0.0
    %1764 = vmatprep.subr.mxu0 0.0
    %1765 = vmatpush1.msra.mxu0 0.0
    %1766 = vmatprep.subr.mxu0 0.0
    %1767 = vmatpush1.msra.mxu0 0.0
    %1768 = vmatprep.subr.mxu0 0.0
    %1769 = vmatpush1.msra.mxu0 0.0
    %1770 = vmatprep.subr.mxu0 0.0
    %1771 = vmatpush1.msra.mxu0 %v557
    %1772 = vmatprep.subr.mxu0 0.0
    %1773 = vmatpush1.msra.mxu0 %v556
    %1774 = vmatprep.subr.mxu0 0.0
    %1775 = vmatpush1.msra.mxu0 %v555
    %1776 = vmatprep.subr.mxu0 0.0
    %1777 = vmatpush1.msra.mxu0 %v554
    %1778 = vmatprep.subr.mxu0 0.0
    %1779 = vmatpush2.msra.mxu0 0.0
    %1780 = vmatprep.subr.mxu0 0.0
    %1781 = vmatpush2.msra.mxu0 0.0
    %1782 = vmatprep.subr.mxu0 0.0
    %1783 = vmatpush2.msra.mxu0 0.0
    %1784 = vmatprep.subr.mxu0 0.0
    %1785 = vmatpush2.msra.mxu0 0.0
    %1786 = vmatprep.subr.mxu0 0.0
    %1787 = vmatpush2.msra.mxu0 0.0
    %1788 = vmatprep.subr.mxu0 0.0
    %1789 = vmatpush2.msra.mxu0 0.0
    %1790 = vmatprep.subr.mxu0 0.0
    %1791 = vmatpush2.msra.mxu0 0.0
    %1792 = vmatprep.subr.mxu0 0.0
    %1793 = vmatpush2.msra.mxu0 0.0
    %1794 = vmatprep.subr.mxu0 0.0
    %1795 = vmatpush2.msra.mxu0 0.0
    %1796 = vmatprep.subr.mxu0 0.0
    %1797 = vmatpush2.msra.mxu0 0.0
    %1798 = vmatprep.subr.mxu0 0.0
    %1799 = vmatpush2.msra.mxu0 0.0
    %1800 = vmatprep.subr.mxu0 0.0
    %1801 = vmatpush2.msra.mxu0 0.0
    %1802 = vmatprep.subr.mxu0 0.0
    %1803 = vmatpush2.msra.mxu0 0.0
    %1804 = vmatprep.subr.mxu0 0.0
    %1805 = vmatpush2.msra.mxu0 0.0
    %1806 = vmatprep.subr.mxu0 0.0
    %1807 = vmatpush2.msra.mxu0 0.0
    %1808 = vmatprep.subr.mxu0 0.0
    %1809 = vmatpush2.msra.mxu0 0.0
    %1810 = vmatprep.mubr.f32.mxu0 0.0
    %1811 = vmatmul.mubr.f32.gmra.mxu0 %v1744
    %v1812 = vpop.f32.mrf.mxu0
    %v1813 = vadd.f32 0.0, %v1812
    %v1814 = vpop.f32.mrf.mxu0
    %1815 = vdwg.mxu0
    %1816 = vmatprep.subr.mxu0 0.0
    %1817 = vmatpush1.msra.mxu0 0.0
    %1818 = vmatprep.subr.mxu0 0.0
    %1819 = vmatpush1.msra.mxu0 0.0
    %1820 = vmatprep.subr.mxu0 0.0
    %1821 = vmatpush1.msra.mxu0 0.0
    %1822 = vmatprep.subr.mxu0 0.0
    %1823 = vmatpush1.msra.mxu0 0.0
    %1824 = vmatprep.subr.mxu0 0.0
    %1825 = vmatpush1.msra.mxu0 0.0
    %1826 = vmatprep.subr.mxu0 0.0
    %1827 = vmatpush1.msra.mxu0 0.0
    %1828 = vmatprep.subr.mxu0 0.0
    %1829 = vmatpush1.msra.mxu0 0.0
    %1830 = vmatprep.subr.mxu0 0.0
    %1831 = vmatpush1.msra.mxu0 0.0
    %1832 = vmatprep.subr.mxu0 0.0
    %1833 = vmatpush1.msra.mxu0 0.0
    %1834 = vmatprep.subr.mxu0 0.0
    %1835 = vmatpush1.msra.mxu0 0.0
    %1836 = vmatprep.subr.mxu0 0.0
    %1837 = vmatpush1.msra.mxu0 0.0
    %1838 = vmatprep.subr.mxu0 0.0
    %1839 = vmatpush1.msra.mxu0 0.0
    %1840 = vmatprep.subr.mxu0 0.0
    %1841 = vmatpush1.msra.mxu0 %v561
    %1842 = vmatprep.subr.mxu0 0.0
    %1843 = vmatpush1.msra.mxu0 %v560
    %1844 = vmatprep.subr.mxu0 0.0
    %1845 = vmatpush1.msra.mxu0 %v559
    %1846 = vmatprep.subr.mxu0 0.0
    %1847 = vmatpush1.msra.mxu0 %v558
    %1848 = vmatprep.subr.mxu0 0.0
    %1849 = vmatpush2.msra.mxu0 0.0
    %1850 = vmatprep.subr.mxu0 0.0
    %1851 = vmatpush2.msra.mxu0 0.0
    %1852 = vmatprep.subr.mxu0 0.0
    %1853 = vmatpush2.msra.mxu0 0.0
    %1854 = vmatprep.subr.mxu0 0.0
    %1855 = vmatpush2.msra.mxu0 0.0
    %1856 = vmatprep.subr.mxu0 0.0
    %1857 = vmatpush2.msra.mxu0 0.0
    %1858 = vmatprep.subr.mxu0 0.0
    %1859 = vmatpush2.msra.mxu0 0.0
    %1860 = vmatprep.subr.mxu0 0.0
    %1861 = vmatpush2.msra.mxu0 0.0
    %1862 = vmatprep.subr.mxu0 0.0
    %1863 = vmatpush2.msra.mxu0 0.0
    %1864 = vmatprep.subr.mxu0 0.0
    %1865 = vmatpush2.msra.mxu0 0.0
    %1866 = vmatprep.subr.mxu0 0.0
    %1867 = vmatpush2.msra.mxu0 0.0
    %1868 = vmatprep.subr.mxu0 0.0
    %1869 = vmatpush2.msra.mxu0 0.0
    %1870 = vmatprep.subr.mxu0 0.0
    %1871 = vmatpush2.msra.mxu0 0.0
    %1872 = vmatprep.subr.mxu0 0.0
    %1873 = vmatpush2.msra.mxu0 0.0
    %1874 = vmatprep.subr.mxu0 0.0
    %1875 = vmatpush2.msra.mxu0 0.0
    %1876 = vmatprep.subr.mxu0 0.0
    %1877 = vmatpush2.msra.mxu0 0.0
    %1878 = vmatprep.subr.mxu0 0.0
    %1879 = vmatpush2.msra.mxu0 0.0
    %1880 = vmatprep.mubr.f32.mxu0 0.0
    %1881 = vmatmul.mubr.f32.gmra.mxu0 %v1744
    %v1882 = vpop.f32.mrf.mxu0
    %v1883 = vadd.f32 0.0, %v1882
    %v1884 = vpop.f32.mrf.mxu0
    %1885 = vdwg.mxu0
    %v1886 = vadd.f32 %v309, %v1813
    %v1887 = vxor.u32 %v1886, 2147483648
    %v1888 = vmul.f32 %v1887, 1.442695
    %v1889 = vpow.pop %v1888
    %v1890 = vadd.f32 %v1889, 1.0
    %v1891 = vrcp.pop %v1890
    %v1892 = vmul.f32 1.0, %v1891
    %v1893 = vadd.f32 %v425, %v1883
    %v1894 = vxor.u32 %v1893, 2147483648
    %v1895 = vmul.f32 %v1894, 1.442695
    %v1896 = vpow.pop %v1895
    %v1897 = vadd.f32 %v1896, 1.0
    %v1898 = vrcp.pop %v1897
    %v1899 = vmul.f32 1.0, %v1898
    %1900 = vmatprep.subr.mxu0 0.0
    %1901 = vmatpush1.msra.mxu0 0.0
    %1902 = vmatprep.subr.mxu0 0.0
    %1903 = vmatpush1.msra.mxu0 0.0
    %1904 = vmatprep.subr.mxu0 0.0
    %1905 = vmatpush1.msra.mxu0 0.0
    %1906 = vmatprep.subr.mxu0 0.0
    %1907 = vmatpush1.msra.mxu0 0.0
    %1908 = vmatprep.subr.mxu0 0.0
    %1909 = vmatpush1.msra.mxu0 0.0
    %1910 = vmatprep.subr.mxu0 0.0
    %1911 = vmatpush1.msra.mxu0 0.0
    %1912 = vmatprep.subr.mxu0 0.0
    %1913 = vmatpush1.msra.mxu0 0.0
    %1914 = vmatprep.subr.mxu0 0.0
    %1915 = vmatpush1.msra.mxu0 0.0
    %1916 = vmatprep.subr.mxu0 0.0
    %1917 = vmatpush1.msra.mxu0 0.0
    %1918 = vmatprep.subr.mxu0 0.0
    %1919 = vmatpush1.msra.mxu0 0.0
    %1920 = vmatprep.subr.mxu0 0.0
    %1921 = vmatpush1.msra.mxu0 0.0
    %1922 = vmatprep.subr.mxu0 0.0
    %1923 = vmatpush1.msra.mxu0 0.0
    %1924 = vmatprep.subr.mxu0 0.0
    %1925 = vmatpush1.msra.mxu0 %v565
    %1926 = vmatprep.subr.mxu0 0.0
    %1927 = vmatpush1.msra.mxu0 %v564
    %1928 = vmatprep.subr.mxu0 0.0
    %1929 = vmatpush1.msra.mxu0 %v563
    %1930 = vmatprep.subr.mxu0 0.0
    %1931 = vmatpush1.msra.mxu0 %v562
    %1932 = vmatprep.subr.mxu0 0.0
    %1933 = vmatpush2.msra.mxu0 0.0
    %1934 = vmatprep.subr.mxu0 0.0
    %1935 = vmatpush2.msra.mxu0 0.0
    %1936 = vmatprep.subr.mxu0 0.0
    %1937 = vmatpush2.msra.mxu0 0.0
    %1938 = vmatprep.subr.mxu0 0.0
    %1939 = vmatpush2.msra.mxu0 0.0
    %1940 = vmatprep.subr.mxu0 0.0
    %1941 = vmatpush2.msra.mxu0 0.0
    %1942 = vmatprep.subr.mxu0 0.0
    %1943 = vmatpush2.msra.mxu0 0.0
    %1944 = vmatprep.subr.mxu0 0.0
    %1945 = vmatpush2.msra.mxu0 0.0
    %1946 = vmatprep.subr.mxu0 0.0
    %1947 = vmatpush2.msra.mxu0 0.0
    %1948 = vmatprep.subr.mxu0 0.0
    %1949 = vmatpush2.msra.mxu0 0.0
    %1950 = vmatprep.subr.mxu0 0.0
    %1951 = vmatpush2.msra.mxu0 0.0
    %1952 = vmatprep.subr.mxu0 0.0
    %1953 = vmatpush2.msra.mxu0 0.0
    %1954 = vmatprep.subr.mxu0 0.0
    %1955 = vmatpush2.msra.mxu0 0.0
    %1956 = vmatprep.subr.mxu0 0.0
    %1957 = vmatpush2.msra.mxu0 0.0
    %1958 = vmatprep.subr.mxu0 0.0
    %1959 = vmatpush2.msra.mxu0 0.0
    %1960 = vmatprep.subr.mxu0 0.0
    %1961 = vmatpush2.msra.mxu0 0.0
    %1962 = vmatprep.subr.mxu0 0.0
    %1963 = vmatpush2.msra.mxu0 0.0
    %1964 = vmatprep.mubr.f32.mxu0 0.0
    %1965 = vmatmul.mubr.f32.gmra.mxu0 %v1744
    %v1966 = vpop.f32.mrf.mxu0
    %v1967 = vadd.f32 %v571, %v1966
    %v1968 = vpop.f32.mrf.mxu0
    %1969 = vdwg.mxu0
    %v1970 = vmul.f32 %v1892, %v1967
    %v1971 = vadd.f32 %v541, %v1970
    %v1972 = vtanh.pop %v1971
    %v1973 = vsub.f32 1.0, %v1899
    %v1974 = vmul.f32 %v1973, %v1972
    %v1975 = vmul.f32 %v1899, %v1742
    %v1976 = vadd.f32 %v1974, %v1975
    %v1978 = vsel %vm192, %v1976, 0
    %1980 = vmatprep.subr.mxu0 0.0
    %1981 = vmatpush1.msra.mxu0 0.0
    %1982 = vmatprep.subr.mxu0 0.0
    %1983 = vmatpush1.msra.mxu0 0.0
    %1984 = vmatprep.subr.mxu0 0.0
    %1985 = vmatpush1.msra.mxu0 0.0
    %1986 = vmatprep.subr.mxu0 0.0
    %1987 = vmatpush1.msra.mxu0 0.0
    %1988 = vmatprep.subr.mxu0 0.0
    %1989 = vmatpush1.msra.mxu0 0.0
    %1990 = vmatprep.subr.mxu0 0.0
    %1991 = vmatpush1.msra.mxu0 0.0
    %1992 = vmatprep.subr.mxu0 0.0
    %1993 = vmatpush1.msra.mxu0 0.0
    %1994 = vmatprep.subr.mxu0 0.0
    %1995 = vmatpush1.msra.mxu0 0.0
    %1996 = vmatprep.subr.mxu0 0.0
    %1997 = vmatpush1.msra.mxu0 0.0
    %1998 = vmatprep.subr.mxu0 0.0
    %1999 = vmatpush1.msra.mxu0 0.0
    %2000 = vmatprep.subr.mxu0 0.0
    %2001 = vmatpush1.msra.mxu0 0.0
    %2002 = vmatprep.subr.mxu0 0.0
    %2003 = vmatpush1.msra.mxu0 0.0
    %2004 = vmatprep.subr.mxu0 0.0
    %2005 = vmatpush1.msra.mxu0 %v557
    %2006 = vmatprep.subr.mxu0 0.0
    %2007 = vmatpush1.msra.mxu0 %v556
    %2008 = vmatprep.subr.mxu0 0.0
    %2009 = vmatpush1.msra.mxu0 %v555
    %2010 = vmatprep.subr.mxu0 0.0
    %2011 = vmatpush1.msra.mxu0 %v554
    %2012 = vmatprep.subr.mxu0 0.0
    %2013 = vmatpush2.msra.mxu0 0.0
    %2014 = vmatprep.subr.mxu0 0.0
    %2015 = vmatpush2.msra.mxu0 0.0
    %2016 = vmatprep.subr.mxu0 0.0
    %2017 = vmatpush2.msra.mxu0 0.0
    %2018 = vmatprep.subr.mxu0 0.0
    %2019 = vmatpush2.msra.mxu0 0.0
    %2020 = vmatprep.subr.mxu0 0.0
    %2021 = vmatpush2.msra.mxu0 0.0
    %2022 = vmatprep.subr.mxu0 0.0
    %2023 = vmatpush2.msra.mxu0 0.0
    %2024 = vmatprep.subr.mxu0 0.0
    %2025 = vmatpush2.msra.mxu0 0.0
    %2026 = vmatprep.subr.mxu0 0.0
    %2027 = vmatpush2.msra.mxu0 0.0
    %2028 = vmatprep.subr.mxu0 0.0
    %2029 = vmatpush2.msra.mxu0 0.0
    %2030 = vmatprep.subr.mxu0 0.0
    %2031 = vmatpush2.msra.mxu0 0.0
    %2032 = vmatprep.subr.mxu0 0.0
    %2033 = vmatpush2.msra.mxu0 0.0
    %2034 = vmatprep.subr.mxu0 0.0
    %2035 = vmatpush2.msra.mxu0 0.0
    %2036 = vmatprep.subr.mxu0 0.0
    %2037 = vmatpush2.msra.mxu0 0.0
    %2038 = vmatprep.subr.mxu0 0.0
    %2039 = vmatpush2.msra.mxu0 0.0
    %2040 = vmatprep.subr.mxu0 0.0
    %2041 = vmatpush2.msra.mxu0 0.0
    %2042 = vmatprep.subr.mxu0 0.0
    %2043 = vmatpush2.msra.mxu0 0.0
    %2044 = vmatprep.mubr.f32.mxu0 0.0
    %2045 = vmatmul.mubr.f32.gmra.mxu0 %v1978
    %v2046 = vpop.f32.mrf.mxu0
    %v2047 = vadd.f32 0.0, %v2046
    %v2048 = vpop.f32.mrf.mxu0
    %2049 = vdwg.mxu0
    %2050 = vmatprep.subr.mxu0 0.0
    %2051 = vmatpush1.msra.mxu0 0.0
    %2052 = vmatprep.subr.mxu0 0.0
    %2053 = vmatpush1.msra.mxu0 0.0
    %2054 = vmatprep.subr.mxu0 0.0
    %2055 = vmatpush1.msra.mxu0 0.0
    %2056 = vmatprep.subr.mxu0 0.0
    %2057 = vmatpush1.msra.mxu0 0.0
    %2058 = vmatprep.subr.mxu0 0.0
    %2059 = vmatpush1.msra.mxu0 0.0
    %2060 = vmatprep.subr.mxu0 0.0
    %2061 = vmatpush1.msra.mxu0 0.0
    %2062 = vmatprep.subr.mxu0 0.0
    %2063 = vmatpush1.msra.mxu0 0.0
    %2064 = vmatprep.subr.mxu0 0.0
    %2065 = vmatpush1.msra.mxu0 0.0
    %2066 = vmatprep.subr.mxu0 0.0
    %2067 = vmatpush1.msra.mxu0 0.0
    %2068 = vmatprep.subr.mxu0 0.0
    %2069 = vmatpush1.msra.mxu0 0.0
    %2070 = vmatprep.subr.mxu0 0.0
    %2071 = vmatpush1.msra.mxu0 0.0
    %2072 = vmatprep.subr.mxu0 0.0
    %2073 = vmatpush1.msra.mxu0 0.0
    %2074 = vmatprep.subr.mxu0 0.0
    %2075 = vmatpush1.msra.mxu0 %v561
    %2076 = vmatprep.subr.mxu0 0.0
    %2077 = vmatpush1.msra.mxu0 %v560
    %2078 = vmatprep.subr.mxu0 0.0
    %2079 = vmatpush1.msra.mxu0 %v559
    %2080 = vmatprep.subr.mxu0 0.0
    %2081 = vmatpush1.msra.mxu0 %v558
    %2082 = vmatprep.subr.mxu0 0.0
    %2083 = vmatpush2.msra.mxu0 0.0
    %2084 = vmatprep.subr.mxu0 0.0
    %2085 = vmatpush2.msra.mxu0 0.0
    %2086 = vmatprep.subr.mxu0 0.0
    %2087 = vmatpush2.msra.mxu0 0.0
    %2088 = vmatprep.subr.mxu0 0.0
    %2089 = vmatpush2.msra.mxu0 0.0
    %2090 = vmatprep.subr.mxu0 0.0
    %2091 = vmatpush2.msra.mxu0 0.0
    %2092 = vmatprep.subr.mxu0 0.0
    %2093 = vmatpush2.msra.mxu0 0.0
    %2094 = vmatprep.subr.mxu0 0.0
    %2095 = vmatpush2.msra.mxu0 0.0
    %2096 = vmatprep.subr.mxu0 0.0
    %2097 = vmatpush2.msra.mxu0 0.0
    %2098 = vmatprep.subr.mxu0 0.0
    %2099 = vmatpush2.msra.mxu0 0.0
    %2100 = vmatprep.subr.mxu0 0.0
    %2101 = vmatpush2.msra.mxu0 0.0
    %2102 = vmatprep.subr.mxu0 0.0
    %2103 = vmatpush2.msra.mxu0 0.0
    %2104 = vmatprep.subr.mxu0 0.0
    %2105 = vmatpush2.msra.mxu0 0.0
    %2106 = vmatprep.subr.mxu0 0.0
    %2107 = vmatpush2.msra.mxu0 0.0
    %2108 = vmatprep.subr.mxu0 0.0
    %2109 = vmatpush2.msra.mxu0 0.0
    %2110 = vmatprep.subr.mxu0 0.0
    %2111 = vmatpush2.msra.mxu0 0.0
    %2112 = vmatprep.subr.mxu0 0.0
    %2113 = vmatpush2.msra.mxu0 0.0
    %2114 = vmatprep.mubr.f32.mxu0 0.0
    %2115 = vmatmul.mubr.f32.gmra.mxu0 %v1978
    %v2116 = vpop.f32.mrf.mxu0
    %v2117 = vadd.f32 0.0, %v2116
    %v2118 = vpop.f32.mrf.mxu0
    %2119 = vdwg.mxu0
    %v2120 = vadd.f32 %v314, %v2047
    %v2121 = vxor.u32 %v2120, 2147483648
    %v2122 = vmul.f32 %v2121, 1.442695
    %v2123 = vpow.pop %v2122
    %v2124 = vadd.f32 %v2123, 1.0
    %v2125 = vrcp.pop %v2124
    %v2126 = vmul.f32 1.0, %v2125
    %v2127 = vadd.f32 %v430, %v2117
    %v2128 = vxor.u32 %v2127, 2147483648
    %v2129 = vmul.f32 %v2128, 1.442695
    %v2130 = vpow.pop %v2129
    %v2131 = vadd.f32 %v2130, 1.0
    %v2132 = vrcp.pop %v2131
    %v2133 = vmul.f32 1.0, %v2132
    %2134 = vmatprep.subr.mxu0 0.0
    %2135 = vmatpush1.msra.mxu0 0.0
    %2136 = vmatprep.subr.mxu0 0.0
    %2137 = vmatpush1.msra.mxu0 0.0
    %2138 = vmatprep.subr.mxu0 0.0
    %2139 = vmatpush1.msra.mxu0 0.0
    %2140 = vmatprep.subr.mxu0 0.0
    %2141 = vmatpush1.msra.mxu0 0.0
    %2142 = vmatprep.subr.mxu0 0.0
    %2143 = vmatpush1.msra.mxu0 0.0
    %2144 = vmatprep.subr.mxu0 0.0
    %2145 = vmatpush1.msra.mxu0 0.0
    %2146 = vmatprep.subr.mxu0 0.0
    %2147 = vmatpush1.msra.mxu0 0.0
    %2148 = vmatprep.subr.mxu0 0.0
    %2149 = vmatpush1.msra.mxu0 0.0
    %2150 = vmatprep.subr.mxu0 0.0
    %2151 = vmatpush1.msra.mxu0 0.0
    %2152 = vmatprep.subr.mxu0 0.0
    %2153 = vmatpush1.msra.mxu0 0.0
    %2154 = vmatprep.subr.mxu0 0.0
    %2155 = vmatpush1.msra.mxu0 0.0
    %2156 = vmatprep.subr.mxu0 0.0
    %2157 = vmatpush1.msra.mxu0 0.0
    %2158 = vmatprep.subr.mxu0 0.0
    %2159 = vmatpush1.msra.mxu0 %v565
    %2160 = vmatprep.subr.mxu0 0.0
    %2161 = vmatpush1.msra.mxu0 %v564
    %2162 = vmatprep.subr.mxu0 0.0
    %2163 = vmatpush1.msra.mxu0 %v563
    %2164 = vmatprep.subr.mxu0 0.0
    %2165 = vmatpush1.msra.mxu0 %v562
    %2166 = vmatprep.subr.mxu0 0.0
    %2167 = vmatpush2.msra.mxu0 0.0
    %2168 = vmatprep.subr.mxu0 0.0
    %2169 = vmatpush2.msra.mxu0 0.0
    %2170 = vmatprep.subr.mxu0 0.0
    %2171 = vmatpush2.msra.mxu0 0.0
    %2172 = vmatprep.subr.mxu0 0.0
    %2173 = vmatpush2.msra.mxu0 0.0
    %2174 = vmatprep.subr.mxu0 0.0
    %2175 = vmatpush2.msra.mxu0 0.0
    %2176 = vmatprep.subr.mxu0 0.0
    %2177 = vmatpush2.msra.mxu0 0.0
    %2178 = vmatprep.subr.mxu0 0.0
    %2179 = vmatpush2.msra.mxu0 0.0
    %2180 = vmatprep.subr.mxu0 0.0
    %2181 = vmatpush2.msra.mxu0 0.0
    %2182 = vmatprep.subr.mxu0 0.0
    %2183 = vmatpush2.msra.mxu0 0.0
    %2184 = vmatprep.subr.mxu0 0.0
    %2185 = vmatpush2.msra.mxu0 0.0
    %2186 = vmatprep.subr.mxu0 0.0
    %2187 = vmatpush2.msra.mxu0 0.0
    %2188 = vmatprep.subr.mxu0 0.0
    %2189 = vmatpush2.msra.mxu0 0.0
    %2190 = vmatprep.subr.mxu0 0.0
    %2191 = vmatpush2.msra.mxu0 0.0
    %2192 = vmatprep.subr.mxu0 0.0
    %2193 = vmatpush2.msra.mxu0 0.0
    %2194 = vmatprep.subr.mxu0 0.0
    %2195 = vmatpush2.msra.mxu0 0.0
    %2196 = vmatprep.subr.mxu0 0.0
    %2197 = vmatpush2.msra.mxu0 0.0
    %2198 = vmatprep.mubr.f32.mxu0 0.0
    %2199 = vmatmul.mubr.f32.gmra.mxu0 %v1978
    %v2200 = vpop.f32.mrf.mxu0
    %v2201 = vadd.f32 %v571, %v2200
    %v2202 = vpop.f32.mrf.mxu0
    %2203 = vdwg.mxu0
    %v2204 = vmul.f32 %v2126, %v2201
    %v2205 = vadd.f32 %v546, %v2204
    %v2206 = vtanh.pop %v2205
    %v2207 = vsub.f32 1.0, %v2133
    %v2208 = vmul.f32 %v2207, %v2206
    %v2209 = vmul.f32 %v2133, %v1976
    %v2210 = vadd.f32 %v2208, %v2209
    %v2212 = vsel %vm192, %v2210, 0
    %2214 = vmatprep.subr.mxu0 0.0
    %2215 = vmatpush1.msra.mxu0 0.0
    %2216 = vmatprep.subr.mxu0 0.0
    %2217 = vmatpush1.msra.mxu0 0.0
    %2218 = vmatprep.subr.mxu0 0.0
    %2219 = vmatpush1.msra.mxu0 0.0
    %2220 = vmatprep.subr.mxu0 0.0
    %2221 = vmatpush1.msra.mxu0 0.0
    %2222 = vmatprep.subr.mxu0 0.0
    %2223 = vmatpush1.msra.mxu0 0.0
    %2224 = vmatprep.subr.mxu0 0.0
    %2225 = vmatpush1.msra.mxu0 0.0
    %2226 = vmatprep.subr.mxu0 0.0
    %2227 = vmatpush1.msra.mxu0 0.0
    %2228 = vmatprep.subr.mxu0 0.0
    %2229 = vmatpush1.msra.mxu0 0.0
    %2230 = vmatprep.subr.mxu0 0.0
    %2231 = vmatpush1.msra.mxu0 0.0
    %2232 = vmatprep.subr.mxu0 0.0
    %2233 = vmatpush1.msra.mxu0 0.0
    %2234 = vmatprep.subr.mxu0 0.0
    %2235 = vmatpush1.msra.mxu0 0.0
    %2236 = vmatprep.subr.mxu0 0.0
    %2237 = vmatpush1.msra.mxu0 0.0
    %2238 = vmatprep.subr.mxu0 0.0
    %2239 = vmatpush1.msra.mxu0 %v557
    %2240 = vmatprep.subr.mxu0 0.0
    %2241 = vmatpush1.msra.mxu0 %v556
    %2242 = vmatprep.subr.mxu0 0.0
    %2243 = vmatpush1.msra.mxu0 %v555
    %2244 = vmatprep.subr.mxu0 0.0
    %2245 = vmatpush1.msra.mxu0 %v554
    %2246 = vmatprep.subr.mxu0 0.0
    %2247 = vmatpush2.msra.mxu0 0.0
    %2248 = vmatprep.subr.mxu0 0.0
    %2249 = vmatpush2.msra.mxu0 0.0
    %2250 = vmatprep.subr.mxu0 0.0
    %2251 = vmatpush2.msra.mxu0 0.0
    %2252 = vmatprep.subr.mxu0 0.0
    %2253 = vmatpush2.msra.mxu0 0.0
    %2254 = vmatprep.subr.mxu0 0.0
    %2255 = vmatpush2.msra.mxu0 0.0
    %2256 = vmatprep.subr.mxu0 0.0
    %2257 = vmatpush2.msra.mxu0 0.0
    %2258 = vmatprep.subr.mxu0 0.0
    %2259 = vmatpush2.msra.mxu0 0.0
    %2260 = vmatprep.subr.mxu0 0.0
    %2261 = vmatpush2.msra.mxu0 0.0
    %2262 = vmatprep.subr.mxu0 0.0
    %2263 = vmatpush2.msra.mxu0 0.0
    %2264 = vmatprep.subr.mxu0 0.0
    %2265 = vmatpush2.msra.mxu0 0.0
    %2266 = vmatprep.subr.mxu0 0.0
    %2267 = vmatpush2.msra.mxu0 0.0
    %2268 = vmatprep.subr.mxu0 0.0
    %2269 = vmatpush2.msra.mxu0 0.0
    %2270 = vmatprep.subr.mxu0 0.0
    %2271 = vmatpush2.msra.mxu0 0.0
    %2272 = vmatprep.subr.mxu0 0.0
    %2273 = vmatpush2.msra.mxu0 0.0
    %2274 = vmatprep.subr.mxu0 0.0
    %2275 = vmatpush2.msra.mxu0 0.0
    %2276 = vmatprep.subr.mxu0 0.0
    %2277 = vmatpush2.msra.mxu0 0.0
    %2278 = vmatprep.mubr.f32.mxu0 0.0
    %2279 = vmatmul.mubr.f32.gmra.mxu0 %v2212
    %v2280 = vpop.f32.mrf.mxu0
    %v2281 = vadd.f32 0.0, %v2280
    %v2282 = vpop.f32.mrf.mxu0
    %2283 = vdwg.mxu0
    %2284 = vmatprep.subr.mxu0 0.0
    %2285 = vmatpush1.msra.mxu0 0.0
    %2286 = vmatprep.subr.mxu0 0.0
    %2287 = vmatpush1.msra.mxu0 0.0
    %2288 = vmatprep.subr.mxu0 0.0
    %2289 = vmatpush1.msra.mxu0 0.0
    %2290 = vmatprep.subr.mxu0 0.0
    %2291 = vmatpush1.msra.mxu0 0.0
    %2292 = vmatprep.subr.mxu0 0.0
    %2293 = vmatpush1.msra.mxu0 0.0
    %2294 = vmatprep.subr.mxu0 0.0
    %2295 = vmatpush1.msra.mxu0 0.0
    %2296 = vmatprep.subr.mxu0 0.0
    %2297 = vmatpush1.msra.mxu0 0.0
    %2298 = vmatprep.subr.mxu0 0.0
    %2299 = vmatpush1.msra.mxu0 0.0
    %2300 = vmatprep.subr.mxu0 0.0
    %2301 = vmatpush1.msra.mxu0 0.0
    %2302 = vmatprep.subr.mxu0 0.0
    %2303 = vmatpush1.msra.mxu0 0.0
    %2304 = vmatprep.subr.mxu0 0.0
    %2305 = vmatpush1.msra.mxu0 0.0
    %2306 = vmatprep.subr.mxu0 0.0
    %2307 = vmatpush1.msra.mxu0 0.0
    %2308 = vmatprep.subr.mxu0 0.0
    %2309 = vmatpush1.msra.mxu0 %v561
    %2310 = vmatprep.subr.mxu0 0.0
    %2311 = vmatpush1.msra.mxu0 %v560
    %2312 = vmatprep.subr.mxu0 0.0
    %2313 = vmatpush1.msra.mxu0 %v559
    %2314 = vmatprep.subr.mxu0 0.0
    %2315 = vmatpush1.msra.mxu0 %v558
    %2316 = vmatprep.subr.mxu0 0.0
    %2317 = vmatpush2.msra.mxu0 0.0
    %2318 = vmatprep.subr.mxu0 0.0
    %2319 = vmatpush2.msra.mxu0 0.0
    %2320 = vmatprep.subr.mxu0 0.0
    %2321 = vmatpush2.msra.mxu0 0.0
    %2322 = vmatprep.subr.mxu0 0.0
    %2323 = vmatpush2.msra.mxu0 0.0
    %2324 = vmatprep.subr.mxu0 0.0
    %2325 = vmatpush2.msra.mxu0 0.0
    %2326 = vmatprep.subr.mxu0 0.0
    %2327 = vmatpush2.msra.mxu0 0.0
    %2328 = vmatprep.subr.mxu0 0.0
    %2329 = vmatpush2.msra.mxu0 0.0
    %2330 = vmatprep.subr.mxu0 0.0
    %2331 = vmatpush2.msra.mxu0 0.0
    %2332 = vmatprep.subr.mxu0 0.0
    %2333 = vmatpush2.msra.mxu0 0.0
    %2334 = vmatprep.subr.mxu0 0.0
    %2335 = vmatpush2.msra.mxu0 0.0
    %2336 = vmatprep.subr.mxu0 0.0
    %2337 = vmatpush2.msra.mxu0 0.0
    %2338 = vmatprep.subr.mxu0 0.0
    %2339 = vmatpush2.msra.mxu0 0.0
    %2340 = vmatprep.subr.mxu0 0.0
    %2341 = vmatpush2.msra.mxu0 0.0
    %2342 = vmatprep.subr.mxu0 0.0
    %2343 = vmatpush2.msra.mxu0 0.0
    %2344 = vmatprep.subr.mxu0 0.0
    %2345 = vmatpush2.msra.mxu0 0.0
    %2346 = vmatprep.subr.mxu0 0.0
    %2347 = vmatpush2.msra.mxu0 0.0
    %2348 = vmatprep.mubr.f32.mxu0 0.0
    %2349 = vmatmul.mubr.f32.gmra.mxu0 %v2212
    %v2350 = vpop.f32.mrf.mxu0
    %v2351 = vadd.f32 0.0, %v2350
    %v2352 = vpop.f32.mrf.mxu0
    %2353 = vdwg.mxu0
    %v2354 = vadd.f32 %v319, %v2281
    %v2355 = vxor.u32 %v2354, 2147483648
    %v2356 = vmul.f32 %v2355, 1.442695
    %v2357 = vpow.pop %v2356
    %v2358 = vadd.f32 %v2357, 1.0
    %v2359 = vrcp.pop %v2358
    %v2360 = vmul.f32 1.0, %v2359
    %v2361 = vadd.f32 %v435, %v2351
    %v2362 = vxor.u32 %v2361, 2147483648
    %v2363 = vmul.f32 %v2362, 1.442695
    %v2364 = vpow.pop %v2363
    %v2365 = vadd.f32 %v2364, 1.0
    %v2366 = vrcp.pop %v2365
    %v2367 = vmul.f32 1.0, %v2366
    %2368 = vmatprep.subr.mxu0 0.0
    %2369 = vmatpush1.msra.mxu0 0.0
    %2370 = vmatprep.subr.mxu0 0.0
    %2371 = vmatpush1.msra.mxu0 0.0
    %2372 = vmatprep.subr.mxu0 0.0
    %2373 = vmatpush1.msra.mxu0 0.0
    %2374 = vmatprep.subr.mxu0 0.0
    %2375 = vmatpush1.msra.mxu0 0.0
    %2376 = vmatprep.subr.mxu0 0.0
    %2377 = vmatpush1.msra.mxu0 0.0
    %2378 = vmatprep.subr.mxu0 0.0
    %2379 = vmatpush1.msra.mxu0 0.0
    %2380 = vmatprep.subr.mxu0 0.0
    %2381 = vmatpush1.msra.mxu0 0.0
    %2382 = vmatprep.subr.mxu0 0.0
    %2383 = vmatpush1.msra.mxu0 0.0
    %2384 = vmatprep.subr.mxu0 0.0
    %2385 = vmatpush1.msra.mxu0 0.0
    %2386 = vmatprep.subr.mxu0 0.0
    %2387 = vmatpush1.msra.mxu0 0.0
    %2388 = vmatprep.subr.mxu0 0.0
    %2389 = vmatpush1.msra.mxu0 0.0
    %2390 = vmatprep.subr.mxu0 0.0
    %2391 = vmatpush1.msra.mxu0 0.0
    %2392 = vmatprep.subr.mxu0 0.0
    %2393 = vmatpush1.msra.mxu0 %v565
    %2394 = vmatprep.subr.mxu0 0.0
    %2395 = vmatpush1.msra.mxu0 %v564
    %2396 = vmatprep.subr.mxu0 0.0
    %2397 = vmatpush1.msra.mxu0 %v563
    %2398 = vmatprep.subr.mxu0 0.0
    %2399 = vmatpush1.msra.mxu0 %v562
    %2400 = vmatprep.subr.mxu0 0.0
    %2401 = vmatpush2.msra.mxu0 0.0
    %2402 = vmatprep.subr.mxu0 0.0
    %2403 = vmatpush2.msra.mxu0 0.0
    %2404 = vmatprep.subr.mxu0 0.0
    %2405 = vmatpush2.msra.mxu0 0.0
    %2406 = vmatprep.subr.mxu0 0.0
    %2407 = vmatpush2.msra.mxu0 0.0
    %2408 = vmatprep.subr.mxu0 0.0
    %2409 = vmatpush2.msra.mxu0 0.0
    %2410 = vmatprep.subr.mxu0 0.0
    %2411 = vmatpush2.msra.mxu0 0.0
    %2412 = vmatprep.subr.mxu0 0.0
    %2413 = vmatpush2.msra.mxu0 0.0
    %2414 = vmatprep.subr.mxu0 0.0
    %2415 = vmatpush2.msra.mxu0 0.0
    %2416 = vmatprep.subr.mxu0 0.0
    %2417 = vmatpush2.msra.mxu0 0.0
    %2418 = vmatprep.subr.mxu0 0.0
    %2419 = vmatpush2.msra.mxu0 0.0
    %2420 = vmatprep.subr.mxu0 0.0
    %2421 = vmatpush2.msra.mxu0 0.0
    %2422 = vmatprep.subr.mxu0 0.0
    %2423 = vmatpush2.msra.mxu0 0.0
    %2424 = vmatprep.subr.mxu0 0.0
    %2425 = vmatpush2.msra.mxu0 0.0
    %2426 = vmatprep.subr.mxu0 0.0
    %2427 = vmatpush2.msra.mxu0 0.0
    %2428 = vmatprep.subr.mxu0 0.0
    %2429 = vmatpush2.msra.mxu0 0.0
    %2430 = vmatprep.subr.mxu0 0.0
    %2431 = vmatpush2.msra.mxu0 0.0
    %2432 = vmatprep.mubr.f32.mxu0 0.0
    %2433 = vmatmul.mubr.f32.gmra.mxu0 %v2212
    %v2434 = vpop.f32.mrf.mxu0
    %v2435 = vadd.f32 %v571, %v2434
    %v2436 = vpop.f32.mrf.mxu0
    %2437 = vdwg.mxu0
    %v2438 = vmul.f32 %v2360, %v2435
    %v2439 = vadd.f32 %v551, %v2438
    %v2440 = vtanh.pop %v2439
    %v2441 = vsub.f32 1.0, %v2367
    %v2442 = vmul.f32 %v2441, %v2440
    %v2443 = vmul.f32 %v2367, %v2210
    %v2444 = vadd.f32 %v2442, %v2443
    %v2445 = vld [vmem:[#allocation14] sm:$0xff]
    %v2446 = vld [vmem:[#allocation14 + $0x8] sm:$0xff]
    %v2447 = vld [vmem:[#allocation14 + $0x10] sm:$0xff]
    %v2448 = vld [vmem:[#allocation14 + $0x18] sm:$0xff]
    %v2449 = vld [vmem:[%s12] sm:$0x1]
    %v2451 = vlaneseq
    %v2452 = vshrl.u32 %v2451, 7
    %v2453 = vsub.s32 0, %v2452
    %v2454 = vrot.slane %v2449, %v2453
    %v2457 = vsel %vm192, %v2444, 0
    %2459 = vmatprep.subr.mxu0 0.0
    %2460 = vmatpush1.msra.mxu0 0.0
    %2461 = vmatprep.subr.mxu0 0.0
    %2462 = vmatpush1.msra.mxu0 0.0
    %2463 = vmatprep.subr.mxu0 0.0
    %2464 = vmatpush1.msra.mxu0 0.0
    %2465 = vmatprep.subr.mxu0 0.0
    %2466 = vmatpush1.msra.mxu0 0.0
    %2467 = vmatprep.subr.mxu0 0.0
    %2468 = vmatpush1.msra.mxu0 0.0
    %2469 = vmatprep.subr.mxu0 0.0
    %2470 = vmatpush1.msra.mxu0 0.0
    %2471 = vmatprep.subr.mxu0 0.0
    %2472 = vmatpush1.msra.mxu0 0.0
    %2473 = vmatprep.subr.mxu0 0.0
    %2474 = vmatpush1.msra.mxu0 0.0
    %2475 = vmatprep.subr.mxu0 0.0
    %2476 = vmatpush1.msra.mxu0 0.0
    %2477 = vmatprep.subr.mxu0 0.0
    %2478 = vmatpush1.msra.mxu0 0.0
    %2479 = vmatprep.subr.mxu0 0.0
    %2480 = vmatpush1.msra.mxu0 0.0
    %2481 = vmatprep.subr.mxu0 0.0
    %2482 = vmatpush1.msra.mxu0 0.0
    %2483 = vmatprep.subr.mxu0 0.0
    %2484 = vmatpush1.msra.mxu0 %v2448
    %2485 = vmatprep.subr.mxu0 0.0
    %2486 = vmatpush1.msra.mxu0 %v2447
    %2487 = vmatprep.subr.mxu0 0.0
    %2488 = vmatpush1.msra.mxu0 %v2446
    %2489 = vmatprep.subr.mxu0 0.0
    %2490 = vmatpush1.msra.mxu0 %v2445
    %2491 = vmatprep.subr.mxu0 0.0
    %2492 = vmatpush2.msra.mxu0 0.0
    %2493 = vmatprep.subr.mxu0 0.0
    %2494 = vmatpush2.msra.mxu0 0.0
    %2495 = vmatprep.subr.mxu0 0.0
    %2496 = vmatpush2.msra.mxu0 0.0
    %2497 = vmatprep.subr.mxu0 0.0
    %2498 = vmatpush2.msra.mxu0 0.0
    %2499 = vmatprep.subr.mxu0 0.0
    %2500 = vmatpush2.msra.mxu0 0.0
    %2501 = vmatprep.subr.mxu0 0.0
    %2502 = vmatpush2.msra.mxu0 0.0
    %2503 = vmatprep.subr.mxu0 0.0
    %2504 = vmatpush2.msra.mxu0 0.0
    %2505 = vmatprep.subr.mxu0 0.0
    %2506 = vmatpush2.msra.mxu0 0.0
    %2507 = vmatprep.subr.mxu0 0.0
    %2508 = vmatpush2.msra.mxu0 0.0
    %2509 = vmatprep.subr.mxu0 0.0
    %2510 = vmatpush2.msra.mxu0 0.0
    %2511 = vmatprep.subr.mxu0 0.0
    %2512 = vmatpush2.msra.mxu0 0.0
    %2513 = vmatprep.subr.mxu0 0.0
    %2514 = vmatpush2.msra.mxu0 0.0
    %2515 = vmatprep.subr.mxu0 0.0
    %2516 = vmatpush2.msra.mxu0 0.0
    %2517 = vmatprep.subr.mxu0 0.0
    %2518 = vmatpush2.msra.mxu0 0.0
    %2519 = vmatprep.subr.mxu0 0.0
    %2520 = vmatpush2.msra.mxu0 0.0
    %2521 = vmatprep.subr.mxu0 0.0
    %2522 = vmatpush2.msra.mxu0 0.0
    %2523 = vmatprep.mubr.f32.mxu0 0.0
    %2524 = vmatmul.mubr.f32.gmra.mxu0 %v2457
    %v2525 = vpop.f32.mrf.mxu0
    %v2526 = vadd.f32 %v2454, %v2525
    %v2527 = vpop.f32.mrf.mxu0
    %2528 = vdwg.mxu0
    %v2529 = vmax.f32 %v2526, 0.0
    %v2530 = vld [vmem:[#allocation16] sm:$0xff]
    %v2531 = vld [vmem:[#allocation16 + $0x8] sm:$0xff]
    %v2532 = vld [vmem:[#allocation16 + $0x10] sm:$0xff]
    %v2533 = vld [vmem:[#allocation16 + $0x18] sm:$0xff]
    %v2534 = vld [vmem:[%s14] sm:$0x1]
    %v2536 = vlaneseq
    %v2537 = vshrl.u32 %v2536, 7
    %v2538 = vsub.s32 0, %v2537
    %v2539 = vrot.slane %v2534, %v2538
    %v2542 = vsel %vm192, %v2529, 0
    %2544 = vmatprep.subr.mxu0 0.0
    %2545 = vmatpush1.msra.mxu0 0.0
    %2546 = vmatprep.subr.mxu0 0.0
    %2547 = vmatpush1.msra.mxu0 0.0
    %2548 = vmatprep.subr.mxu0 0.0
    %2549 = vmatpush1.msra.mxu0 0.0
    %2550 = vmatprep.subr.mxu0 0.0
    %2551 = vmatpush1.msra.mxu0 0.0
    %2552 = vmatprep.subr.mxu0 0.0
    %2553 = vmatpush1.msra.mxu0 0.0
    %2554 = vmatprep.subr.mxu0 0.0
    %2555 = vmatpush1.msra.mxu0 0.0
    %2556 = vmatprep.subr.mxu0 0.0
    %2557 = vmatpush1.msra.mxu0 0.0
    %2558 = vmatprep.subr.mxu0 0.0
    %2559 = vmatpush1.msra.mxu0 0.0
    %2560 = vmatprep.subr.mxu0 0.0
    %2561 = vmatpush1.msra.mxu0 0.0
    %2562 = vmatprep.subr.mxu0 0.0
    %2563 = vmatpush1.msra.mxu0 0.0
    %2564 = vmatprep.subr.mxu0 0.0
    %2565 = vmatpush1.msra.mxu0 0.0
    %2566 = vmatprep.subr.mxu0 0.0
    %2567 = vmatpush1.msra.mxu0 0.0
    %2568 = vmatprep.subr.mxu0 0.0
    %2569 = vmatpush1.msra.mxu0 %v2533
    %2570 = vmatprep.subr.mxu0 0.0
    %2571 = vmatpush1.msra.mxu0 %v2532
    %2572 = vmatprep.subr.mxu0 0.0
    %2573 = vmatpush1.msra.mxu0 %v2531
    %2574 = vmatprep.subr.mxu0 0.0
    %2575 = vmatpush1.msra.mxu0 %v2530
    %2576 = vmatprep.subr.mxu0 0.0
    %2577 = vmatpush2.msra.mxu0 0.0
    %2578 = vmatprep.subr.mxu0 0.0
    %2579 = vmatpush2.msra.mxu0 0.0
    %2580 = vmatprep.subr.mxu0 0.0
    %2581 = vmatpush2.msra.mxu0 0.0
    %2582 = vmatprep.subr.mxu0 0.0
    %2583 = vmatpush2.msra.mxu0 0.0
    %2584 = vmatprep.subr.mxu0 0.0
    %2585 = vmatpush2.msra.mxu0 0.0
    %2586 = vmatprep.subr.mxu0 0.0
    %2587 = vmatpush2.msra.mxu0 0.0
    %2588 = vmatprep.subr.mxu0 0.0
    %2589 = vmatpush2.msra.mxu0 0.0
    %2590 = vmatprep.subr.mxu0 0.0
    %2591 = vmatpush2.msra.mxu0 0.0
    %2592 = vmatprep.subr.mxu0 0.0
    %2593 = vmatpush2.msra.mxu0 0.0
    %2594 = vmatprep.subr.mxu0 0.0
    %2595 = vmatpush2.msra.mxu0 0.0
    %2596 = vmatprep.subr.mxu0 0.0
    %2597 = vmatpush2.msra.mxu0 0.0
    %2598 = vmatprep.subr.mxu0 0.0
    %2599 = vmatpush2.msra.mxu0 0.0
    %2600 = vmatprep.subr.mxu0 0.0
    %2601 = vmatpush2.msra.mxu0 0.0
    %2602 = vmatprep.subr.mxu0 0.0
    %2603 = vmatpush2.msra.mxu0 0.0
    %2604 = vmatprep.subr.mxu0 0.0
    %2605 = vmatpush2.msra.mxu0 0.0
    %2606 = vmatprep.subr.mxu0 0.0
    %2607 = vmatpush2.msra.mxu0 0.0
    %2608 = vmatprep.mubr.f32.mxu0 0.0
    %2609 = vmatmul.mubr.f32.gmra.mxu0 %v2542
    %v2610 = vpop.f32.mrf.mxu0
    %v2611 = vadd.f32 %v2539, %v2610
    %v2612 = vpop.f32.mrf.mxu0
    %2613 = vdwg.mxu0
    %2614 = vst [vmem:[#allocation17] sm:$0xff] %v2611
    // Predicated region
    $region98: #{tpu_custom_call.1} parent=1 // pred_check
      _
    $region99: #{tpu_custom_call.1} parent=1 // pred_check_branch
      %2616 = sbr.rel (0) target = $region101
    $region100: #{tpu_custom_call.1} parent=1 // pred_region
      %s2618 = ssub.s32 128, 128
      %2619 = vsyncadd [#allocation4], %s2618
      %s2621 = sshll.u32 [#allocation17], 4
      %s2622 = int_to_ptr.vmem [resolvable:$true] %s2621
      %2624 = dma.vmem_to_hbm [thread:$0]  %s2622, 128, %s15, [#allocation4]
    $region101: #{tpu_custom_call.1} parent=1 // pred_fallthru
      _
    // Predicated region
    $region102: #{tpu_custom_call.1} parent=1 // pred_check
      _
    $region103: #{tpu_custom_call.1} parent=1 // pred_check_branch
      %2626 = sbr.rel (0) target = $region105
    $region104: #{tpu_custom_call.1} parent=1 // pred_region
      %2627 = dma.done [#allocation4], 128
    $region105: #{tpu_custom_call.1} parent=1 // pred_fallthru
      _
    %2628 = vsyncpa [#allocation3], 1
    %2629 = vsyncpa [#allocation6], 1
    %2630 = vsyncpa [#allocation9], 1
    %2631 = vsyncpa [#allocation12], 1
    %2632 = vsyncpa [#allocation15], 1
    %2633 = vsyncpa [#allocation4], 1

</llo_original>
